<compile_context>
chip_gen: v7x
topology: tpu7x:2x2x1
jax: 0.10.0
libtpu: 0.0.40
codegen_flags: <defaults>
</compile_context>

<pallas_src>
import jax
import jax.numpy as jnp
from jax import lax
from jax.experimental import pallas as pl
from jax.experimental.pallas import tpu as pltpu


def sage_kernel(a_ref, dinv_ref, dinvl_ref, x_ref,
                wg_ref, bg_ref,            # GCNConv weight / bias
                w1_ref, b1_ref,            # fully_connected_1
                w2_ref, b2_ref,            # fully_connected_2
                ge_ref, pen_ref,
                xwd_scr, s_scr, sd_scr, adj_acc, se_acc):
    phase = pl.program_id(0)      # 0: build H/S + accumulate S^T H
    i = pl.program_id(1)          # row-block index      1: accumulate S^T L S
    nb = pl.num_programs(1)
    tn = a_ref.shape[0]           # rows per block
    row0 = pl.multiple_of(i * tn, tn)

    # A row-block streamed as bf16 (exact 0/1 entries); compute in f32.
    A = a_ref[...].astype(jnp.float32)                       # [tn, N]

    # ------------- one-time init on the very first grid step ----------------
    @pl.when(jnp.logical_and(phase == 0, i == 0))
    def _init():
        XW = jnp.dot(x_ref[...], wg_ref[...],
                     preferred_element_type=jnp.float32)     # [N, H1]
        xwd_scr[...] = dinv_ref[...] * XW                    # D_hat^-1/2 (X Wg)
        adj_acc[...] = jnp.zeros_like(adj_acc)
        se_acc[...] = jnp.zeros_like(se_acc)

    # ------------- pass 1: GCNConv -> tanh(fc1) -> softmax(fc2) -------------
    @pl.when(phase == 0)
    def _pass1():
        dinv_i = dinv_ref[pl.ds(row0, tn), :]                # [tn, 1]
        # H_i = (A_gcn @ (X Wg))_i + bg
        H = dinv_i * (jnp.dot(A, xwd_scr[...],
                              preferred_element_type=jnp.float32)
                      + xwd_scr[pl.ds(row0, tn), :]) + bg_ref[...]
        Z1 = jnp.tanh(jnp.dot(H, w1_ref[...],
                              preferred_element_type=jnp.float32) + b1_ref[...])
        logits = jnp.dot(Z1, w2_ref[...],
                         preferred_element_type=jnp.float32) + b2_ref[...]
        m = jnp.max(logits, axis=1, keepdims=True)
        e = jnp.exp(logits - m)
        S = e * pl.reciprocal(jnp.sum(e, axis=1, keepdims=True), approx=True)

        s_scr[pl.ds(row0, tn), :] = S
        sd_scr[pl.ds(row0, tn), :] = dinvl_ref[pl.ds(row0, tn), :] * S
        # graph-embedding numerator:  S^T @ H   (accumulated over row blocks)
        se_acc[...] += lax.dot_general(S, H, (((0,), (0,)), ((), ())),
                                       preferred_element_type=jnp.float32)

    # ------------- pass 2: accumulate  S^T @ (L @ S) -------------------------
    @pl.when(phase == 1)
    def _pass2():
        S_i = s_scr[pl.ds(row0, tn), :]                      # [tn, K]
        # (L @ S)_i = S_i - dinvL_i * (A_i @ (dinvL * S))
        LS_i = S_i - dinvl_ref[pl.ds(row0, tn), :] * jnp.dot(
            A, sd_scr[...], preferred_element_type=jnp.float32)
        adj_acc[...] += lax.dot_general(S_i, LS_i, (((0,), (0,)), ((), ())),
                                        preferred_element_type=jnp.float32)

    # ------------- finalize on the last grid step ----------------------------
    @pl.when(jnp.logical_and(phase == 1, i == nb - 1))
    def _finalize():
        new_adj = adj_acc[...]                               # [K, K]
        # F.normalize(new_adj, p=1, dim=1)
        row_l1 = jnp.maximum(jnp.sum(jnp.abs(new_adj), axis=1, keepdims=True),
                             1e-12)
        nadj = new_adj * pl.reciprocal(row_l1, approx=False)

        K = nadj.shape[0]
        rows = lax.broadcasted_iota(jnp.int32, (K, K), 0)
        cols = lax.broadcasted_iota(jnp.int32, (K, K), 1)
        eye = (rows == cols).astype(jnp.float32)
        diag = jnp.sum(nadj * eye, axis=1)                   # [K]
        diff = diag[None, :] - eye     # torch MSE broadcast: [K] vs [K, K]
        pen_ref[...] = jnp.reshape(jnp.mean(diff * diff), (1, 1))

        # graph_embedding = mean(S^T @ H, dim=0, keepdim=True)
        ge_ref[...] = jnp.mean(se_acc[...], axis=0, keepdims=True)


def _pick_row_block(n):
    """Largest row-block <= 512 that divides N and respects the (8,128) rule."""
    for tn in (512, 256, 128, 64, 32, 16, 8):
        if n % tn == 0:
            return tn
    return n  # fall back to a single full-size block


def sage_forward(A, dinv, dinvl, X, Wg, bg, W1, b1, W2, b2, *, row_block=None):
    N, F = X.shape
    H1 = Wg.shape[1]
    D1 = W1.shape[1]
    K = W2.shape[1]
    tn = row_block if row_block is not None else _pick_row_block(N)
    assert N % tn == 0 and (tn % 8 == 0 or tn == N)
    nb = N // tn

    def const(shape):
        return pl.BlockSpec(shape, lambda p, i: (0,) * len(shape))

    in_specs = [
        pl.BlockSpec((tn, N), lambda p, i: (i, 0)),   # A row-blocks (bf16 stream)
        const((N, 1)),                                # dinv  (GCN norm of A + I)
        const((N, 1)),                                # dinvL (Laplacian norm of A)
        const((N, F)),                                # X
        const((F, H1)), const((1, H1)),               # GCNConv weight / bias
        const((H1, D1)), const((1, D1)),              # fully_connected_1
        const((D1, K)), const((1, K)),                # fully_connected_2
    ]
    out_specs = [
        pl.BlockSpec((1, H1), lambda p, i: (0, 0)),   # graph_embedding
        pl.BlockSpec((1, 1), lambda p, i: (0, 0)),    # pos_penalty
    ]
    scratch_shapes = [
        pltpu.VMEM((N, H1), jnp.float32),   # XWd = dinv * (X @ Wg)
        pltpu.VMEM((N, K), jnp.float32),    # S
        pltpu.VMEM((N, K), jnp.float32),    # Sd = dinvL * S
        pltpu.VMEM((K, K), jnp.float32),    # S^T L S accumulator
        pltpu.VMEM((K, H1), jnp.float32),   # S^T H  accumulator
    ]

    flops = (2 * N * N * (H1 + K)
             + 2 * N * (F * H1 + H1 * D1 + D1 * K + K * (H1 + K)))
    bytes_accessed = (2 * N * N * 2                       # A (bf16), two passes
                      + 4 * (N * (F + 2) + F * H1 + H1 * D1 + D1 * K
                             + 2 * H1 + D1 + K + 1))

    ge, pen = pl.pallas_call(
        sage_kernel,
        out_shape=(jax.ShapeDtypeStruct((1, H1), jnp.float32),
                   jax.ShapeDtypeStruct((1, 1), jnp.float32)),
        grid_spec=pltpu.PrefetchScalarGridSpec(
            num_scalar_prefetch=0,
            grid=(2, nb),                   # (phase, row-block) — phase 1 needs
            in_specs=in_specs,              # all of phase 0, so both "arbitrary"
            out_specs=out_specs,
            scratch_shapes=scratch_shapes),
        compiler_params=pltpu.CompilerParams(
            dimension_semantics=("arbitrary", "arbitrary"),
            vmem_limit_bytes=48 * 1024 * 1024),
        cost_estimate=pl.CostEstimate(
            flops=flops,
            transcendentals=N * (D1 + K),
            bytes_accessed=bytes_accessed),
    )(A.astype(jnp.bfloat16), dinv, dinvl, X, Wg, bg, W1, b1, W2, b2)
    return ge, pen[0, 0]


# ------------------------- plain-JAX glue ----------------------------------

def build_graph_inputs(edges, num_nodes):
    """Dense 0/1 adjacency + the two degree^-1/2 vectors (GCNConv / get_laplacian)."""
    src, dst = edges[0], edges[1]
    w = jnp.ones(src.shape[0], dtype=jnp.float32)
    A = jnp.zeros((num_nodes, num_nodes), jnp.float32).at[src, dst].add(w)
    deg_hat = jnp.sum(A, axis=1) + 1.0                 # degree of A + I (GCNConv)
    dinv = jnp.where(deg_hat > 0, lax.rsqrt(deg_hat), 0.0).reshape(-1, 1)
    deg = jnp.sum(A, axis=1)                           # degree of A ('sym' Laplacian)
    dinvl = jnp.where(deg > 0, lax.rsqrt(deg), 0.0).reshape(-1, 1)
    return A, dinv, dinvl


def reference_forward(A, dinv, dinvl, X, Wg, bg, W1, b1, W2, b2):
    N = A.shape[0]
    A_gcn = dinv * (A + jnp.eye(N, dtype=jnp.float32)) * dinv.T
    L = jnp.eye(N, dtype=jnp.float32) - dinvl * A * dinvl.T
    H = A_gcn @ (X @ Wg) + bg
    Z1 = jnp.tanh(H @ W1 + b1)
    S = jax.nn.softmax(Z1 @ W2 + b2, axis=1)
    new_adj = S.T @ (L @ S)
    nadj = new_adj / jnp.maximum(jnp.sum(jnp.abs(new_adj), 1, keepdims=True),
                                 1e-12)
    diag = jnp.diag(nadj)
    eye = jnp.eye(diag.shape[0], dtype=jnp.float32)
    pen = jnp.mean((diag[None, :] - eye) ** 2)
    ge = jnp.mean(S.T @ H, axis=0, keepdims=True)
    return ge, pen


if __name__ == "__main__":
    # module hyper-params: num_features=8, first_gcn_dimensions=32,
    #                      first_dense_neurons=16, second_dense_neurons=8
    N, F, H1, D1, K = 256, 8, 32, 16, 8

    key = jax.random.PRNGKey(0)
    k_x, k_wg, k_bg, k_w1, k_b1, k_w2, k_b2 = jax.random.split(key, 7)
    X = jax.random.normal(k_x, (N, F), jnp.float32)
    Wg = jax.random.normal(k_wg, (F, H1), jnp.float32) * 0.1
    bg = jax.random.normal(k_bg, (1, H1), jnp.float32) * 0.1
    W1 = jax.random.normal(k_w1, (H1, D1), jnp.float32) * 0.1
    b1 = jax.random.normal(k_b1, (1, D1), jnp.float32) * 0.1
    W2 = jax.random.normal(k_w2, (D1, K), jnp.float32) * 0.1
    b2 = jax.random.normal(k_b2, (1, K), jnp.float32) * 0.1

    # undirected ring graph: edge_index [2, 2N]
    idx = jnp.arange(N)
    src = jnp.concatenate([idx, (idx + 1) % N])
    dst = jnp.concatenate([(idx + 1) % N, idx])
    edges = jnp.stack([src, dst])

    A, dinv, dinvl = build_graph_inputs(edges, N)

    # row_block=128 -> grid = (2 phases, 2 row blocks): exercises the tiled,
    # pipelined, accumulate-then-finalize path.
    ge, pen = sage_forward(A, dinv, dinvl, X, Wg, bg, W1, b1, W2, b2,
                           row_block=128)
    jax.block_until_ready((ge, pen))

    ge_ref, pen_ref = reference_forward(A, dinv, dinvl, X, Wg, bg, W1, b1, W2,
                                        b2)
    assert ge.shape == (1, H1)
    assert jnp.allclose(ge, ge_ref, atol=5e-3, rtol=5e-3), \
        f"max|dge|={float(jnp.max(jnp.abs(ge - ge_ref)))}"
    assert jnp.allclose(pen, pen_ref, atol=5e-3, rtol=5e-3), \
        f"pen={float(pen)} ref={float(pen_ref)}"

    print("KERNEL_OK")
</pallas_src>

<mosaic_0001>
module attributes {stable_mosaic.version = 11 : i64} {
  func.func @sage_kernel(%arg0: i32, %arg1: i32, %arg2: memref<128x256xbf16, #tpu.memory_space<vmem>>, %arg3: memref<256x1xf32, #tpu.memory_space<vmem>>, %arg4: memref<256x1xf32, #tpu.memory_space<vmem>>, %arg5: memref<256x8xf32, #tpu.memory_space<vmem>>, %arg6: memref<8x32xf32, #tpu.memory_space<vmem>>, %arg7: memref<1x32xf32, #tpu.memory_space<vmem>>, %arg8: memref<32x16xf32, #tpu.memory_space<vmem>>, %arg9: memref<1x16xf32, #tpu.memory_space<vmem>>, %arg10: memref<16x8xf32, #tpu.memory_space<vmem>>, %arg11: memref<1x8xf32, #tpu.memory_space<vmem>>, %arg12: memref<1x32xf32, #tpu.memory_space<vmem>>, %arg13: memref<1x1xf32, #tpu.memory_space<vmem>>, %arg14: memref<256x32xf32, #tpu.memory_space<vmem>>, %arg15: memref<256x8xf32, #tpu.memory_space<vmem>>, %arg16: memref<256x8xf32, #tpu.memory_space<vmem>>, %arg17: memref<8x8xf32, #tpu.memory_space<vmem>>, %arg18: memref<8x32xf32, #tpu.memory_space<vmem>>) attributes {dimension_semantics = [#tpu.dimension_semantics<arbitrary>, #tpu.dimension_semantics<arbitrary>], iteration_bounds = array<i64: 2, 2>, scalar_prefetch = 0 : i64, scratch_operands = 5 : i64, tpu.core_type = #tpu.core_type<tc>, window_params = [{transform_indices = @transform_0, window_bounds = array<i64: 128, 256>}, {pipeline_mode = #tpu.pipeline_mode<synchronous>, transform_indices = @transform_1, window_bounds = array<i64: 256, 1>}, {pipeline_mode = #tpu.pipeline_mode<synchronous>, transform_indices = @transform_2, window_bounds = array<i64: 256, 1>}, {pipeline_mode = #tpu.pipeline_mode<synchronous>, transform_indices = @transform_3, window_bounds = array<i64: 256, 8>}, {pipeline_mode = #tpu.pipeline_mode<synchronous>, transform_indices = @transform_4, window_bounds = array<i64: 8, 32>}, {pipeline_mode = #tpu.pipeline_mode<synchronous>, transform_indices = @transform_5, window_bounds = array<i64: 1, 32>}, {pipeline_mode = #tpu.pipeline_mode<synchronous>, transform_indices = @transform_6, window_bounds = array<i64: 32, 16>}, {pipeline_mode = #tpu.pipeline_mode<synchronous>, transform_indices = @transform_7, window_bounds = array<i64: 1, 16>}, {pipeline_mode = #tpu.pipeline_mode<synchronous>, transform_indices = @transform_8, window_bounds = array<i64: 16, 8>}, {pipeline_mode = #tpu.pipeline_mode<synchronous>, transform_indices = @transform_9, window_bounds = array<i64: 1, 8>}, {pipeline_mode = #tpu.pipeline_mode<synchronous>, transform_indices = @transform_10, window_bounds = array<i64: 1, 32>}, {pipeline_mode = #tpu.pipeline_mode<synchronous>, transform_indices = @transform_11, window_bounds = array<i64: 1, 1>}]} {
    %c128_i32 = arith.constant 128 : i32
    %0 = arith.muli %arg1, %c128_i32 : i32
    %1 = tpu.assume_multiple %0, 128 : i32
    %c0 = arith.constant 0 : index
    %c0_0 = arith.constant 0 : index
    %2 = vector.load %arg2[%c0, %c0_0] : memref<128x256xbf16, #tpu.memory_space<vmem>>, vector<128x256xbf16>
    %3 = arith.extf %2 : vector<128x256xbf16> to vector<128x256xf32>
    %c0_i32 = arith.constant 0 : i32
    %4 = arith.cmpi eq, %arg0, %c0_i32 : i32
    %c0_i32_1 = arith.constant 0 : i32
    %5 = arith.cmpi eq, %arg1, %c0_i32_1 : i32
    %6 = arith.andi %4, %5 : i1
    %7 = arith.extui %6 : i1 to i32
    %c0_i32_2 = arith.constant 0 : i32
    %8 = arith.cmpi ne, %7, %c0_i32_2 : i32
    scf.if %8 {
      %c0_9 = arith.constant 0 : index
      %c0_10 = arith.constant 0 : index
      %20 = vector.load %arg5[%c0_9, %c0_10] : memref<256x8xf32, #tpu.memory_space<vmem>>, vector<256x8xf32>
      %c0_11 = arith.constant 0 : index
      %c0_12 = arith.constant 0 : index
      %21 = vector.load %arg6[%c0_11, %c0_12] : memref<8x32xf32, #tpu.memory_space<vmem>>, vector<8x32xf32>
      %cst = arith.constant dense<0.000000e+00> : vector<256x32xf32>
      %22 = tpu.matmul %20, %21, %cst {dimension_numbers = #tpu.dot_dimension_numbers<[1], [0], [0], [1], [0, 0, 1, 1], [], []>} : vector<256x8xf32>, vector<8x32xf32>, vector<256x32xf32> -> vector<256x32xf32>
      %c0_13 = arith.constant 0 : index
      %c0_14 = arith.constant 0 : index
      %23 = vector.load %arg3[%c0_13, %c0_14] : memref<256x1xf32, #tpu.memory_space<vmem>>, vector<256x1xf32>
      %24 = vector.broadcast %23 : vector<256x1xf32> to vector<256x32xf32>
      %25 = arith.mulf %24, %22 : vector<256x32xf32>
      %c0_15 = arith.constant 0 : index
      %c0_16 = arith.constant 0 : index
      %26 = vector.load %arg14[%c0_15, %c0_16] : memref<256x32xf32, #tpu.memory_space<vmem>>, vector<256x32xf32>
      tpu.vector_store %arg14[%c0_15, %c0_16], %25 {strides = array<i32>} : memref<256x32xf32, #tpu.memory_space<vmem>>, vector<256x32xf32>,
      %cst_17 = arith.constant 0.000000e+00 : f32
      %27 = vector.broadcast %cst_17 : f32 to vector<8x8xf32>
      %c0_18 = arith.constant 0 : index
      %c0_19 = arith.constant 0 : index
      %28 = vector.load %arg17[%c0_18, %c0_19] : memref<8x8xf32, #tpu.memory_space<vmem>>, vector<8x8xf32>
      tpu.vector_store %arg17[%c0_18, %c0_19], %27 {strides = array<i32>} : memref<8x8xf32, #tpu.memory_space<vmem>>, vector<8x8xf32>,
      %cst_20 = arith.constant 0.000000e+00 : f32
      %29 = vector.broadcast %cst_20 : f32 to vector<8x32xf32>
      %c0_21 = arith.constant 0 : index
      %c0_22 = arith.constant 0 : index
      %30 = vector.load %arg18[%c0_21, %c0_22] : memref<8x32xf32, #tpu.memory_space<vmem>>, vector<8x32xf32>
      tpu.vector_store %arg18[%c0_21, %c0_22], %29 {strides = array<i32>} : memref<8x32xf32, #tpu.memory_space<vmem>>, vector<8x32xf32>,
    } else {
    }
    %c0_i32_3 = arith.constant 0 : i32
    %9 = arith.cmpi eq, %arg0, %c0_i32_3 : i32
    %10 = arith.extui %9 : i1 to i32
    %c0_i32_4 = arith.constant 0 : i32
    %11 = arith.cmpi ne, %10, %c0_i32_4 : i32
    scf.if %11 {
      %20 = arith.index_cast %1 : i32 to index
      %c0_9 = arith.constant 0 : index
      %21 = vector.load %arg3[%20, %c0_9] : memref<256x1xf32, #tpu.memory_space<vmem>>, vector<128x1xf32>
      %c0_10 = arith.constant 0 : index
      %c0_11 = arith.constant 0 : index
      %22 = vector.load %arg14[%c0_10, %c0_11] : memref<256x32xf32, #tpu.memory_space<vmem>>, vector<256x32xf32>
      %cst = arith.constant dense<0.000000e+00> : vector<128x32xf32>
      %23 = tpu.matmul %3, %22, %cst {dimension_numbers = #tpu.dot_dimension_numbers<[1], [0], [0], [1], [0, 0, 1, 1], [], []>} : vector<128x256xf32>, vector<256x32xf32>, vector<128x32xf32> -> vector<128x32xf32>
      %24 = arith.index_cast %1 : i32 to index
      %c0_12 = arith.constant 0 : index
      %25 = vector.load %arg14[%24, %c0_12] : memref<256x32xf32, #tpu.memory_space<vmem>>, vector<128x32xf32>
      %26 = arith.addf %23, %25 : vector<128x32xf32>
      %27 = vector.broadcast %21 : vector<128x1xf32> to vector<128x32xf32>
      %28 = arith.mulf %27, %26 : vector<128x32xf32>
      %c0_13 = arith.constant 0 : index
      %c0_14 = arith.constant 0 : index
      %29 = vector.load %arg7[%c0_13, %c0_14] : memref<1x32xf32, #tpu.memory_space<vmem>>, vector<1x32xf32>
      %30 = vector.broadcast %29 : vector<1x32xf32> to vector<128x32xf32>
      %31 = arith.addf %28, %30 : vector<128x32xf32>
      %c0_15 = arith.constant 0 : index
      %c0_16 = arith.constant 0 : index
      %32 = vector.load %arg8[%c0_15, %c0_16] : memref<32x16xf32, #tpu.memory_space<vmem>>, vector<32x16xf32>
      %cst_17 = arith.constant dense<0.000000e+00> : vector<128x16xf32>
      %33 = tpu.matmul %31, %32, %cst_17 {dimension_numbers = #tpu.dot_dimension_numbers<[1], [0], [0], [1], [0, 0, 1, 1], [], []>} : vector<128x32xf32>, vector<32x16xf32>, vector<128x16xf32> -> vector<128x16xf32>
      %c0_18 = arith.constant 0 : index
      %c0_19 = arith.constant 0 : index
      %34 = vector.load %arg9[%c0_18, %c0_19] : memref<1x16xf32, #tpu.memory_space<vmem>>, vector<1x16xf32>
      %35 = vector.broadcast %34 : vector<1x16xf32> to vector<128x16xf32>
      %36 = arith.addf %33, %35 : vector<128x16xf32>
      %37 = math.tanh %36 : vector<128x16xf32>
      %c0_20 = arith.constant 0 : index
      %c0_21 = arith.constant 0 : index
      %38 = vector.load %arg10[%c0_20, %c0_21] : memref<16x8xf32, #tpu.memory_space<vmem>>, vector<16x8xf32>
      %cst_22 = arith.constant dense<0.000000e+00> : vector<128x8xf32>
      %39 = tpu.matmul %37, %38, %cst_22 {dimension_numbers = #tpu.dot_dimension_numbers<[1], [0], [0], [1], [0, 0, 1, 1], [], []>} : vector<128x16xf32>, vector<16x8xf32>, vector<128x8xf32> -> vector<128x8xf32>
      %c0_23 = arith.constant 0 : index
      %c0_24 = arith.constant 0 : index
      %40 = vector.load %arg11[%c0_23, %c0_24] : memref<1x8xf32, #tpu.memory_space<vmem>>, vector<1x8xf32>
      %41 = vector.broadcast %40 : vector<1x8xf32> to vector<128x8xf32>
      %42 = arith.addf %39, %41 : vector<128x8xf32>
      %cst_25 = arith.constant dense<0xFF800000> : vector<128xf32>
      %43 = vector.multi_reduction <maximumf>, %42, %cst_25 [1] : vector<128x8xf32> to vector<128xf32>
      %44 = vector.shape_cast %43 : vector<128xf32> to vector<128x1xf32>
      %45 = vector.broadcast %44 : vector<128x1xf32> to vector<128x8xf32>
      %46 = arith.subf %42, %45 : vector<128x8xf32>
      %47 = math.exp %46 : vector<128x8xf32>
      %cst_26 = arith.constant dense<0.000000e+00> : vector<128xf32>
      %48 = vector.multi_reduction <add>, %47, %cst_26 [1] : vector<128x8xf32> to vector<128xf32>
      %49 = vector.shape_cast %48 : vector<128xf32> to vector<128x1xf32>
      %50 = tpu.reciprocal %49 {approx = true} : vector<128x1xf32> -> vector<128x1xf32>
      %51 = vector.broadcast %50 : vector<128x1xf32> to vector<128x8xf32>
      %52 = arith.mulf %47, %51 : vector<128x8xf32>
      %53 = arith.index_cast %1 : i32 to index
      %c0_27 = arith.constant 0 : index
      %54 = vector.load %arg15[%53, %c0_27] : memref<256x8xf32, #tpu.memory_space<vmem>>, vector<128x8xf32>
      tpu.vector_store %arg15[%53, %c0_27], %52 {strides = array<i32>} : memref<256x8xf32, #tpu.memory_space<vmem>>, vector<128x8xf32>,
      %55 = arith.index_cast %1 : i32 to index
      %c0_28 = arith.constant 0 : index
      %56 = vector.load %arg4[%55, %c0_28] : memref<256x1xf32, #tpu.memory_space<vmem>>, vector<128x1xf32>
      %57 = vector.broadcast %56 : vector<128x1xf32> to vector<128x8xf32>
      %58 = arith.mulf %57, %52 : vector<128x8xf32>
      %59 = arith.index_cast %1 : i32 to index
      %c0_29 = arith.constant 0 : index
      %60 = vector.load %arg16[%59, %c0_29] : memref<256x8xf32, #tpu.memory_space<vmem>>, vector<128x8xf32>
      tpu.vector_store %arg16[%59, %c0_29], %58 {strides = array<i32>} : memref<256x8xf32, #tpu.memory_space<vmem>>, vector<128x8xf32>,
      %c0_30 = arith.constant 0 : index
      %c0_31 = arith.constant 0 : index
      %61 = vector.load %arg18[%c0_30, %c0_31] : memref<8x32xf32, #tpu.memory_space<vmem>>, vector<8x32xf32>
      %cst_32 = arith.constant dense<0.000000e+00> : vector<8x32xf32>
      %62 = tpu.matmul %52, %31, %cst_32 {dimension_numbers = #tpu.dot_dimension_numbers<[0], [0], [1], [1], [0, 1, 1, 1], [], []>} : vector<128x8xf32>, vector<128x32xf32>, vector<8x32xf32> -> vector<8x32xf32>
      %63 = arith.addf %61, %62 : vector<8x32xf32>
      %c0_33 = arith.constant 0 : index
      %c0_34 = arith.constant 0 : index
      %64 = vector.load %arg18[%c0_33, %c0_34] : memref<8x32xf32, #tpu.memory_space<vmem>>, vector<8x32xf32>
      tpu.vector_store %arg18[%c0_33, %c0_34], %63 {strides = array<i32>} : memref<8x32xf32, #tpu.memory_space<vmem>>, vector<8x32xf32>,
    } else {
    }
    %c1_i32 = arith.constant 1 : i32
    %12 = arith.cmpi eq, %arg0, %c1_i32 : i32
    %13 = arith.extui %12 : i1 to i32
    %c0_i32_5 = arith.constant 0 : i32
    %14 = arith.cmpi ne, %13, %c0_i32_5 : i32
    scf.if %14 {
      %20 = arith.index_cast %1 : i32 to index
      %c0_9 = arith.constant 0 : index
      %21 = vector.load %arg15[%20, %c0_9] : memref<256x8xf32, #tpu.memory_space<vmem>>, vector<128x8xf32>
      %22 = arith.index_cast %1 : i32 to index
      %c0_10 = arith.constant 0 : index
      %23 = vector.load %arg4[%22, %c0_10] : memref<256x1xf32, #tpu.memory_space<vmem>>, vector<128x1xf32>
      %c0_11 = arith.constant 0 : index
      %c0_12 = arith.constant 0 : index
      %24 = vector.load %arg16[%c0_11, %c0_12] : memref<256x8xf32, #tpu.memory_space<vmem>>, vector<256x8xf32>
      %cst = arith.constant dense<0.000000e+00> : vector<128x8xf32>
      %25 = tpu.matmul %3, %24, %cst {dimension_numbers = #tpu.dot_dimension_numbers<[1], [0], [0], [1], [0, 0, 1, 1], [], []>} : vector<128x256xf32>, vector<256x8xf32>, vector<128x8xf32> -> vector<128x8xf32>
      %26 = vector.broadcast %23 : vector<128x1xf32> to vector<128x8xf32>
      %27 = arith.mulf %26, %25 : vector<128x8xf32>
      %28 = arith.subf %21, %27 : vector<128x8xf32>
      %c0_13 = arith.constant 0 : index
      %c0_14 = arith.constant 0 : index
      %29 = vector.load %arg17[%c0_13, %c0_14] : memref<8x8xf32, #tpu.memory_space<vmem>>, vector<8x8xf32>
      %cst_15 = arith.constant dense<0.000000e+00> : vector<8x8xf32>
      %30 = tpu.matmul %21, %28, %cst_15 {dimension_numbers = #tpu.dot_dimension_numbers<[0], [0], [1], [1], [0, 1, 1, 1], [], []>} : vector<128x8xf32>, vector<128x8xf32>, vector<8x8xf32> -> vector<8x8xf32>
      %31 = arith.addf %29, %30 : vector<8x8xf32>
      %c0_16 = arith.constant 0 : index
      %c0_17 = arith.constant 0 : index
      %32 = vector.load %arg17[%c0_16, %c0_17] : memref<8x8xf32, #tpu.memory_space<vmem>>, vector<8x8xf32>
      tpu.vector_store %arg17[%c0_16, %c0_17], %31 {strides = array<i32>} : memref<8x8xf32, #tpu.memory_space<vmem>>, vector<8x8xf32>,
    } else {
    }
    %c1_i32_6 = arith.constant 1 : i32
    %15 = arith.cmpi eq, %arg0, %c1_i32_6 : i32
    %c1_i32_7 = arith.constant 1 : i32
    %16 = arith.cmpi eq, %arg1, %c1_i32_7 : i32
    %17 = arith.andi %15, %16 : i1
    %18 = arith.extui %17 : i1 to i32
    %c0_i32_8 = arith.constant 0 : i32
    %19 = arith.cmpi ne, %18, %c0_i32_8 : i32
    scf.if %19 {
      %c0_9 = arith.constant 0 : index
      %c0_10 = arith.constant 0 : index
      %20 = vector.load %arg17[%c0_9, %c0_10] : memref<8x8xf32, #tpu.memory_space<vmem>>, vector<8x8xf32>
      %21 = math.absf %20 : vector<8x8xf32>
      %cst = arith.constant dense<0.000000e+00> : vector<8xf32>
      %22 = vector.multi_reduction <add>, %21, %cst [1] : vector<8x8xf32> to vector<8xf32>
      %23 = vector.shape_cast %22 : vector<8xf32> to vector<8x1xf32>
      %cst_11 = arith.constant 9.99999996E-13 : f32
      %24 = vector.broadcast %cst_11 : f32 to vector<8x1xf32>
      %25 = arith.maximumf %23, %24 : vector<8x1xf32>
      %26 = tpu.reciprocal %25 : vector<8x1xf32> -> vector<8x1xf32>
      %27 = vector.broadcast %26 : vector<8x1xf32> to vector<8x8xf32>
      %28 = arith.mulf %20, %27 : vector<8x8xf32>
      %29 = tpu.iota {dimensions = array<i32: 0>} : vector<8x8xi32>
      %30 = tpu.iota {dimensions = array<i32: 1>} : vector<8x8xi32>
      %31 = arith.cmpi eq, %29, %30 : vector<8x8xi32>
      %32 = arith.extui %31 : vector<8x8xi1> to vector<8x8xi32>
      %33 = arith.sitofp %32 : vector<8x8xi32> to vector<8x8xf32>
      %34 = arith.mulf %28, %33 : vector<8x8xf32>
      %cst_12 = arith.constant dense<0.000000e+00> : vector<8xf32>
      %35 = vector.multi_reduction <add>, %34, %cst_12 [1] : vector<8x8xf32> to vector<8xf32>
      %36 = vector.shape_cast %35 : vector<8xf32> to vector<1x8xf32>
      %37 = vector.broadcast %36 : vector<1x8xf32> to vector<8x8xf32>
      %38 = arith.subf %37, %33 : vector<8x8xf32>
      %39 = arith.mulf %38, %38 : vector<8x8xf32>
      %40 = vector.shape_cast %39 : vector<8x8xf32> to vector<1x8x8xf32>
      %cst_13 = arith.constant dense<0.000000e+00> : vector<1xf32>
      %41 = vector.multi_reduction <add>, %40, %cst_13 [1, 2] : vector<1x8x8xf32> to vector<1xf32>
      %42 = vector.shape_cast %41 : vector<1xf32> to vector<1x1x1xf32>
      %43 = vector.extract %42[0, 0, 0] : f32 from vector<1x1x1xf32>
      %cst_14 = arith.constant 6.400000e+01 : f32
      %44 = arith.divf %43, %cst_14 : f32
      %45 = vector.broadcast %44 : f32 to vector<1x1xf32>
      %c0_15 = arith.constant 0 : index
      %c0_16 = arith.constant 0 : index
      %46 = vector.load %arg13[%c0_15, %c0_16] : memref<1x1xf32, #tpu.memory_space<vmem>>, vector<1x1xf32>
      tpu.vector_store %arg13[%c0_15, %c0_16], %45 {strides = array<i32>} : memref<1x1xf32, #tpu.memory_space<vmem>>, vector<1x1xf32>,
      %c0_17 = arith.constant 0 : index
      %c0_18 = arith.constant 0 : index
      %47 = vector.load %arg18[%c0_17, %c0_18] : memref<8x32xf32, #tpu.memory_space<vmem>>, vector<8x32xf32>
      %cst_19 = arith.constant dense<0.000000e+00> : vector<32xf32>
      %48 = vector.multi_reduction <add>, %47, %cst_19 [0] : vector<8x32xf32> to vector<32xf32>
      %49 = vector.shape_cast %48 : vector<32xf32> to vector<1x32xf32>
      %cst_20 = arith.constant 8.000000e+00 : f32
      %50 = vector.broadcast %cst_20 : f32 to vector<1x32xf32>
      %51 = arith.divf %49, %50 : vector<1x32xf32>
      %c0_21 = arith.constant 0 : index
      %c0_22 = arith.constant 0 : index
      %52 = vector.load %arg12[%c0_21, %c0_22] : memref<1x32xf32, #tpu.memory_space<vmem>>, vector<1x32xf32>
      tpu.vector_store %arg12[%c0_21, %c0_22], %51 {strides = array<i32>} : memref<1x32xf32, #tpu.memory_space<vmem>>, vector<1x32xf32>,
    } else {
    }
    return
  }
  func.func @transform_0(%arg0: i32, %arg1: i32) -> (i32, i32) {
    %c0_i32 = arith.constant 0 : i32
    %c0_i32_0 = arith.constant 0 : i32
    return %arg1, %c0_i32 : i32, i32
  }
  func.func @transform_1(%arg0: i32, %arg1: i32) -> (i32, i32) {
    %c0_i32 = arith.constant 0 : i32
    %c0_i32_0 = arith.constant 0 : i32
    %c0_i32_1 = arith.constant 0 : i32
    return %c0_i32, %c0_i32_0 : i32, i32
  }
  func.func @transform_2(%arg0: i32, %arg1: i32) -> (i32, i32) {
    %c0_i32 = arith.constant 0 : i32
    %c0_i32_0 = arith.constant 0 : i32
    %c0_i32_1 = arith.constant 0 : i32
    return %c0_i32, %c0_i32_0 : i32, i32
  }
  func.func @transform_3(%arg0: i32, %arg1: i32) -> (i32, i32) {
    %c0_i32 = arith.constant 0 : i32
    %c0_i32_0 = arith.constant 0 : i32
    %c0_i32_1 = arith.constant 0 : i32
    return %c0_i32, %c0_i32_0 : i32, i32
  }
  func.func @transform_4(%arg0: i32, %arg1: i32) -> (i32, i32) {
    %c0_i32 = arith.constant 0 : i32
    %c0_i32_0 = arith.constant 0 : i32
    %c0_i32_1 = arith.constant 0 : i32
    return %c0_i32, %c0_i32_0 : i32, i32
  }
  func.func @transform_5(%arg0: i32, %arg1: i32) -> (i32, i32) {
    %c0_i32 = arith.constant 0 : i32
    %c0_i32_0 = arith.constant 0 : i32
    %c0_i32_1 = arith.constant 0 : i32
    return %c0_i32, %c0_i32_0 : i32, i32
  }
  func.func @transform_6(%arg0: i32, %arg1: i32) -> (i32, i32) {
    %c0_i32 = arith.constant 0 : i32
    %c0_i32_0 = arith.constant 0 : i32
    %c0_i32_1 = arith.constant 0 : i32
    return %c0_i32, %c0_i32_0 : i32, i32
  }
  func.func @transform_7(%arg0: i32, %arg1: i32) -> (i32, i32) {
    %c0_i32 = arith.constant 0 : i32
    %c0_i32_0 = arith.constant 0 : i32
    %c0_i32_1 = arith.constant 0 : i32
    return %c0_i32, %c0_i32_0 : i32, i32
  }
  func.func @transform_8(%arg0: i32, %arg1: i32) -> (i32, i32) {
    %c0_i32 = arith.constant 0 : i32
    %c0_i32_0 = arith.constant 0 : i32
    %c0_i32_1 = arith.constant 0 : i32
    return %c0_i32, %c0_i32_0 : i32, i32
  }
  func.func @transform_9(%arg0: i32, %arg1: i32) -> (i32, i32) {
    %c0_i32 = arith.constant 0 : i32
    %c0_i32_0 = arith.constant 0 : i32
    %c0_i32_1 = arith.constant 0 : i32
    return %c0_i32, %c0_i32_0 : i32, i32
  }
  func.func @transform_10(%arg0: i32, %arg1: i32) -> (i32, i32) {
    %c0_i32 = arith.constant 0 : i32
    %c0_i32_0 = arith.constant 0 : i32
    %c0_i32_1 = arith.constant 0 : i32
    return %c0_i32, %c0_i32_0 : i32, i32
  }
  func.func @transform_11(%arg0: i32, %arg1: i32) -> (i32, i32) {
    %c0_i32 = arith.constant 0 : i32
    %c0_i32_0 = arith.constant 0 : i32
    %c0_i32_1 = arith.constant 0 : i32
    return %c0_i32, %c0_i32_0 : i32, i32
  }
}

</mosaic_0001>

<llo_original>
// kernel: tpu_custom_call.1
$region0: #{tpu_custom_call.1}
  #allocation0 [shape = 'u32[]', space=smem, size = 0x4, offset = 0x4, fixed_abs, tag = 'smem constant byte address 0x4 - core index']
  #allocation1 [shape = 'u32[144,128]{1,0:T(1,128)}', space=vmem, size = 0x12000, scoped, tag = 'internal scratch']
  #allocation2 [shape = 'f32[256,32]{1,0:T(8,128)}', space=vmem, size = 0x20000, scoped, tag = 'scratch operand']
  #allocation3 [shape = 'f32[256,8]{1,0:T(8,128)}', space=vmem, size = 0x20000, scoped, tag = 'scratch operand']
  #allocation4 [shape = 'f32[256,8]{1,0:T(8,128)}', space=vmem, size = 0x20000, scoped, tag = 'scratch operand']
  #allocation5 [shape = 'f32[8,8]{1,0:T(8,128)}', space=vmem, size = 0x1000, scoped, tag = 'scratch operand']
  #allocation6 [shape = 'f32[8,32]{1,0:T(8,128)}', space=vmem, size = 0x1000, scoped, tag = 'scratch operand']
  %s0 = inlined_call_operand.vmem [shape: bf16[256,256], index: 0, kind: input, shape index: {}]
  %s1 = inlined_call_operand.vmem [shape: f32[256,1], index: 1, kind: input, shape index: {}]
  %s2 = inlined_call_operand.vmem [shape: f32[256,1], index: 2, kind: input, shape index: {}]
  %s3 = inlined_call_operand.vmem [shape: f32[256,8], index: 3, kind: input, shape index: {}]
  %s4 = inlined_call_operand.vmem [shape: f32[8,32], index: 4, kind: input, shape index: {}]
  %s5 = inlined_call_operand.vmem [shape: f32[1,32], index: 5, kind: input, shape index: {}]
  %s6 = inlined_call_operand.vmem [shape: f32[32,16], index: 6, kind: input, shape index: {}]
  %s7 = inlined_call_operand.vmem [shape: f32[1,16], index: 7, kind: input, shape index: {}]
  %s8 = inlined_call_operand.vmem [shape: f32[16,8], index: 8, kind: input, shape index: {}]
  %s9 = inlined_call_operand.vmem [shape: f32[1,8], index: 9, kind: input, shape index: {}]
  %s10 = inlined_call_operand.hbm [shape: f32[1,32], index: 10, kind: output, shape index: {0}]
  %s11 = inlined_call_operand.hbm [shape: f32[1,1], index: 11, kind: output, shape index: {1}]
  %12 = xla_tuple %s10, %s11
  %s13 = sld [smem:[#allocation0]]
  $region97: #{tpu_custom_call.1} parent=0
    _
  %s15 = ssub.s32 1, %s13
  %s16 = scalar_select 0, %s15, %s13
  $region1: #{tpu_custom_call.1} parent=0
    #allocation7 [shape = 'u8[512]{0}', space=vmem, size = 0x400, scoped, tag = 'output window, operand 0, single buffered']
    #allocation8 [shape = 's32[2]{0}', space=sflag, size = 0x8, scoped, tag = 'scoped memory for tpu_custom_call.1']
    #allocation9 [shape = 'u8[512]{0}', space=vmem, size = 0x400, scoped, tag = 'output window, operand 1, single buffered']
    #allocation10 [shape = 's32[1]{0}', space=sflag, size = 0x4, scoped, tag = 'scoped memory for tpu_custom_call.1']
    %17 = vsyncpa [#allocation8], 0
    %18 = vsyncpa [#allocation10], 0
    loop: start=0, step=1, limit=6
    $region2: #{tpu_custom_call.1} parent=1 // loop_pre_header
      _
    $region3: #{tpu_custom_call.1} parent=1 // loop_header
      %s20 = sphi 0, %s24
      %p21 = scmp.ge.s32.totalorder %s20, 6
      %s27 = sphi 0, %s39
      %s28 = sphi 0, %s35
      %s29 = sphi 0, %s27
      %s30 = sphi 0, %s28
      %s31 = sphi 0, %s29
      %s32 = sphi 0, %s30
      %s42 = sphi 0, %s44
      %s45 = sphi 0, %s42
      %s46 = sphi 0, %s45
      %s62 = sphi 0, %s46
      %s66 = sphi 0, %s66
      %s68 = sphi 0, %s66
      %s69 = sphi 0, %s68
      %s83 = sphi 0, %s69
      %s87 = sphi 0, %s87
      %s89 = sphi 0, %s87
      %s90 = sphi 0, %s89
      %s104 = sphi 0, %s90
      %s108 = sphi 0, %s108
      %s110 = sphi 0, %s108
      %s111 = sphi 0, %s110
      %s125 = sphi 0, %s111
      %s129 = sphi 0, %s129
      %s131 = sphi 0, %s129
      %s132 = sphi 0, %s131
      %s146 = sphi 0, %s132
      %s150 = sphi 0, %s150
      %s152 = sphi 0, %s150
      %s153 = sphi 0, %s152
      %s167 = sphi 0, %s153
      %s171 = sphi 0, %s171
      %s173 = sphi 0, %s171
      %s174 = sphi 0, %s173
      %s188 = sphi 0, %s174
      %s192 = sphi 0, %s192
      %s194 = sphi 0, %s192
      %s195 = sphi 0, %s194
      %s209 = sphi 0, %s195
      %s213 = sphi 0, %s213
      %s215 = sphi 0, %s213
      %s216 = sphi 0, %s215
      %s230 = sphi 0, %s216
      %s234 = sphi 0, %s234
      %s236 = sphi 0, %s234
      %s237 = sphi 0, %s236
      %s251 = sphi 0, %s237
      %s255 = sphi 0, %s255
      %s257 = sphi 0, %s255
      %s258 = sphi 0, %s257
      %s272 = sphi 0, %s258
      %s276 = sphi 0, %s276
      %s278 = sphi 0, %s276
      %s279 = sphi 0, %s278
      %s293 = sphi 0, %s279
    $region4: #{tpu_custom_call.1} parent=1 // loop_header_branch
      %23 = sbr.rel (%p21) target = $region8
    $region5: #{tpu_custom_call.1} parent=1 // loop_body
      %s25 = ssub.s32 %s20, 1
      %s26 = ssub.s32 %s20, 2
      %s33 = sadd.s32 1, %s28
      %p34 = scmp.ge.s32.totalorder %s33, 2
      %s35 = scalar_select %p34, 0, %s33
      %s36 = sadd.s32 1, %s27
      %s37 = scalar_select %p34, %s36, %s27
      %p38 = scmp.ge.s32.totalorder %s37, 2
      %s39 = scalar_select %p38, 0, %s37
      %s40 = ssub.s32 %s28, %s35
      %p41 = scmp.eq.s32.totalorder %s40, 0
      %s43 = sadd.s32 %s42, 1
      %s44 = scalar_select %p41, %s42, %s43
      %p47 = pneg %p41
      %p48 = scmp.eq.s32.totalorder %s20, 3
      %p49 = por %p47, %p48
      %p50 = scmp.ne.s32.totalorder %s42, %s45
      %p51 = scmp.eq.s32.totalorder %s20, 0
      %p52 = por %p50, %p51
      %p53 = scmp.ne.s32.totalorder %s42, %s45
      %p54 = scmp.eq.s32.totalorder %s25, 3
      %p55 = por %p53, %p54
      %p56 = scmp.ne.s32.totalorder %s45, %s46
      %p57 = scmp.eq.s32.totalorder %s25, 0
      %p58 = por %p56, %p57
      %p59 = scmp.ne.s32.totalorder %s45, %s46
      %p60 = scmp.eq.s32.totalorder %s26, 3
      %p61 = por %p59, %p60
      %p63 = scmp.ne.s32.totalorder %s46, %s62
      %p64 = scmp.eq.s32.totalorder %s26, 0
      %p65 = por %p63, %p64
      %s67 = sadd.s32 %s66, 1
      %p70 = scmp.eq.s32.totalorder %s20, 3
      %p71 = scmp.ne.s32.totalorder %s66, %s68
      %p72 = scmp.eq.s32.totalorder %s20, 0
      %p73 = por %p71, %p72
      %p74 = scmp.ne.s32.totalorder %s66, %s68
      %p75 = scmp.eq.s32.totalorder %s25, 3
      %p76 = por %p74, %p75
      %p77 = scmp.ne.s32.totalorder %s68, %s69
      %p78 = scmp.eq.s32.totalorder %s25, 0
      %p79 = por %p77, %p78
      %p80 = scmp.ne.s32.totalorder %s68, %s69
      %p81 = scmp.eq.s32.totalorder %s26, 3
      %p82 = por %p80, %p81
      %p84 = scmp.ne.s32.totalorder %s69, %s83
      %p85 = scmp.eq.s32.totalorder %s26, 0
      %p86 = por %p84, %p85
      %s88 = sadd.s32 %s87, 1
      %p91 = scmp.eq.s32.totalorder %s20, 3
      %p92 = scmp.ne.s32.totalorder %s87, %s89
      %p93 = scmp.eq.s32.totalorder %s20, 0
      %p94 = por %p92, %p93
      %p95 = scmp.ne.s32.totalorder %s87, %s89
      %p96 = scmp.eq.s32.totalorder %s25, 3
      %p97 = por %p95, %p96
      %p98 = scmp.ne.s32.totalorder %s89, %s90
      %p99 = scmp.eq.s32.totalorder %s25, 0
      %p100 = por %p98, %p99
      %p101 = scmp.ne.s32.totalorder %s89, %s90
      %p102 = scmp.eq.s32.totalorder %s26, 3
      %p103 = por %p101, %p102
      %p105 = scmp.ne.s32.totalorder %s90, %s104
      %p106 = scmp.eq.s32.totalorder %s26, 0
      %p107 = por %p105, %p106
      %s109 = sadd.s32 %s108, 1
      %p112 = scmp.eq.s32.totalorder %s20, 3
      %p113 = scmp.ne.s32.totalorder %s108, %s110
      %p114 = scmp.eq.s32.totalorder %s20, 0
      %p115 = por %p113, %p114
      %p116 = scmp.ne.s32.totalorder %s108, %s110
      %p117 = scmp.eq.s32.totalorder %s25, 3
      %p118 = por %p116, %p117
      %p119 = scmp.ne.s32.totalorder %s110, %s111
      %p120 = scmp.eq.s32.totalorder %s25, 0
      %p121 = por %p119, %p120
      %p122 = scmp.ne.s32.totalorder %s110, %s111
      %p123 = scmp.eq.s32.totalorder %s26, 3
      %p124 = por %p122, %p123
      %p126 = scmp.ne.s32.totalorder %s111, %s125
      %p127 = scmp.eq.s32.totalorder %s26, 0
      %p128 = por %p126, %p127
      %s130 = sadd.s32 %s129, 1
      %p133 = scmp.eq.s32.totalorder %s20, 3
      %p134 = scmp.ne.s32.totalorder %s129, %s131
      %p135 = scmp.eq.s32.totalorder %s20, 0
      %p136 = por %p134, %p135
      %p137 = scmp.ne.s32.totalorder %s129, %s131
      %p138 = scmp.eq.s32.totalorder %s25, 3
      %p139 = por %p137, %p138
      %p140 = scmp.ne.s32.totalorder %s131, %s132
      %p141 = scmp.eq.s32.totalorder %s25, 0
      %p142 = por %p140, %p141
      %p143 = scmp.ne.s32.totalorder %s131, %s132
      %p144 = scmp.eq.s32.totalorder %s26, 3
      %p145 = por %p143, %p144
      %p147 = scmp.ne.s32.totalorder %s132, %s146
      %p148 = scmp.eq.s32.totalorder %s26, 0
      %p149 = por %p147, %p148
      %s151 = sadd.s32 %s150, 1
      %p154 = scmp.eq.s32.totalorder %s20, 3
      %p155 = scmp.ne.s32.totalorder %s150, %s152
      %p156 = scmp.eq.s32.totalorder %s20, 0
      %p157 = por %p155, %p156
      %p158 = scmp.ne.s32.totalorder %s150, %s152
      %p159 = scmp.eq.s32.totalorder %s25, 3
      %p160 = por %p158, %p159
      %p161 = scmp.ne.s32.totalorder %s152, %s153
      %p162 = scmp.eq.s32.totalorder %s25, 0
      %p163 = por %p161, %p162
      %p164 = scmp.ne.s32.totalorder %s152, %s153
      %p165 = scmp.eq.s32.totalorder %s26, 3
      %p166 = por %p164, %p165
      %p168 = scmp.ne.s32.totalorder %s153, %s167
      %p169 = scmp.eq.s32.totalorder %s26, 0
      %p170 = por %p168, %p169
      %s172 = sadd.s32 %s171, 1
      %p175 = scmp.eq.s32.totalorder %s20, 3
      %p176 = scmp.ne.s32.totalorder %s171, %s173
      %p177 = scmp.eq.s32.totalorder %s20, 0
      %p178 = por %p176, %p177
      %p179 = scmp.ne.s32.totalorder %s171, %s173
      %p180 = scmp.eq.s32.totalorder %s25, 3
      %p181 = por %p179, %p180
      %p182 = scmp.ne.s32.totalorder %s173, %s174
      %p183 = scmp.eq.s32.totalorder %s25, 0
      %p184 = por %p182, %p183
      %p185 = scmp.ne.s32.totalorder %s173, %s174
      %p186 = scmp.eq.s32.totalorder %s26, 3
      %p187 = por %p185, %p186
      %p189 = scmp.ne.s32.totalorder %s174, %s188
      %p190 = scmp.eq.s32.totalorder %s26, 0
      %p191 = por %p189, %p190
      %s193 = sadd.s32 %s192, 1
      %p196 = scmp.eq.s32.totalorder %s20, 3
      %p197 = scmp.ne.s32.totalorder %s192, %s194
      %p198 = scmp.eq.s32.totalorder %s20, 0
      %p199 = por %p197, %p198
      %p200 = scmp.ne.s32.totalorder %s192, %s194
      %p201 = scmp.eq.s32.totalorder %s25, 3
      %p202 = por %p200, %p201
      %p203 = scmp.ne.s32.totalorder %s194, %s195
      %p204 = scmp.eq.s32.totalorder %s25, 0
      %p205 = por %p203, %p204
      %p206 = scmp.ne.s32.totalorder %s194, %s195
      %p207 = scmp.eq.s32.totalorder %s26, 3
      %p208 = por %p206, %p207
      %p210 = scmp.ne.s32.totalorder %s195, %s209
      %p211 = scmp.eq.s32.totalorder %s26, 0
      %p212 = por %p210, %p211
      %s214 = sadd.s32 %s213, 1
      %p217 = scmp.eq.s32.totalorder %s20, 3
      %p218 = scmp.ne.s32.totalorder %s213, %s215
      %p219 = scmp.eq.s32.totalorder %s20, 0
      %p220 = por %p218, %p219
      %p221 = scmp.ne.s32.totalorder %s213, %s215
      %p222 = scmp.eq.s32.totalorder %s25, 3
      %p223 = por %p221, %p222
      %p224 = scmp.ne.s32.totalorder %s215, %s216
      %p225 = scmp.eq.s32.totalorder %s25, 0
      %p226 = por %p224, %p225
      %p227 = scmp.ne.s32.totalorder %s215, %s216
      %p228 = scmp.eq.s32.totalorder %s26, 3
      %p229 = por %p227, %p228
      %p231 = scmp.ne.s32.totalorder %s216, %s230
      %p232 = scmp.eq.s32.totalorder %s26, 0
      %p233 = por %p231, %p232
      %s235 = sadd.s32 %s234, 1
      %p238 = scmp.eq.s32.totalorder %s20, 3
      %p239 = scmp.ne.s32.totalorder %s234, %s236
      %p240 = scmp.eq.s32.totalorder %s20, 0
      %p241 = por %p239, %p240
      %p242 = scmp.ne.s32.totalorder %s234, %s236
      %p243 = scmp.eq.s32.totalorder %s25, 3
      %p244 = por %p242, %p243
      %p245 = scmp.ne.s32.totalorder %s236, %s237
      %p246 = scmp.eq.s32.totalorder %s25, 0
      %p247 = por %p245, %p246
      %p248 = scmp.ne.s32.totalorder %s236, %s237
      %p249 = scmp.eq.s32.totalorder %s26, 3
      %p250 = por %p248, %p249
      %p252 = scmp.ne.s32.totalorder %s237, %s251
      %p253 = scmp.eq.s32.totalorder %s26, 0
      %p254 = por %p252, %p253
      %s256 = sadd.s32 %s255, 1
      %p259 = scmp.eq.s32.totalorder %s20, 3
      %p260 = scmp.ne.s32.totalorder %s255, %s257
      %p261 = scmp.eq.s32.totalorder %s20, 0
      %p262 = por %p260, %p261
      %p263 = scmp.ne.s32.totalorder %s255, %s257
      %p264 = scmp.eq.s32.totalorder %s25, 3
      %p265 = por %p263, %p264
      %p266 = scmp.ne.s32.totalorder %s257, %s258
      %p267 = scmp.eq.s32.totalorder %s25, 0
      %p268 = por %p266, %p267
      %p269 = scmp.ne.s32.totalorder %s257, %s258
      %p270 = scmp.eq.s32.totalorder %s26, 3
      %p271 = por %p269, %p270
      %p273 = scmp.ne.s32.totalorder %s258, %s272
      %p274 = scmp.eq.s32.totalorder %s26, 0
      %p275 = por %p273, %p274
      %s277 = sadd.s32 %s276, 1
      %p280 = scmp.eq.s32.totalorder %s20, 3
      %p281 = scmp.ne.s32.totalorder %s276, %s278
      %p282 = scmp.eq.s32.totalorder %s20, 0
      %p283 = por %p281, %p282
      %p284 = scmp.ne.s32.totalorder %s276, %s278
      %p285 = scmp.eq.s32.totalorder %s25, 3
      %p286 = por %p284, %p285
      %p287 = scmp.ne.s32.totalorder %s278, %s279
      %p288 = scmp.eq.s32.totalorder %s25, 0
      %p289 = por %p287, %p288
      %p290 = scmp.ne.s32.totalorder %s278, %s279
      %p291 = scmp.eq.s32.totalorder %s26, 3
      %p292 = por %p290, %p291
      %p294 = scmp.ne.s32.totalorder %s279, %s293
      %p295 = scmp.eq.s32.totalorder %s26, 0
      %p296 = por %p294, %p295
      %p297 = scmp.le.s32.totalorder 1, %s20
      %p298 = scmp.lt.s32.totalorder %s20, 5
      %p299 = pnand %p297, %p298
      %p300 = pneg %p299
      // Predicated region
      $region9: #{tpu_custom_call.1} parent=5 // pred_check
        _
      $region10: #{tpu_custom_call.1} parent=5 // pred_check_branch
        %302 = sbr.rel (%p299) target = $region12
      $region11: #{tpu_custom_call.1} parent=5 // pred_region
        %s303 = ssub.s32 %s20, 1
        // Predicated region
        $region13: #{tpu_custom_call.1} parent=11 // pred_check
          %p304 = pneg %p79
        $region14: #{tpu_custom_call.1} parent=11 // pred_check_branch
          %306 = sbr.rel (%p304) target = $region16
        $region15: #{tpu_custom_call.1} parent=11 // pred_region
          _
        $region16: #{tpu_custom_call.1} parent=11 // pred_fallthru
          _
        // Predicated region
        $region17: #{tpu_custom_call.1} parent=11 // pred_check
          %p307 = pneg %p100
        $region18: #{tpu_custom_call.1} parent=11 // pred_check_branch
          %309 = sbr.rel (%p307) target = $region20
        $region19: #{tpu_custom_call.1} parent=11 // pred_region
          _
        $region20: #{tpu_custom_call.1} parent=11 // pred_fallthru
          _
        // Predicated region
        $region21: #{tpu_custom_call.1} parent=11 // pred_check
          %p310 = pneg %p121
        $region22: #{tpu_custom_call.1} parent=11 // pred_check_branch
          %312 = sbr.rel (%p310) target = $region24
        $region23: #{tpu_custom_call.1} parent=11 // pred_region
          _
        $region24: #{tpu_custom_call.1} parent=11 // pred_fallthru
          _
        // Predicated region
        $region25: #{tpu_custom_call.1} parent=11 // pred_check
          %p313 = pneg %p142
        $region26: #{tpu_custom_call.1} parent=11 // pred_check_branch
          %315 = sbr.rel (%p313) target = $region28
        $region27: #{tpu_custom_call.1} parent=11 // pred_region
          _
        $region28: #{tpu_custom_call.1} parent=11 // pred_fallthru
          _
        // Predicated region
        $region29: #{tpu_custom_call.1} parent=11 // pred_check
          %p316 = pneg %p163
        $region30: #{tpu_custom_call.1} parent=11 // pred_check_branch
          %318 = sbr.rel (%p316) target = $region32
        $region31: #{tpu_custom_call.1} parent=11 // pred_region
          _
        $region32: #{tpu_custom_call.1} parent=11 // pred_fallthru
          _
        // Predicated region
        $region33: #{tpu_custom_call.1} parent=11 // pred_check
          %p319 = pneg %p184
        $region34: #{tpu_custom_call.1} parent=11 // pred_check_branch
          %321 = sbr.rel (%p319) target = $region36
        $region35: #{tpu_custom_call.1} parent=11 // pred_region
          _
        $region36: #{tpu_custom_call.1} parent=11 // pred_fallthru
          _
        // Predicated region
        $region37: #{tpu_custom_call.1} parent=11 // pred_check
          %p322 = pneg %p205
        $region38: #{tpu_custom_call.1} parent=11 // pred_check_branch
          %324 = sbr.rel (%p322) target = $region40
        $region39: #{tpu_custom_call.1} parent=11 // pred_region
          _
        $region40: #{tpu_custom_call.1} parent=11 // pred_fallthru
          _
        // Predicated region
        $region41: #{tpu_custom_call.1} parent=11 // pred_check
          %p325 = pneg %p226
        $region42: #{tpu_custom_call.1} parent=11 // pred_check_branch
          %327 = sbr.rel (%p325) target = $region44
        $region43: #{tpu_custom_call.1} parent=11 // pred_region
          _
        $region44: #{tpu_custom_call.1} parent=11 // pred_fallthru
          _
        // Predicated region
        $region45: #{tpu_custom_call.1} parent=11 // pred_check
          %p328 = pneg %p247
        $region46: #{tpu_custom_call.1} parent=11 // pred_check_branch
          %330 = sbr.rel (%p328) target = $region48
        $region47: #{tpu_custom_call.1} parent=11 // pred_region
          _
        $region48: #{tpu_custom_call.1} parent=11 // pred_fallthru
          _
      $region12: #{tpu_custom_call.1} parent=5 // pred_fallthru
        _
      %p331 = scmp.lt.s32.totalorder %s20, 4
      // Predicated region
      $region49: #{tpu_custom_call.1} parent=5 // pred_check
        %p332 = pneg %p331
      $region50: #{tpu_custom_call.1} parent=5 // pred_check_branch
        %334 = sbr.rel (%p332) target = $region52
      $region51: #{tpu_custom_call.1} parent=5 // pred_region
        // Predicated region
        $region53: #{tpu_custom_call.1} parent=51 // pred_check
          %p335 = pneg %p52
        $region54: #{tpu_custom_call.1} parent=51 // pred_check_branch
          %337 = sbr.rel (%p335) target = $region56
        $region55: #{tpu_custom_call.1} parent=51 // pred_region
          %s338 = smul.u32 16, %s28
          %p339 = scmp.lt.s32.totalorder %s338, 31
          %s340 = scalar_select %p339, %s338, 31
          %s341 = smul.addr %s340, 2
          %s342 = smul.addr %s341, 4
          %s343 = scalar_lea.vmem %s0, %s342
          %s344 = smul.u32 16, %s28
        $region56: #{tpu_custom_call.1} parent=51 // pred_fallthru
          _
      $region52: #{tpu_custom_call.1} parent=5 // pred_fallthru
        _
      %p345 = scmp.le.s32.totalorder 1, %s20
      %p346 = scmp.lt.s32.totalorder %s20, 5
      %p347 = pnand %p345, %p346
      %p348 = pneg %p347
      // Predicated region
      $region57: #{tpu_custom_call.1} parent=5 // pred_check
        _
      $region58: #{tpu_custom_call.1} parent=5 // pred_check_branch
        %350 = sbr.rel (%p347) target = $region60
      $region59: #{tpu_custom_call.1} parent=5 // pred_region
        %s351 = ssub.s32 %s20, 1
        %s352 = smul.u32 16, %s30
        %p353 = scmp.lt.s32.totalorder %s352, 31
        %s354 = scalar_select %p353, %s352, 31
        %s355 = smul.addr %s354, 2
        %s356 = smul.addr %s355, 4
        %s357 = scalar_lea.vmem %s0, %s356
        %p358 = pneg %p58
        %p359 = pneg %p55
        %p360 = pneg %p79
        %p361 = pneg %p76
        %p362 = pneg %p100
        %p363 = pneg %p97
        %p364 = pneg %p121
        %p365 = pneg %p118
        %p366 = pneg %p142
        %p367 = pneg %p139
        %p368 = pneg %p163
        %p369 = pneg %p160
        %p370 = pneg %p184
        %p371 = pneg %p181
        %p372 = pneg %p205
        %p373 = pneg %p202
        %p374 = pneg %p226
        %p375 = pneg %p223
        %p376 = pneg %p247
        %p377 = pneg %p244
        %p378 = pneg %p268
        %p379 = pneg %p265
        %p380 = pneg %p289
        %p381 = pneg %p286
        %s382 = smul.u32 16, %s30
        %p383 = scmp.lt.s32.totalorder %s382, 31
        %s384 = scalar_select %p383, %s382, 31
        %s385 = smul.addr %s384, 2
        %s386 = smul.addr %s385, 4
        %s387 = scalar_lea.vmem %s0, %s386
        %s388 = smul.u32 16, %s30
        %s389 = smul.u32 %s30, 128
        %v390 = vld [vmem:[%s387] sm:$0xff]
        %v391 = vld [vmem:[%s387 + $0x8] sm:$0xff]
        %v392 = vld [vmem:[%s387 + $0x10] sm:$0xff]
        %v393 = vld [vmem:[%s387 + $0x18] sm:$0xff]
        %v394 = vld [vmem:[%s387 + $0x20] sm:$0xff]
        %v395 = vld [vmem:[%s387 + $0x28] sm:$0xff]
        %v396 = vld [vmem:[%s387 + $0x30] sm:$0xff]
        %v397 = vld [vmem:[%s387 + $0x38] sm:$0xff]
        %v398 = vld [vmem:[%s387 + $0x40] sm:$0xff]
        %v399 = vld [vmem:[%s387 + $0x48] sm:$0xff]
        %v400 = vld [vmem:[%s387 + $0x50] sm:$0xff]
        %v401 = vld [vmem:[%s387 + $0x58] sm:$0xff]
        %v402 = vld [vmem:[%s387 + $0x60] sm:$0xff]
        %v403 = vld [vmem:[%s387 + $0x68] sm:$0xff]
        %v404 = vld [vmem:[%s387 + $0x70] sm:$0xff]
        %v405 = vld [vmem:[%s387 + $0x78] sm:$0xff]
        %v406 = vunpack.c.l.bf16 %v390
        %v407 = vunpack.c.h.bf16 %v390
        %v408 = vunpack.c.l.bf16 %v391
        %v409 = vunpack.c.h.bf16 %v391
        %v410 = vunpack.c.l.bf16 %v392
        %v411 = vunpack.c.h.bf16 %v392
        %v412 = vunpack.c.l.bf16 %v393
        %v413 = vunpack.c.h.bf16 %v393
        %v414 = vunpack.c.l.bf16 %v394
        %v415 = vunpack.c.h.bf16 %v394
        %v416 = vunpack.c.l.bf16 %v395
        %v417 = vunpack.c.h.bf16 %v395
        %v418 = vunpack.c.l.bf16 %v396
        %v419 = vunpack.c.h.bf16 %v396
        %v420 = vunpack.c.l.bf16 %v397
        %v421 = vunpack.c.h.bf16 %v397
        %v422 = vunpack.c.l.bf16 %v398
        %v423 = vunpack.c.h.bf16 %v398
        %v424 = vunpack.c.l.bf16 %v399
        %v425 = vunpack.c.h.bf16 %v399
        %v426 = vunpack.c.l.bf16 %v400
        %v427 = vunpack.c.h.bf16 %v400
        %v428 = vunpack.c.l.bf16 %v401
        %v429 = vunpack.c.h.bf16 %v401
        %v430 = vunpack.c.l.bf16 %v402
        %v431 = vunpack.c.h.bf16 %v402
        %v432 = vunpack.c.l.bf16 %v403
        %v433 = vunpack.c.h.bf16 %v403
        %v434 = vunpack.c.l.bf16 %v404
        %v435 = vunpack.c.h.bf16 %v404
        %v436 = vunpack.c.l.bf16 %v405
        %v437 = vunpack.c.h.bf16 %v405
        %p438 = scmp.eq.s32.totalorder %s29, 0
        %p439 = scmp.eq.s32.totalorder %s30, 0
        %p440 = pnand %p438, %p439
        %p441 = pneg %p440
        // Predicated region
        $region61: #{tpu_custom_call.1} parent=59 // pred_check
          _
        $region62: #{tpu_custom_call.1} parent=59 // pred_check_branch
          %443 = sbr.rel (%p440) target = $region64
        $region63: #{tpu_custom_call.1} parent=59 // pred_region
          %v444 = vld [vmem:[%s3] sm:$0xff]
          %v445 = vld [vmem:[%s3 + $0x8] sm:$0xff]
          %v446 = vld [vmem:[%s3 + $0x10] sm:$0xff]
          %v447 = vld [vmem:[%s3 + $0x18] sm:$0xff]
          %v448 = vld [vmem:[%s3 + $0x20] sm:$0xff]
          %v449 = vld [vmem:[%s3 + $0x28] sm:$0xff]
          %v450 = vld [vmem:[%s3 + $0x30] sm:$0xff]
          %v451 = vld [vmem:[%s3 + $0x38] sm:$0xff]
          %v452 = vld [vmem:[%s3 + $0x40] sm:$0xff]
          %v453 = vld [vmem:[%s3 + $0x48] sm:$0xff]
          %v454 = vld [vmem:[%s3 + $0x50] sm:$0xff]
          %v455 = vld [vmem:[%s3 + $0x58] sm:$0xff]
          %v456 = vld [vmem:[%s3 + $0x60] sm:$0xff]
          %v457 = vld [vmem:[%s3 + $0x68] sm:$0xff]
          %v458 = vld [vmem:[%s3 + $0x70] sm:$0xff]
          %v459 = vld [vmem:[%s3 + $0x78] sm:$0xff]
          %v460 = vld [vmem:[%s3 + $0x80] sm:$0xff]
          %v461 = vld [vmem:[%s3 + $0x88] sm:$0xff]
          %v462 = vld [vmem:[%s3 + $0x90] sm:$0xff]
          %v463 = vld [vmem:[%s3 + $0x98] sm:$0xff]
          %v464 = vld [vmem:[%s3 + $0xa0] sm:$0xff]
          %v465 = vld [vmem:[%s3 + $0xa8] sm:$0xff]
          %v466 = vld [vmem:[%s3 + $0xb0] sm:$0xff]
          %v467 = vld [vmem:[%s3 + $0xb8] sm:$0xff]
          %v468 = vld [vmem:[%s3 + $0xc0] sm:$0xff]
          %v469 = vld [vmem:[%s3 + $0xc8] sm:$0xff]
          %v470 = vld [vmem:[%s3 + $0xd0] sm:$0xff]
          %v471 = vld [vmem:[%s3 + $0xd8] sm:$0xff]
          %v472 = vld [vmem:[%s3 + $0xe0] sm:$0xff]
          %v473 = vld [vmem:[%s3 + $0xe8] sm:$0xff]
          %v474 = vld [vmem:[%s3 + $0xf0] sm:$0xff]
          %v475 = vld [vmem:[%s3 + $0xf8] sm:$0xff]
          %v476 = vld [vmem:[%s4] sm:$0xff]
          %vm477 = vcmask 64512
          %v479 = vsel %vm477, %v444, 0
          %v482 = vsel %vm477, %v445, 0
          %v485 = vsel %vm477, %v446, 0
          %v488 = vsel %vm477, %v447, 0
          %v491 = vsel %vm477, %v448, 0
          %v494 = vsel %vm477, %v449, 0
          %v497 = vsel %vm477, %v450, 0
          %v500 = vsel %vm477, %v451, 0
          %v503 = vsel %vm477, %v452, 0
          %v506 = vsel %vm477, %v453, 0
          %v509 = vsel %vm477, %v454, 0
          %v512 = vsel %vm477, %v455, 0
          %v515 = vsel %vm477, %v456, 0
          %v518 = vsel %vm477, %v457, 0
          %v521 = vsel %vm477, %v458, 0
          %v524 = vsel %vm477, %v459, 0
          %v527 = vsel %vm477, %v460, 0
          %v530 = vsel %vm477, %v461, 0
          %v533 = vsel %vm477, %v462, 0
          %v536 = vsel %vm477, %v463, 0
          %v539 = vsel %vm477, %v464, 0
          %v542 = vsel %vm477, %v465, 0
          %v545 = vsel %vm477, %v466, 0
          %v548 = vsel %vm477, %v467, 0
          %v551 = vsel %vm477, %v468, 0
          %v554 = vsel %vm477, %v469, 0
          %v557 = vsel %vm477, %v470, 0
          %v560 = vsel %vm477, %v471, 0
          %v563 = vsel %vm477, %v472, 0
          %v566 = vsel %vm477, %v473, 0
          %v569 = vsel %vm477, %v474, 0
          %v572 = vsel %vm477, %v475, 0
          %574 = vmatprep.subr.mxu0 0.0
          %575 = vmatpush1.msra.mxu0 %v476
          %576 = vmatprep.subr.mxu0 0.0
          %577 = vmatpush1.msra.mxu0 0.0
          %578 = vmatprep.subr.mxu0 0.0
          %579 = vmatpush1.msra.mxu0 0.0
          %580 = vmatprep.subr.mxu0 0.0
          %581 = vmatpush1.msra.mxu0 0.0
          %582 = vmatprep.subr.mxu0 0.0
          %583 = vmatpush1.msra.mxu0 0.0
          %584 = vmatprep.subr.mxu0 0.0
          %585 = vmatpush1.msra.mxu0 0.0
          %586 = vmatprep.subr.mxu0 0.0
          %587 = vmatpush1.msra.mxu0 0.0
          %588 = vmatprep.subr.mxu0 0.0
          %589 = vmatpush1.msra.mxu0 0.0
          %590 = vmatprep.subr.mxu0 0.0
          %591 = vmatpush1.msra.mxu0 0.0
          %592 = vmatprep.subr.mxu0 0.0
          %593 = vmatpush1.msra.mxu0 0.0
          %594 = vmatprep.subr.mxu0 0.0
          %595 = vmatpush1.msra.mxu0 0.0
          %596 = vmatprep.subr.mxu0 0.0
          %597 = vmatpush1.msra.mxu0 0.0
          %598 = vmatprep.subr.mxu0 0.0
          %599 = vmatpush1.msra.mxu0 0.0
          %600 = vmatprep.subr.mxu0 0.0
          %601 = vmatpush1.msra.mxu0 0.0
          %602 = vmatprep.subr.mxu0 0.0
          %603 = vmatpush1.msra.mxu0 0.0
          %604 = vmatprep.subr.mxu0 0.0
          %605 = vmatpush1.msra.mxu0 0.0
          %606 = vmatprep.subr.mxu0 0.0
          %607 = vmatpush1.msra.mxu0 0.0
          %608 = vmatprep.subr.mxu0 0.0
          %609 = vmatpush1.msra.mxu0 0.0
          %610 = vmatprep.subr.mxu0 0.0
          %611 = vmatpush1.msra.mxu0 0.0
          %612 = vmatprep.subr.mxu0 0.0
          %613 = vmatpush1.msra.mxu0 0.0
          %614 = vmatprep.subr.mxu0 0.0
          %615 = vmatpush1.msra.mxu0 0.0
          %616 = vmatprep.subr.mxu0 0.0
          %617 = vmatpush1.msra.mxu0 0.0
          %618 = vmatprep.subr.mxu0 0.0
          %619 = vmatpush1.msra.mxu0 0.0
          %620 = vmatprep.subr.mxu0 0.0
          %621 = vmatpush1.msra.mxu0 0.0
          %622 = vmatprep.subr.mxu0 0.0
          %623 = vmatpush1.msra.mxu0 0.0
          %624 = vmatprep.subr.mxu0 0.0
          %625 = vmatpush1.msra.mxu0 0.0
          %626 = vmatprep.subr.mxu0 0.0
          %627 = vmatpush1.msra.mxu0 0.0
          %628 = vmatprep.subr.mxu0 0.0
          %629 = vmatpush1.msra.mxu0 0.0
          %630 = vmatprep.subr.mxu0 0.0
          %631 = vmatpush1.msra.mxu0 0.0
          %632 = vmatprep.subr.mxu0 0.0
          %633 = vmatpush1.msra.mxu0 0.0
          %634 = vmatprep.subr.mxu0 0.0
          %635 = vmatpush1.msra.mxu0 0.0
          %636 = vmatprep.subr.mxu0 0.0
          %637 = vmatpush1.msra.mxu0 0.0
          %638 = vmatprep.mubr.f32.mxu0 0.0
          %639 = vmatmul.mubr.f32.gmra.mrb[0].mxu0 %v479
          %v640 = vpop.f32.mrb[0].mxu0
          %v641 = vadd.f32 0.0, %v640
          %v642 = vpop.f32.mrb[0].mxu0
          %643 = vmatprep.mubr.f32.mxu0 0.0
          %644 = vmatmul.mubr.f32.gmra.mrb[0].mxu0 %v482
          %v645 = vpop.f32.mrb[0].mxu0
          %v646 = vadd.f32 0.0, %v645
          %v647 = vpop.f32.mrb[0].mxu0
          %648 = vmatprep.mubr.f32.mxu0 0.0
          %649 = vmatmul.mubr.f32.gmra.mrb[0].mxu0 %v485
          %v650 = vpop.f32.mrb[0].mxu0
          %v651 = vadd.f32 0.0, %v650
          %v652 = vpop.f32.mrb[0].mxu0
          %653 = vmatprep.mubr.f32.mxu0 0.0
          %654 = vmatmul.mubr.f32.gmra.mrb[0].mxu0 %v488
          %v655 = vpop.f32.mrb[0].mxu0
          %v656 = vadd.f32 0.0, %v655
          %v657 = vpop.f32.mrb[0].mxu0
          %658 = vmatprep.mubr.f32.mxu0 0.0
          %659 = vmatmul.mubr.f32.gmra.mrb[0].mxu0 %v491
          %v660 = vpop.f32.mrb[0].mxu0
          %v661 = vadd.f32 0.0, %v660
          %v662 = vpop.f32.mrb[0].mxu0
          %663 = vmatprep.mubr.f32.mxu0 0.0
          %664 = vmatmul.mubr.f32.gmra.mrb[0].mxu0 %v494
          %v665 = vpop.f32.mrb[0].mxu0
          %v666 = vadd.f32 0.0, %v665
          %v667 = vpop.f32.mrb[0].mxu0
          %668 = vmatprep.mubr.f32.mxu0 0.0
          %669 = vmatmul.mubr.f32.gmra.mrb[0].mxu0 %v497
          %v670 = vpop.f32.mrb[0].mxu0
          %v671 = vadd.f32 0.0, %v670
          %v672 = vpop.f32.mrb[0].mxu0
          %673 = vmatprep.mubr.f32.mxu0 0.0
          %674 = vmatmul.mubr.f32.gmra.mrb[0].mxu0 %v500
          %v675 = vpop.f32.mrb[0].mxu0
          %v676 = vadd.f32 0.0, %v675
          %v677 = vpop.f32.mrb[0].mxu0
          %678 = vmatprep.mubr.f32.mxu0 0.0
          %679 = vmatmul.mubr.f32.gmra.mrb[0].mxu0 %v503
          %v680 = vpop.f32.mrb[0].mxu0
          %v681 = vadd.f32 0.0, %v680
          %v682 = vpop.f32.mrb[0].mxu0
          %683 = vmatprep.mubr.f32.mxu0 0.0
          %684 = vmatmul.mubr.f32.gmra.mrb[0].mxu0 %v506
          %v685 = vpop.f32.mrb[0].mxu0
          %v686 = vadd.f32 0.0, %v685
          %v687 = vpop.f32.mrb[0].mxu0
          %688 = vmatprep.mubr.f32.mxu0 0.0
          %689 = vmatmul.mubr.f32.gmra.mrb[0].mxu0 %v509
          %v690 = vpop.f32.mrb[0].mxu0
          %v691 = vadd.f32 0.0, %v690
          %v692 = vpop.f32.mrb[0].mxu0
          %693 = vmatprep.mubr.f32.mxu0 0.0
          %694 = vmatmul.mubr.f32.gmra.mrb[0].mxu0 %v512
          %v695 = vpop.f32.mrb[0].mxu0
          %v696 = vadd.f32 0.0, %v695
          %v697 = vpop.f32.mrb[0].mxu0
          %698 = vmatprep.mubr.f32.mxu0 0.0
          %699 = vmatmul.mubr.f32.gmra.mrb[0].mxu0 %v515
          %v700 = vpop.f32.mrb[0].mxu0
          %v701 = vadd.f32 0.0, %v700
          %v702 = vpop.f32.mrb[0].mxu0
          %703 = vmatprep.mubr.f32.mxu0 0.0
          %704 = vmatmul.mubr.f32.gmra.mrb[0].mxu0 %v518
          %v705 = vpop.f32.mrb[0].mxu0
          %v706 = vadd.f32 0.0, %v705
          %v707 = vpop.f32.mrb[0].mxu0
          %708 = vmatprep.mubr.f32.mxu0 0.0
          %709 = vmatmul.mubr.f32.gmra.mrb[0].mxu0 %v521
          %v710 = vpop.f32.mrb[0].mxu0
          %v711 = vadd.f32 0.0, %v710
          %v712 = vpop.f32.mrb[0].mxu0
          %713 = vmatprep.mubr.f32.mxu0 0.0
          %714 = vmatmul.mubr.f32.gmra.mrb[0].mxu0 %v524
          %v715 = vpop.f32.mrb[0].mxu0
          %v716 = vadd.f32 0.0, %v715
          %v717 = vpop.f32.mrb[0].mxu0
          %718 = vmatprep.mubr.f32.mxu0 0.0
          %719 = vmatmul.mubr.f32.gmra.mrb[0].mxu0 %v527
          %v720 = vpop.f32.mrb[0].mxu0
          %v721 = vadd.f32 0.0, %v720
          %v722 = vpop.f32.mrb[0].mxu0
          %723 = vmatprep.mubr.f32.mxu0 0.0
          %724 = vmatmul.mubr.f32.gmra.mrb[0].mxu0 %v530
          %v725 = vpop.f32.mrb[0].mxu0
          %v726 = vadd.f32 0.0, %v725
          %v727 = vpop.f32.mrb[0].mxu0
          %728 = vmatprep.mubr.f32.mxu0 0.0
          %729 = vmatmul.mubr.f32.gmra.mrb[0].mxu0 %v533
          %v730 = vpop.f32.mrb[0].mxu0
          %v731 = vadd.f32 0.0, %v730
          %v732 = vpop.f32.mrb[0].mxu0
          %733 = vmatprep.mubr.f32.mxu0 0.0
          %734 = vmatmul.mubr.f32.gmra.mrb[0].mxu0 %v536
          %v735 = vpop.f32.mrb[0].mxu0
          %v736 = vadd.f32 0.0, %v735
          %v737 = vpop.f32.mrb[0].mxu0
          %738 = vmatprep.mubr.f32.mxu0 0.0
          %739 = vmatmul.mubr.f32.gmra.mrb[0].mxu0 %v539
          %v740 = vpop.f32.mrb[0].mxu0
          %v741 = vadd.f32 0.0, %v740
          %v742 = vpop.f32.mrb[0].mxu0
          %743 = vmatprep.mubr.f32.mxu0 0.0
          %744 = vmatmul.mubr.f32.gmra.mrb[0].mxu0 %v542
          %v745 = vpop.f32.mrb[0].mxu0
          %v746 = vadd.f32 0.0, %v745
          %v747 = vpop.f32.mrb[0].mxu0
          %748 = vmatprep.mubr.f32.mxu0 0.0
          %749 = vmatmul.mubr.f32.gmra.mrb[0].mxu0 %v545
          %v750 = vpop.f32.mrb[0].mxu0
          %v751 = vadd.f32 0.0, %v750
          %v752 = vpop.f32.mrb[0].mxu0
          %753 = vmatprep.mubr.f32.mxu0 0.0
          %754 = vmatmul.mubr.f32.gmra.mrb[0].mxu0 %v548
          %v755 = vpop.f32.mrb[0].mxu0
          %v756 = vadd.f32 0.0, %v755
          %v757 = vpop.f32.mrb[0].mxu0
          %758 = vmatprep.mubr.f32.mxu0 0.0
          %759 = vmatmul.mubr.f32.gmra.mrb[0].mxu0 %v551
          %v760 = vpop.f32.mrb[0].mxu0
          %v761 = vadd.f32 0.0, %v760
          %v762 = vpop.f32.mrb[0].mxu0
          %763 = vmatprep.mubr.f32.mxu0 0.0
          %764 = vmatmul.mubr.f32.gmra.mrb[0].mxu0 %v554
          %v765 = vpop.f32.mrb[0].mxu0
          %v766 = vadd.f32 0.0, %v765
          %v767 = vpop.f32.mrb[0].mxu0
          %768 = vmatprep.mubr.f32.mxu0 0.0
          %769 = vmatmul.mubr.f32.gmra.mrb[0].mxu0 %v557
          %v770 = vpop.f32.mrb[0].mxu0
          %v771 = vadd.f32 0.0, %v770
          %v772 = vpop.f32.mrb[0].mxu0
          %773 = vmatprep.mubr.f32.mxu0 0.0
          %774 = vmatmul.mubr.f32.gmra.mrb[0].mxu0 %v560
          %v775 = vpop.f32.mrb[0].mxu0
          %v776 = vadd.f32 0.0, %v775
          %v777 = vpop.f32.mrb[0].mxu0
          %778 = vmatprep.mubr.f32.mxu0 0.0
          %779 = vmatmul.mubr.f32.gmra.mrb[0].mxu0 %v563
          %v780 = vpop.f32.mrb[0].mxu0
          %v781 = vadd.f32 0.0, %v780
          %v782 = vpop.f32.mrb[0].mxu0
          %783 = vmatprep.mubr.f32.mxu0 0.0
          %784 = vmatmul.mubr.f32.gmra.mrb[0].mxu0 %v566
          %v785 = vpop.f32.mrb[0].mxu0
          %v786 = vadd.f32 0.0, %v785
          %v787 = vpop.f32.mrb[0].mxu0
          %788 = vmatprep.mubr.f32.mxu0 0.0
          %789 = vmatmul.mubr.f32.gmra.mrb[0].mxu0 %v569
          %v790 = vpop.f32.mrb[0].mxu0
          %v791 = vadd.f32 0.0, %v790
          %v792 = vpop.f32.mrb[0].mxu0
          %793 = vmatprep.mubr.f32.mxu0 0.0
          %794 = vmatmul.mubr.f32.gmra.mrb[0].mxu0 %v572
          %v795 = vpop.f32.mrb[0].mxu0
          %v796 = vadd.f32 0.0, %v795
          %v797 = vpop.f32.mrb[0].mxu0
          %798 = vdwg.mxu0
          %v799 = vld [vmem:[%s1] sm:$0xff]
          %v800 = vld [vmem:[%s1 + $0x8] sm:$0xff]
          %v801 = vld [vmem:[%s1 + $0x10] sm:$0xff]
          %v802 = vld [vmem:[%s1 + $0x18] sm:$0xff]
          %v803 = vld [vmem:[%s1 + $0x20] sm:$0xff]
          %v804 = vld [vmem:[%s1 + $0x28] sm:$0xff]
          %v805 = vld [vmem:[%s1 + $0x30] sm:$0xff]
          %v806 = vld [vmem:[%s1 + $0x38] sm:$0xff]
          %v807 = vld [vmem:[%s1 + $0x40] sm:$0xff]
          %v808 = vld [vmem:[%s1 + $0x48] sm:$0xff]
          %v809 = vld [vmem:[%s1 + $0x50] sm:$0xff]
          %v810 = vld [vmem:[%s1 + $0x58] sm:$0xff]
          %v811 = vld [vmem:[%s1 + $0x60] sm:$0xff]
          %v812 = vld [vmem:[%s1 + $0x68] sm:$0xff]
          %v813 = vld [vmem:[%s1 + $0x70] sm:$0xff]
          %v814 = vld [vmem:[%s1 + $0x78] sm:$0xff]
          %v815 = vld [vmem:[%s1 + $0x80] sm:$0xff]
          %v816 = vld [vmem:[%s1 + $0x88] sm:$0xff]
          %v817 = vld [vmem:[%s1 + $0x90] sm:$0xff]
          %v818 = vld [vmem:[%s1 + $0x98] sm:$0xff]
          %v819 = vld [vmem:[%s1 + $0xa0] sm:$0xff]
          %v820 = vld [vmem:[%s1 + $0xa8] sm:$0xff]
          %v821 = vld [vmem:[%s1 + $0xb0] sm:$0xff]
          %v822 = vld [vmem:[%s1 + $0xb8] sm:$0xff]
          %v823 = vld [vmem:[%s1 + $0xc0] sm:$0xff]
          %v824 = vld [vmem:[%s1 + $0xc8] sm:$0xff]
          %v825 = vld [vmem:[%s1 + $0xd0] sm:$0xff]
          %v826 = vld [vmem:[%s1 + $0xd8] sm:$0xff]
          %v827 = vld [vmem:[%s1 + $0xe0] sm:$0xff]
          %v828 = vld [vmem:[%s1 + $0xe8] sm:$0xff]
          %v829 = vld [vmem:[%s1 + $0xf0] sm:$0xff]
          %v830 = vld [vmem:[%s1 + $0xf8] sm:$0xff]
          %832 = vset.pattern.permute.xlu0 0
          %833 = vperm.xlu0 %832, %v799
          %v834 = vpop.permute.xlu0 %833
          %837 = vset.pattern.permute.xlu0 0
          %838 = vperm.xlu0 %837, %v800
          %v839 = vpop.permute.xlu0 %838
          %842 = vset.pattern.permute.xlu0 0
          %843 = vperm.xlu0 %842, %v801
          %v844 = vpop.permute.xlu0 %843
          %847 = vset.pattern.permute.xlu0 0
          %848 = vperm.xlu0 %847, %v802
          %v849 = vpop.permute.xlu0 %848
          %852 = vset.pattern.permute.xlu0 0
          %853 = vperm.xlu0 %852, %v803
          %v854 = vpop.permute.xlu0 %853
          %857 = vset.pattern.permute.xlu0 0
          %858 = vperm.xlu0 %857, %v804
          %v859 = vpop.permute.xlu0 %858
          %862 = vset.pattern.permute.xlu0 0
          %863 = vperm.xlu0 %862, %v805
          %v864 = vpop.permute.xlu0 %863
          %867 = vset.pattern.permute.xlu0 0
          %868 = vperm.xlu0 %867, %v806
          %v869 = vpop.permute.xlu0 %868
          %872 = vset.pattern.permute.xlu0 0
          %873 = vperm.xlu0 %872, %v807
          %v874 = vpop.permute.xlu0 %873
          %877 = vset.pattern.permute.xlu0 0
          %878 = vperm.xlu0 %877, %v808
          %v879 = vpop.permute.xlu0 %878
          %882 = vset.pattern.permute.xlu0 0
          %883 = vperm.xlu0 %882, %v809
          %v884 = vpop.permute.xlu0 %883
          %887 = vset.pattern.permute.xlu0 0
          %888 = vperm.xlu0 %887, %v810
          %v889 = vpop.permute.xlu0 %888
          %892 = vset.pattern.permute.xlu0 0
          %893 = vperm.xlu0 %892, %v811
          %v894 = vpop.permute.xlu0 %893
          %897 = vset.pattern.permute.xlu0 0
          %898 = vperm.xlu0 %897, %v812
          %v899 = vpop.permute.xlu0 %898
          %902 = vset.pattern.permute.xlu0 0
          %903 = vperm.xlu0 %902, %v813
          %v904 = vpop.permute.xlu0 %903
          %907 = vset.pattern.permute.xlu0 0
          %908 = vperm.xlu0 %907, %v814
          %v909 = vpop.permute.xlu0 %908
          %912 = vset.pattern.permute.xlu0 0
          %913 = vperm.xlu0 %912, %v815
          %v914 = vpop.permute.xlu0 %913
          %917 = vset.pattern.permute.xlu0 0
          %918 = vperm.xlu0 %917, %v816
          %v919 = vpop.permute.xlu0 %918
          %922 = vset.pattern.permute.xlu0 0
          %923 = vperm.xlu0 %922, %v817
          %v924 = vpop.permute.xlu0 %923
          %927 = vset.pattern.permute.xlu0 0
          %928 = vperm.xlu0 %927, %v818
          %v929 = vpop.permute.xlu0 %928
          %932 = vset.pattern.permute.xlu0 0
          %933 = vperm.xlu0 %932, %v819
          %v934 = vpop.permute.xlu0 %933
          %937 = vset.pattern.permute.xlu0 0
          %938 = vperm.xlu0 %937, %v820
          %v939 = vpop.permute.xlu0 %938
          %942 = vset.pattern.permute.xlu0 0
          %943 = vperm.xlu0 %942, %v821
          %v944 = vpop.permute.xlu0 %943
          %947 = vset.pattern.permute.xlu0 0
          %948 = vperm.xlu0 %947, %v822
          %v949 = vpop.permute.xlu0 %948
          %952 = vset.pattern.permute.xlu0 0
          %953 = vperm.xlu0 %952, %v823
          %v954 = vpop.permute.xlu0 %953
          %957 = vset.pattern.permute.xlu0 0
          %958 = vperm.xlu0 %957, %v824
          %v959 = vpop.permute.xlu0 %958
          %962 = vset.pattern.permute.xlu0 0
          %963 = vperm.xlu0 %962, %v825
          %v964 = vpop.permute.xlu0 %963
          %967 = vset.pattern.permute.xlu0 0
          %968 = vperm.xlu0 %967, %v826
          %v969 = vpop.permute.xlu0 %968
          %972 = vset.pattern.permute.xlu0 0
          %973 = vperm.xlu0 %972, %v827
          %v974 = vpop.permute.xlu0 %973
          %977 = vset.pattern.permute.xlu0 0
          %978 = vperm.xlu0 %977, %v828
          %v979 = vpop.permute.xlu0 %978
          %982 = vset.pattern.permute.xlu0 0
          %983 = vperm.xlu0 %982, %v829
          %v984 = vpop.permute.xlu0 %983
          %987 = vset.pattern.permute.xlu0 0
          %988 = vperm.xlu0 %987, %v830
          %v989 = vpop.permute.xlu0 %988
          %v991 = vmul.f32 %v834, %v641
          %v992 = vmul.f32 %v839, %v646
          %v993 = vmul.f32 %v844, %v651
          %v994 = vmul.f32 %v849, %v656
          %v995 = vmul.f32 %v854, %v661
          %v996 = vmul.f32 %v859, %v666
          %v997 = vmul.f32 %v864, %v671
          %v998 = vmul.f32 %v869, %v676
          %v999 = vmul.f32 %v874, %v681
          %v1000 = vmul.f32 %v879, %v686
          %v1001 = vmul.f32 %v884, %v691
          %v1002 = vmul.f32 %v889, %v696
          %v1003 = vmul.f32 %v894, %v701
          %v1004 = vmul.f32 %v899, %v706
          %v1005 = vmul.f32 %v904, %v711
          %v1006 = vmul.f32 %v909, %v716
          %v1007 = vmul.f32 %v914, %v721
          %v1008 = vmul.f32 %v919, %v726
          %v1009 = vmul.f32 %v924, %v731
          %v1010 = vmul.f32 %v929, %v736
          %v1011 = vmul.f32 %v934, %v741
          %v1012 = vmul.f32 %v939, %v746
          %v1013 = vmul.f32 %v944, %v751
          %v1014 = vmul.f32 %v949, %v756
          %v1015 = vmul.f32 %v954, %v761
          %v1016 = vmul.f32 %v959, %v766
          %v1017 = vmul.f32 %v964, %v771
          %v1018 = vmul.f32 %v969, %v776
          %v1019 = vmul.f32 %v974, %v781
          %v1020 = vmul.f32 %v979, %v786
          %v1021 = vmul.f32 %v984, %v791
          %v1022 = vmul.f32 %v989, %v796
          %vm1023 = vcmask 261120
          %1024 = vst.msk [vmem:[#allocation2] sm:$0xff] %vm1023, %v991
          %1025 = vst.msk [vmem:[#allocation2 + $0x8] sm:$0xff] %vm1023, %v992
          %1026 = vst.msk [vmem:[#allocation2 + $0x10] sm:$0xff] %vm1023, %v993
          %1027 = vst.msk [vmem:[#allocation2 + $0x18] sm:$0xff] %vm1023, %v994
          %1028 = vst.msk [vmem:[#allocation2 + $0x20] sm:$0xff] %vm1023, %v995
          %1029 = vst.msk [vmem:[#allocation2 + $0x28] sm:$0xff] %vm1023, %v996
          %1030 = vst.msk [vmem:[#allocation2 + $0x30] sm:$0xff] %vm1023, %v997
          %1031 = vst.msk [vmem:[#allocation2 + $0x38] sm:$0xff] %vm1023, %v998
          %1032 = vst.msk [vmem:[#allocation2 + $0x40] sm:$0xff] %vm1023, %v999
          %1033 = vst.msk [vmem:[#allocation2 + $0x48] sm:$0xff] %vm1023, %v1000
          %1034 = vst.msk [vmem:[#allocation2 + $0x50] sm:$0xff] %vm1023, %v1001
          %1035 = vst.msk [vmem:[#allocation2 + $0x58] sm:$0xff] %vm1023, %v1002
          %1036 = vst.msk [vmem:[#allocation2 + $0x60] sm:$0xff] %vm1023, %v1003
          %1037 = vst.msk [vmem:[#allocation2 + $0x68] sm:$0xff] %vm1023, %v1004
          %1038 = vst.msk [vmem:[#allocation2 + $0x70] sm:$0xff] %vm1023, %v1005
          %1039 = vst.msk [vmem:[#allocation2 + $0x78] sm:$0xff] %vm1023, %v1006
          %1040 = vst.msk [vmem:[#allocation2 + $0x80] sm:$0xff] %vm1023, %v1007
          %1041 = vst.msk [vmem:[#allocation2 + $0x88] sm:$0xff] %vm1023, %v1008
          %1042 = vst.msk [vmem:[#allocation2 + $0x90] sm:$0xff] %vm1023, %v1009
          %1043 = vst.msk [vmem:[#allocation2 + $0x98] sm:$0xff] %vm1023, %v1010
          %1044 = vst.msk [vmem:[#allocation2 + $0xa0] sm:$0xff] %vm1023, %v1011
          %1045 = vst.msk [vmem:[#allocation2 + $0xa8] sm:$0xff] %vm1023, %v1012
          %1046 = vst.msk [vmem:[#allocation2 + $0xb0] sm:$0xff] %vm1023, %v1013
          %1047 = vst.msk [vmem:[#allocation2 + $0xb8] sm:$0xff] %vm1023, %v1014
          %1048 = vst.msk [vmem:[#allocation2 + $0xc0] sm:$0xff] %vm1023, %v1015
          %1049 = vst.msk [vmem:[#allocation2 + $0xc8] sm:$0xff] %vm1023, %v1016
          %1050 = vst.msk [vmem:[#allocation2 + $0xd0] sm:$0xff] %vm1023, %v1017
          %1051 = vst.msk [vmem:[#allocation2 + $0xd8] sm:$0xff] %vm1023, %v1018
          %1052 = vst.msk [vmem:[#allocation2 + $0xe0] sm:$0xff] %vm1023, %v1019
          %1053 = vst.msk [vmem:[#allocation2 + $0xe8] sm:$0xff] %vm1023, %v1020
          %1054 = vst.msk [vmem:[#allocation2 + $0xf0] sm:$0xff] %vm1023, %v1021
          %1055 = vst.msk [vmem:[#allocation2 + $0xf8] sm:$0xff] %vm1023, %v1022
          %1056 = vst.msk [vmem:[#allocation5] sm:$0xff] %vm477, 0.0
          %1057 = vst.msk [vmem:[#allocation6] sm:$0xff] %vm1023, 0.0
        $region64: #{tpu_custom_call.1} parent=59 // pred_fallthru
          _
        // Predicated region
        $region65: #{tpu_custom_call.1} parent=59 // pred_check
          %p1058 = pneg %p438
        $region66: #{tpu_custom_call.1} parent=59 // pred_check_branch
          %1060 = sbr.rel (%p1058) target = $region68
        $region67: #{tpu_custom_call.1} parent=59 // pred_region
          %s1061 = scalar_lea.vmem %s1, %s389
          %v1062 = vld [vmem:[%s1061] sm:$0xff]
          %v1063 = vld [vmem:[%s1061 + $0x8] sm:$0xff]
          %v1064 = vld [vmem:[%s1061 + $0x10] sm:$0xff]
          %v1065 = vld [vmem:[%s1061 + $0x18] sm:$0xff]
          %v1066 = vld [vmem:[%s1061 + $0x20] sm:$0xff]
          %v1067 = vld [vmem:[%s1061 + $0x28] sm:$0xff]
          %v1068 = vld [vmem:[%s1061 + $0x30] sm:$0xff]
          %v1069 = vld [vmem:[%s1061 + $0x38] sm:$0xff]
          %v1070 = vld [vmem:[%s1061 + $0x40] sm:$0xff]
          %v1071 = vld [vmem:[%s1061 + $0x48] sm:$0xff]
          %v1072 = vld [vmem:[%s1061 + $0x50] sm:$0xff]
          %v1073 = vld [vmem:[%s1061 + $0x58] sm:$0xff]
          %v1074 = vld [vmem:[%s1061 + $0x60] sm:$0xff]
          %v1075 = vld [vmem:[%s1061 + $0x68] sm:$0xff]
          %v1076 = vld [vmem:[%s1061 + $0x70] sm:$0xff]
          %v1077 = vld [vmem:[%s1061 + $0x78] sm:$0xff]
          %v1078 = vld [vmem:[#allocation2] sm:$0xff]
          %v1079 = vld [vmem:[#allocation2 + $0x8] sm:$0xff]
          %v1080 = vld [vmem:[#allocation2 + $0x10] sm:$0xff]
          %v1081 = vld [vmem:[#allocation2 + $0x18] sm:$0xff]
          %v1082 = vld [vmem:[#allocation2 + $0x20] sm:$0xff]
          %v1083 = vld [vmem:[#allocation2 + $0x28] sm:$0xff]
          %v1084 = vld [vmem:[#allocation2 + $0x30] sm:$0xff]
          %v1085 = vld [vmem:[#allocation2 + $0x38] sm:$0xff]
          %v1086 = vld [vmem:[#allocation2 + $0x40] sm:$0xff]
          %v1087 = vld [vmem:[#allocation2 + $0x48] sm:$0xff]
          %v1088 = vld [vmem:[#allocation2 + $0x50] sm:$0xff]
          %v1089 = vld [vmem:[#allocation2 + $0x58] sm:$0xff]
          %v1090 = vld [vmem:[#allocation2 + $0x60] sm:$0xff]
          %v1091 = vld [vmem:[#allocation2 + $0x68] sm:$0xff]
          %v1092 = vld [vmem:[#allocation2 + $0x70] sm:$0xff]
          %v1093 = vld [vmem:[#allocation2 + $0x78] sm:$0xff]
          %v1094 = vld [vmem:[#allocation2 + $0x80] sm:$0xff]
          %v1095 = vld [vmem:[#allocation2 + $0x88] sm:$0xff]
          %v1096 = vld [vmem:[#allocation2 + $0x90] sm:$0xff]
          %v1097 = vld [vmem:[#allocation2 + $0x98] sm:$0xff]
          %v1098 = vld [vmem:[#allocation2 + $0xa0] sm:$0xff]
          %v1099 = vld [vmem:[#allocation2 + $0xa8] sm:$0xff]
          %v1100 = vld [vmem:[#allocation2 + $0xb0] sm:$0xff]
          %v1101 = vld [vmem:[#allocation2 + $0xb8] sm:$0xff]
          %v1102 = vld [vmem:[#allocation2 + $0xc0] sm:$0xff]
          %v1103 = vld [vmem:[#allocation2 + $0xc8] sm:$0xff]
          %v1104 = vld [vmem:[#allocation2 + $0xd0] sm:$0xff]
          %v1105 = vld [vmem:[#allocation2 + $0xd8] sm:$0xff]
          %v1106 = vld [vmem:[#allocation2 + $0xe0] sm:$0xff]
          %v1107 = vld [vmem:[#allocation2 + $0xe8] sm:$0xff]
          %v1108 = vld [vmem:[#allocation2 + $0xf0] sm:$0xff]
          %v1109 = vld [vmem:[#allocation2 + $0xf8] sm:$0xff]
          %s1110 = scalar_lea.vmem [#allocation2], %s389
          %v1111 = vld [vmem:[%s1110] sm:$0xff]
          %v1112 = vld [vmem:[%s1110 + $0x8] sm:$0xff]
          %v1113 = vld [vmem:[%s1110 + $0x10] sm:$0xff]
          %v1114 = vld [vmem:[%s1110 + $0x18] sm:$0xff]
          %v1115 = vld [vmem:[%s1110 + $0x20] sm:$0xff]
          %v1116 = vld [vmem:[%s1110 + $0x28] sm:$0xff]
          %v1117 = vld [vmem:[%s1110 + $0x30] sm:$0xff]
          %v1118 = vld [vmem:[%s1110 + $0x38] sm:$0xff]
          %v1119 = vld [vmem:[%s1110 + $0x40] sm:$0xff]
          %v1120 = vld [vmem:[%s1110 + $0x48] sm:$0xff]
          %v1121 = vld [vmem:[%s1110 + $0x50] sm:$0xff]
          %v1122 = vld [vmem:[%s1110 + $0x58] sm:$0xff]
          %v1123 = vld [vmem:[%s1110 + $0x60] sm:$0xff]
          %v1124 = vld [vmem:[%s1110 + $0x68] sm:$0xff]
          %v1125 = vld [vmem:[%s1110 + $0x70] sm:$0xff]
          %v1126 = vld [vmem:[%s1110 + $0x78] sm:$0xff]
          %1127 = vmatprep.subr.mxu0 0.0
          %1128 = vmatpush1.msra.mxu0 %v1078
          %1129 = vmatprep.subr.mxu0 0.0
          %1130 = vmatpush1.msra.mxu0 %v1079
          %1131 = vmatprep.subr.mxu0 0.0
          %1132 = vmatpush1.msra.mxu0 %v1080
          %1133 = vmatprep.subr.mxu0 0.0
          %1134 = vmatpush1.msra.mxu0 %v1081
          %1135 = vmatprep.subr.mxu0 0.0
          %1136 = vmatpush1.msra.mxu0 %v1082
          %1137 = vmatprep.subr.mxu0 0.0
          %1138 = vmatpush1.msra.mxu0 %v1083
          %1139 = vmatprep.subr.mxu0 0.0
          %1140 = vmatpush1.msra.mxu0 %v1084
          %1141 = vmatprep.subr.mxu0 0.0
          %1142 = vmatpush1.msra.mxu0 %v1085
          %1143 = vmatprep.subr.mxu0 0.0
          %1144 = vmatpush1.msra.mxu0 %v1086
          %1145 = vmatprep.subr.mxu0 0.0
          %1146 = vmatpush1.msra.mxu0 %v1087
          %1147 = vmatprep.subr.mxu0 0.0
          %1148 = vmatpush1.msra.mxu0 %v1088
          %1149 = vmatprep.subr.mxu0 0.0
          %1150 = vmatpush1.msra.mxu0 %v1089
          %1151 = vmatprep.subr.mxu0 0.0
          %1152 = vmatpush1.msra.mxu0 %v1090
          %1153 = vmatprep.subr.mxu0 0.0
          %1154 = vmatpush1.msra.mxu0 %v1091
          %1155 = vmatprep.subr.mxu0 0.0
          %1156 = vmatpush1.msra.mxu0 %v1092
          %1157 = vmatprep.subr.mxu0 0.0
          %1158 = vmatpush1.msra.mxu0 %v1093
          %1159 = vmatprep.subr.mxu0 0.0
          %1160 = vmatpush1.msra.mxu0 %v1094
          %1161 = vmatprep.subr.mxu0 0.0
          %1162 = vmatpush1.msra.mxu0 %v1095
          %1163 = vmatprep.subr.mxu0 0.0
          %1164 = vmatpush1.msra.mxu0 %v1096
          %1165 = vmatprep.subr.mxu0 0.0
          %1166 = vmatpush1.msra.mxu0 %v1097
          %1167 = vmatprep.subr.mxu0 0.0
          %1168 = vmatpush1.msra.mxu0 %v1098
          %1169 = vmatprep.subr.mxu0 0.0
          %1170 = vmatpush1.msra.mxu0 %v1099
          %1171 = vmatprep.subr.mxu0 0.0
          %1172 = vmatpush1.msra.mxu0 %v1100
          %1173 = vmatprep.subr.mxu0 0.0
          %1174 = vmatpush1.msra.mxu0 %v1101
          %1175 = vmatprep.subr.mxu0 0.0
          %1176 = vmatpush1.msra.mxu0 %v1102
          %1177 = vmatprep.subr.mxu0 0.0
          %1178 = vmatpush1.msra.mxu0 %v1103
          %1179 = vmatprep.subr.mxu0 0.0
          %1180 = vmatpush1.msra.mxu0 %v1104
          %1181 = vmatprep.subr.mxu0 0.0
          %1182 = vmatpush1.msra.mxu0 %v1105
          %1183 = vmatprep.subr.mxu0 0.0
          %1184 = vmatpush1.msra.mxu0 %v1106
          %1185 = vmatprep.subr.mxu0 0.0
          %1186 = vmatpush1.msra.mxu0 %v1107
          %1187 = vmatprep.subr.mxu0 0.0
          %1188 = vmatpush1.msra.mxu0 %v1108
          %1189 = vmatprep.subr.mxu0 0.0
          %1190 = vmatpush1.msra.mxu0 %v1109
          %1191 = vmatprep.mubr.f32.mxu0 %v407
          %1192 = vmatmul.mubr.f32.gmra.mrb[0].mxu0 %v406
          %v1193 = vpop.f32.mrb[0].mxu0
          %v1194 = vadd.f32 %v1111, %v1193
          %v1195 = vpop.f32.mrb[0].mxu0
          %1196 = vmatprep.mubr.f32.mxu0 %v409
          %1197 = vmatmul.mubr.f32.gmra.mrb[0].mxu0 %v408
          %v1198 = vpop.f32.mrb[0].mxu0
          %v1199 = vadd.f32 %v1112, %v1198
          %v1200 = vpop.f32.mrb[0].mxu0
          %1201 = vmatprep.mubr.f32.mxu0 %v411
          %1202 = vmatmul.mubr.f32.gmra.mrb[0].mxu0 %v410
          %v1203 = vpop.f32.mrb[0].mxu0
          %v1204 = vadd.f32 %v1113, %v1203
          %v1205 = vpop.f32.mrb[0].mxu0
          %1206 = vmatprep.mubr.f32.mxu0 %v413
          %1207 = vmatmul.mubr.f32.gmra.mrb[0].mxu0 %v412
          %v1208 = vpop.f32.mrb[0].mxu0
          %v1209 = vadd.f32 %v1114, %v1208
          %v1210 = vpop.f32.mrb[0].mxu0
          %1211 = vmatprep.mubr.f32.mxu0 %v415
          %1212 = vmatmul.mubr.f32.gmra.mrb[0].mxu0 %v414
          %v1213 = vpop.f32.mrb[0].mxu0
          %v1214 = vadd.f32 %v1115, %v1213
          %v1215 = vpop.f32.mrb[0].mxu0
          %1216 = vmatprep.mubr.f32.mxu0 %v417
          %1217 = vmatmul.mubr.f32.gmra.mrb[0].mxu0 %v416
          %v1218 = vpop.f32.mrb[0].mxu0
          %v1219 = vadd.f32 %v1116, %v1218
          %v1220 = vpop.f32.mrb[0].mxu0
          %1221 = vmatprep.mubr.f32.mxu0 %v419
          %1222 = vmatmul.mubr.f32.gmra.mrb[0].mxu0 %v418
          %v1223 = vpop.f32.mrb[0].mxu0
          %v1224 = vadd.f32 %v1117, %v1223
          %v1225 = vpop.f32.mrb[0].mxu0
          %1226 = vmatprep.mubr.f32.mxu0 %v421
          %1227 = vmatmul.mubr.f32.gmra.mrb[0].mxu0 %v420
          %v1228 = vpop.f32.mrb[0].mxu0
          %v1229 = vadd.f32 %v1118, %v1228
          %v1230 = vpop.f32.mrb[0].mxu0
          %1231 = vmatprep.mubr.f32.mxu0 %v423
          %1232 = vmatmul.mubr.f32.gmra.mrb[0].mxu0 %v422
          %v1233 = vpop.f32.mrb[0].mxu0
          %v1234 = vadd.f32 %v1119, %v1233
          %v1235 = vpop.f32.mrb[0].mxu0
          %1236 = vmatprep.mubr.f32.mxu0 %v425
          %1237 = vmatmul.mubr.f32.gmra.mrb[0].mxu0 %v424
          %v1238 = vpop.f32.mrb[0].mxu0
          %v1239 = vadd.f32 %v1120, %v1238
          %v1240 = vpop.f32.mrb[0].mxu0
          %1241 = vmatprep.mubr.f32.mxu0 %v427
          %1242 = vmatmul.mubr.f32.gmra.mrb[0].mxu0 %v426
          %v1243 = vpop.f32.mrb[0].mxu0
          %v1244 = vadd.f32 %v1121, %v1243
          %v1245 = vpop.f32.mrb[0].mxu0
          %1246 = vmatprep.mubr.f32.mxu0 %v429
          %1247 = vmatmul.mubr.f32.gmra.mrb[0].mxu0 %v428
          %v1248 = vpop.f32.mrb[0].mxu0
          %v1249 = vadd.f32 %v1122, %v1248
          %v1250 = vpop.f32.mrb[0].mxu0
          %1251 = vmatprep.mubr.f32.mxu0 %v431
          %1252 = vmatmul.mubr.f32.gmra.mrb[0].mxu0 %v430
          %v1253 = vpop.f32.mrb[0].mxu0
          %v1254 = vadd.f32 %v1123, %v1253
          %v1255 = vpop.f32.mrb[0].mxu0
          %1256 = vmatprep.mubr.f32.mxu0 %v433
          %1257 = vmatmul.mubr.f32.gmra.mrb[0].mxu0 %v432
          %v1258 = vpop.f32.mrb[0].mxu0
          %v1259 = vadd.f32 %v1124, %v1258
          %v1260 = vpop.f32.mrb[0].mxu0
          %1261 = vmatprep.mubr.f32.mxu0 %v435
          %1262 = vmatmul.mubr.f32.gmra.mrb[0].mxu0 %v434
          %v1263 = vpop.f32.mrb[0].mxu0
          %v1264 = vadd.f32 %v1125, %v1263
          %v1265 = vpop.f32.mrb[0].mxu0
          %1266 = vmatprep.mubr.f32.mxu0 %v437
          %1267 = vmatmul.mubr.f32.gmra.mrb[0].mxu0 %v436
          %v1268 = vpop.f32.mrb[0].mxu0
          %v1269 = vadd.f32 %v1126, %v1268
          %v1270 = vpop.f32.mrb[0].mxu0
          %1271 = vdwg.mxu0
          %1273 = vset.pattern.permute.xlu0 0
          %1274 = vperm.xlu0 %1273, %v1062
          %v1275 = vpop.permute.xlu0 %1274
          %1278 = vset.pattern.permute.xlu0 0
          %1279 = vperm.xlu0 %1278, %v1063
          %v1280 = vpop.permute.xlu0 %1279
          %1283 = vset.pattern.permute.xlu0 0
          %1284 = vperm.xlu0 %1283, %v1064
          %v1285 = vpop.permute.xlu0 %1284
          %1288 = vset.pattern.permute.xlu0 0
          %1289 = vperm.xlu0 %1288, %v1065
          %v1290 = vpop.permute.xlu0 %1289
          %1293 = vset.pattern.permute.xlu0 0
          %1294 = vperm.xlu0 %1293, %v1066
          %v1295 = vpop.permute.xlu0 %1294
          %1298 = vset.pattern.permute.xlu0 0
          %1299 = vperm.xlu0 %1298, %v1067
          %v1300 = vpop.permute.xlu0 %1299
          %1303 = vset.pattern.permute.xlu0 0
          %1304 = vperm.xlu0 %1303, %v1068
          %v1305 = vpop.permute.xlu0 %1304
          %1308 = vset.pattern.permute.xlu0 0
          %1309 = vperm.xlu0 %1308, %v1069
          %v1310 = vpop.permute.xlu0 %1309
          %1313 = vset.pattern.permute.xlu0 0
          %1314 = vperm.xlu0 %1313, %v1070
          %v1315 = vpop.permute.xlu0 %1314
          %1318 = vset.pattern.permute.xlu0 0
          %1319 = vperm.xlu0 %1318, %v1071
          %v1320 = vpop.permute.xlu0 %1319
          %1323 = vset.pattern.permute.xlu0 0
          %1324 = vperm.xlu0 %1323, %v1072
          %v1325 = vpop.permute.xlu0 %1324
          %1328 = vset.pattern.permute.xlu0 0
          %1329 = vperm.xlu0 %1328, %v1073
          %v1330 = vpop.permute.xlu0 %1329
          %1333 = vset.pattern.permute.xlu0 0
          %1334 = vperm.xlu0 %1333, %v1074
          %v1335 = vpop.permute.xlu0 %1334
          %1338 = vset.pattern.permute.xlu0 0
          %1339 = vperm.xlu0 %1338, %v1075
          %v1340 = vpop.permute.xlu0 %1339
          %1343 = vset.pattern.permute.xlu0 0
          %1344 = vperm.xlu0 %1343, %v1076
          %v1345 = vpop.permute.xlu0 %1344
          %1348 = vset.pattern.permute.xlu0 0
          %1349 = vperm.xlu0 %1348, %v1077
          %v1350 = vpop.permute.xlu0 %1349
          %v1352 = vmul.f32 %v1275, %v1194
          %v1353 = vmul.f32 %v1280, %v1199
          %v1354 = vmul.f32 %v1285, %v1204
          %v1355 = vmul.f32 %v1290, %v1209
          %v1356 = vmul.f32 %v1295, %v1214
          %v1357 = vmul.f32 %v1300, %v1219
          %v1358 = vmul.f32 %v1305, %v1224
          %v1359 = vmul.f32 %v1310, %v1229
          %v1360 = vmul.f32 %v1315, %v1234
          %v1361 = vmul.f32 %v1320, %v1239
          %v1362 = vmul.f32 %v1325, %v1244
          %v1363 = vmul.f32 %v1330, %v1249
          %v1364 = vmul.f32 %v1335, %v1254
          %v1365 = vmul.f32 %v1340, %v1259
          %v1366 = vmul.f32 %v1345, %v1264
          %v1367 = vmul.f32 %v1350, %v1269
          %v1368 = vld [vmem:[%s5] sm:$0x1]
          %v1370 = vlaneseq
          %v1371 = vshrl.u32 %v1370, 7
          %v1372 = vsub.s32 0, %v1371
          %v1373 = vrot.slane %v1368, %v1372
          %v1375 = vadd.f32 %v1352, %v1373
          %v1376 = vadd.f32 %v1353, %v1373
          %v1377 = vadd.f32 %v1354, %v1373
          %v1378 = vadd.f32 %v1355, %v1373
          %v1379 = vadd.f32 %v1356, %v1373
          %v1380 = vadd.f32 %v1357, %v1373
          %v1381 = vadd.f32 %v1358, %v1373
          %v1382 = vadd.f32 %v1359, %v1373
          %v1383 = vadd.f32 %v1360, %v1373
          %v1384 = vadd.f32 %v1361, %v1373
          %v1385 = vadd.f32 %v1362, %v1373
          %v1386 = vadd.f32 %v1363, %v1373
          %v1387 = vadd.f32 %v1364, %v1373
          %v1388 = vadd.f32 %v1365, %v1373
          %v1389 = vadd.f32 %v1366, %v1373
          %v1390 = vadd.f32 %v1367, %v1373
          %v1391 = vld [vmem:[%s6] sm:$0xff]
          %v1392 = vld [vmem:[%s6 + $0x8] sm:$0xff]
          %v1393 = vld [vmem:[%s6 + $0x10] sm:$0xff]
          %v1394 = vld [vmem:[%s6 + $0x18] sm:$0xff]
          %v1395 = vld [vmem:[%s7] sm:$0x1]
          %v1397 = vlaneseq
          %v1398 = vshrl.u32 %v1397, 7
          %v1399 = vsub.s32 0, %v1398
          %v1400 = vrot.slane %v1395, %v1399
          %vm1402 = vcmask 261120
          %v1404 = vsel %vm1402, %v1375, 0
          %v1407 = vsel %vm1402, %v1376, 0
          %v1410 = vsel %vm1402, %v1377, 0
          %v1413 = vsel %vm1402, %v1378, 0
          %v1416 = vsel %vm1402, %v1379, 0
          %v1419 = vsel %vm1402, %v1380, 0
          %v1422 = vsel %vm1402, %v1381, 0
          %v1425 = vsel %vm1402, %v1382, 0
          %v1428 = vsel %vm1402, %v1383, 0
          %v1431 = vsel %vm1402, %v1384, 0
          %v1434 = vsel %vm1402, %v1385, 0
          %v1437 = vsel %vm1402, %v1386, 0
          %v1440 = vsel %vm1402, %v1387, 0
          %v1443 = vsel %vm1402, %v1388, 0
          %v1446 = vsel %vm1402, %v1389, 0
          %v1449 = vsel %vm1402, %v1390, 0
          %1451 = vmatprep.subr.mxu0 0.0
          %1452 = vmatpush1.msra.mxu0 %v1391
          %1453 = vmatprep.subr.mxu0 0.0
          %1454 = vmatpush1.msra.mxu0 %v1392
          %1455 = vmatprep.subr.mxu0 0.0
          %1456 = vmatpush1.msra.mxu0 %v1393
          %1457 = vmatprep.subr.mxu0 0.0
          %1458 = vmatpush1.msra.mxu0 %v1394
          %1459 = vmatprep.subr.mxu0 0.0
          %1460 = vmatpush1.msra.mxu0 0.0
          %1461 = vmatprep.subr.mxu0 0.0
          %1462 = vmatpush1.msra.mxu0 0.0
          %1463 = vmatprep.subr.mxu0 0.0
          %1464 = vmatpush1.msra.mxu0 0.0
          %1465 = vmatprep.subr.mxu0 0.0
          %1466 = vmatpush1.msra.mxu0 0.0
          %1467 = vmatprep.subr.mxu0 0.0
          %1468 = vmatpush1.msra.mxu0 0.0
          %1469 = vmatprep.subr.mxu0 0.0
          %1470 = vmatpush1.msra.mxu0 0.0
          %1471 = vmatprep.subr.mxu0 0.0
          %1472 = vmatpush1.msra.mxu0 0.0
          %1473 = vmatprep.subr.mxu0 0.0
          %1474 = vmatpush1.msra.mxu0 0.0
          %1475 = vmatprep.subr.mxu0 0.0
          %1476 = vmatpush1.msra.mxu0 0.0
          %1477 = vmatprep.subr.mxu0 0.0
          %1478 = vmatpush1.msra.mxu0 0.0
          %1479 = vmatprep.subr.mxu0 0.0
          %1480 = vmatpush1.msra.mxu0 0.0
          %1481 = vmatprep.subr.mxu0 0.0
          %1482 = vmatpush1.msra.mxu0 0.0
          %1483 = vmatprep.subr.mxu0 0.0
          %1484 = vmatpush1.msra.mxu0 0.0
          %1485 = vmatprep.subr.mxu0 0.0
          %1486 = vmatpush1.msra.mxu0 0.0
          %1487 = vmatprep.subr.mxu0 0.0
          %1488 = vmatpush1.msra.mxu0 0.0
          %1489 = vmatprep.subr.mxu0 0.0
          %1490 = vmatpush1.msra.mxu0 0.0
          %1491 = vmatprep.subr.mxu0 0.0
          %1492 = vmatpush1.msra.mxu0 0.0
          %1493 = vmatprep.subr.mxu0 0.0
          %1494 = vmatpush1.msra.mxu0 0.0
          %1495 = vmatprep.subr.mxu0 0.0
          %1496 = vmatpush1.msra.mxu0 0.0
          %1497 = vmatprep.subr.mxu0 0.0
          %1498 = vmatpush1.msra.mxu0 0.0
          %1499 = vmatprep.subr.mxu0 0.0
          %1500 = vmatpush1.msra.mxu0 0.0
          %1501 = vmatprep.subr.mxu0 0.0
          %1502 = vmatpush1.msra.mxu0 0.0
          %1503 = vmatprep.subr.mxu0 0.0
          %1504 = vmatpush1.msra.mxu0 0.0
          %1505 = vmatprep.subr.mxu0 0.0
          %1506 = vmatpush1.msra.mxu0 0.0
          %1507 = vmatprep.subr.mxu0 0.0
          %1508 = vmatpush1.msra.mxu0 0.0
          %1509 = vmatprep.subr.mxu0 0.0
          %1510 = vmatpush1.msra.mxu0 0.0
          %1511 = vmatprep.subr.mxu0 0.0
          %1512 = vmatpush1.msra.mxu0 0.0
          %1513 = vmatprep.subr.mxu0 0.0
          %1514 = vmatpush1.msra.mxu0 0.0
          %1515 = vmatprep.mubr.f32.mxu0 0.0
          %1516 = vmatmul.mubr.f32.gmra.mrb[0].mxu0 %v1404
          %v1517 = vpop.f32.mrb[0].mxu0
          %v1518 = vadd.f32 %v1400, %v1517
          %v1519 = vpop.f32.mrb[0].mxu0
          %1520 = vmatprep.mubr.f32.mxu0 0.0
          %1521 = vmatmul.mubr.f32.gmra.mrb[0].mxu0 %v1407
          %v1522 = vpop.f32.mrb[0].mxu0
          %v1523 = vadd.f32 %v1400, %v1522
          %v1524 = vpop.f32.mrb[0].mxu0
          %1525 = vmatprep.mubr.f32.mxu0 0.0
          %1526 = vmatmul.mubr.f32.gmra.mrb[0].mxu0 %v1410
          %v1527 = vpop.f32.mrb[0].mxu0
          %v1528 = vadd.f32 %v1400, %v1527
          %v1529 = vpop.f32.mrb[0].mxu0
          %1530 = vmatprep.mubr.f32.mxu0 0.0
          %1531 = vmatmul.mubr.f32.gmra.mrb[0].mxu0 %v1413
          %v1532 = vpop.f32.mrb[0].mxu0
          %v1533 = vadd.f32 %v1400, %v1532
          %v1534 = vpop.f32.mrb[0].mxu0
          %1535 = vmatprep.mubr.f32.mxu0 0.0
          %1536 = vmatmul.mubr.f32.gmra.mrb[0].mxu0 %v1416
          %v1537 = vpop.f32.mrb[0].mxu0
          %v1538 = vadd.f32 %v1400, %v1537
          %v1539 = vpop.f32.mrb[0].mxu0
          %1540 = vmatprep.mubr.f32.mxu0 0.0
          %1541 = vmatmul.mubr.f32.gmra.mrb[0].mxu0 %v1419
          %v1542 = vpop.f32.mrb[0].mxu0
          %v1543 = vadd.f32 %v1400, %v1542
          %v1544 = vpop.f32.mrb[0].mxu0
          %1545 = vmatprep.mubr.f32.mxu0 0.0
          %1546 = vmatmul.mubr.f32.gmra.mrb[0].mxu0 %v1422
          %v1547 = vpop.f32.mrb[0].mxu0
          %v1548 = vadd.f32 %v1400, %v1547
          %v1549 = vpop.f32.mrb[0].mxu0
          %1550 = vmatprep.mubr.f32.mxu0 0.0
          %1551 = vmatmul.mubr.f32.gmra.mrb[0].mxu0 %v1425
          %v1552 = vpop.f32.mrb[0].mxu0
          %v1553 = vadd.f32 %v1400, %v1552
          %v1554 = vpop.f32.mrb[0].mxu0
          %1555 = vmatprep.mubr.f32.mxu0 0.0
          %1556 = vmatmul.mubr.f32.gmra.mrb[0].mxu0 %v1428
          %v1557 = vpop.f32.mrb[0].mxu0
          %v1558 = vadd.f32 %v1400, %v1557
          %v1559 = vpop.f32.mrb[0].mxu0
          %1560 = vmatprep.mubr.f32.mxu0 0.0
          %1561 = vmatmul.mubr.f32.gmra.mrb[0].mxu0 %v1431
          %v1562 = vpop.f32.mrb[0].mxu0
          %v1563 = vadd.f32 %v1400, %v1562
          %v1564 = vpop.f32.mrb[0].mxu0
          %1565 = vmatprep.mubr.f32.mxu0 0.0
          %1566 = vmatmul.mubr.f32.gmra.mrb[0].mxu0 %v1434
          %v1567 = vpop.f32.mrb[0].mxu0
          %v1568 = vadd.f32 %v1400, %v1567
          %v1569 = vpop.f32.mrb[0].mxu0
          %1570 = vmatprep.mubr.f32.mxu0 0.0
          %1571 = vmatmul.mubr.f32.gmra.mrb[0].mxu0 %v1437
          %v1572 = vpop.f32.mrb[0].mxu0
          %v1573 = vadd.f32 %v1400, %v1572
          %v1574 = vpop.f32.mrb[0].mxu0
          %1575 = vmatprep.mubr.f32.mxu0 0.0
          %1576 = vmatmul.mubr.f32.gmra.mrb[0].mxu0 %v1440
          %v1577 = vpop.f32.mrb[0].mxu0
          %v1578 = vadd.f32 %v1400, %v1577
          %v1579 = vpop.f32.mrb[0].mxu0
          %1580 = vmatprep.mubr.f32.mxu0 0.0
          %1581 = vmatmul.mubr.f32.gmra.mrb[0].mxu0 %v1443
          %v1582 = vpop.f32.mrb[0].mxu0
          %v1583 = vadd.f32 %v1400, %v1582
          %v1584 = vpop.f32.mrb[0].mxu0
          %1585 = vmatprep.mubr.f32.mxu0 0.0
          %1586 = vmatmul.mubr.f32.gmra.mrb[0].mxu0 %v1446
          %v1587 = vpop.f32.mrb[0].mxu0
          %v1588 = vadd.f32 %v1400, %v1587
          %v1589 = vpop.f32.mrb[0].mxu0
          %1590 = vmatprep.mubr.f32.mxu0 0.0
          %1591 = vmatmul.mubr.f32.gmra.mrb[0].mxu0 %v1449
          %v1592 = vpop.f32.mrb[0].mxu0
          %v1593 = vadd.f32 %v1400, %v1592
          %v1594 = vpop.f32.mrb[0].mxu0
          %1595 = vdwg.mxu0
          %v1596 = vtanh.pop %v1518
          %v1597 = vtanh.pop %v1523
          %v1598 = vtanh.pop %v1528
          %v1599 = vtanh.pop %v1533
          %v1600 = vtanh.pop %v1538
          %v1601 = vtanh.pop %v1543
          %v1602 = vtanh.pop %v1548
          %v1603 = vtanh.pop %v1553
          %v1604 = vtanh.pop %v1558
          %v1605 = vtanh.pop %v1563
          %v1606 = vtanh.pop %v1568
          %v1607 = vtanh.pop %v1573
          %v1608 = vtanh.pop %v1578
          %v1609 = vtanh.pop %v1583
          %v1610 = vtanh.pop %v1588
          %v1611 = vtanh.pop %v1593
          %v1612 = vld [vmem:[%s8] sm:$0xff]
          %v1613 = vld [vmem:[%s8 + $0x8] sm:$0xff]
          %v1614 = vld [vmem:[%s9] sm:$0x1]
          %v1616 = vlaneseq
          %v1617 = vshrl.u32 %v1616, 7
          %v1618 = vsub.s32 0, %v1617
          %v1619 = vrot.slane %v1614, %v1618
          %vm1621 = vcmask 130048
          %v1623 = vsel %vm1621, %v1596, 0
          %v1626 = vsel %vm1621, %v1597, 0
          %v1629 = vsel %vm1621, %v1598, 0
          %v1632 = vsel %vm1621, %v1599, 0
          %v1635 = vsel %vm1621, %v1600, 0
          %v1638 = vsel %vm1621, %v1601, 0
          %v1641 = vsel %vm1621, %v1602, 0
          %v1644 = vsel %vm1621, %v1603, 0
          %v1647 = vsel %vm1621, %v1604, 0
          %v1650 = vsel %vm1621, %v1605, 0
          %v1653 = vsel %vm1621, %v1606, 0
          %v1656 = vsel %vm1621, %v1607, 0
          %v1659 = vsel %vm1621, %v1608, 0
          %v1662 = vsel %vm1621, %v1609, 0
          %v1665 = vsel %vm1621, %v1610, 0
          %v1668 = vsel %vm1621, %v1611, 0
          %1670 = vmatprep.subr.mxu0 0.0
          %1671 = vmatpush1.msra.mxu0 %v1612
          %1672 = vmatprep.subr.mxu0 0.0
          %1673 = vmatpush1.msra.mxu0 %v1613
          %1674 = vmatprep.subr.mxu0 0.0
          %1675 = vmatpush1.msra.mxu0 0.0
          %1676 = vmatprep.subr.mxu0 0.0
          %1677 = vmatpush1.msra.mxu0 0.0
          %1678 = vmatprep.subr.mxu0 0.0
          %1679 = vmatpush1.msra.mxu0 0.0
          %1680 = vmatprep.subr.mxu0 0.0
          %1681 = vmatpush1.msra.mxu0 0.0
          %1682 = vmatprep.subr.mxu0 0.0
          %1683 = vmatpush1.msra.mxu0 0.0
          %1684 = vmatprep.subr.mxu0 0.0
          %1685 = vmatpush1.msra.mxu0 0.0
          %1686 = vmatprep.subr.mxu0 0.0
          %1687 = vmatpush1.msra.mxu0 0.0
          %1688 = vmatprep.subr.mxu0 0.0
          %1689 = vmatpush1.msra.mxu0 0.0
          %1690 = vmatprep.subr.mxu0 0.0
          %1691 = vmatpush1.msra.mxu0 0.0
          %1692 = vmatprep.subr.mxu0 0.0
          %1693 = vmatpush1.msra.mxu0 0.0
          %1694 = vmatprep.subr.mxu0 0.0
          %1695 = vmatpush1.msra.mxu0 0.0
          %1696 = vmatprep.subr.mxu0 0.0
          %1697 = vmatpush1.msra.mxu0 0.0
          %1698 = vmatprep.subr.mxu0 0.0
          %1699 = vmatpush1.msra.mxu0 0.0
          %1700 = vmatprep.subr.mxu0 0.0
          %1701 = vmatpush1.msra.mxu0 0.0
          %1702 = vmatprep.subr.mxu0 0.0
          %1703 = vmatpush1.msra.mxu0 0.0
          %1704 = vmatprep.subr.mxu0 0.0
          %1705 = vmatpush1.msra.mxu0 0.0
          %1706 = vmatprep.subr.mxu0 0.0
          %1707 = vmatpush1.msra.mxu0 0.0
          %1708 = vmatprep.subr.mxu0 0.0
          %1709 = vmatpush1.msra.mxu0 0.0
          %1710 = vmatprep.subr.mxu0 0.0
          %1711 = vmatpush1.msra.mxu0 0.0
          %1712 = vmatprep.subr.mxu0 0.0
          %1713 = vmatpush1.msra.mxu0 0.0
          %1714 = vmatprep.subr.mxu0 0.0
          %1715 = vmatpush1.msra.mxu0 0.0
          %1716 = vmatprep.subr.mxu0 0.0
          %1717 = vmatpush1.msra.mxu0 0.0
          %1718 = vmatprep.subr.mxu0 0.0
          %1719 = vmatpush1.msra.mxu0 0.0
          %1720 = vmatprep.subr.mxu0 0.0
          %1721 = vmatpush1.msra.mxu0 0.0
          %1722 = vmatprep.subr.mxu0 0.0
          %1723 = vmatpush1.msra.mxu0 0.0
          %1724 = vmatprep.subr.mxu0 0.0
          %1725 = vmatpush1.msra.mxu0 0.0
          %1726 = vmatprep.subr.mxu0 0.0
          %1727 = vmatpush1.msra.mxu0 0.0
          %1728 = vmatprep.subr.mxu0 0.0
          %1729 = vmatpush1.msra.mxu0 0.0
          %1730 = vmatprep.subr.mxu0 0.0
          %1731 = vmatpush1.msra.mxu0 0.0
          %1732 = vmatprep.subr.mxu0 0.0
          %1733 = vmatpush1.msra.mxu0 0.0
          %1734 = vmatprep.mubr.f32.mxu0 0.0
          %1735 = vmatmul.mubr.f32.gmra.mrb[0].mxu0 %v1623
          %v1736 = vpop.f32.mrb[0].mxu0
          %v1737 = vadd.f32 %v1619, %v1736
          %v1738 = vpop.f32.mrb[0].mxu0
          %1739 = vmatprep.mubr.f32.mxu0 0.0
          %1740 = vmatmul.mubr.f32.gmra.mrb[0].mxu0 %v1626
          %v1741 = vpop.f32.mrb[0].mxu0
          %v1742 = vadd.f32 %v1619, %v1741
          %v1743 = vpop.f32.mrb[0].mxu0
          %1744 = vmatprep.mubr.f32.mxu0 0.0
          %1745 = vmatmul.mubr.f32.gmra.mrb[0].mxu0 %v1629
          %v1746 = vpop.f32.mrb[0].mxu0
          %v1747 = vadd.f32 %v1619, %v1746
          %v1748 = vpop.f32.mrb[0].mxu0
          %1749 = vmatprep.mubr.f32.mxu0 0.0
          %1750 = vmatmul.mubr.f32.gmra.mrb[0].mxu0 %v1632
          %v1751 = vpop.f32.mrb[0].mxu0
          %v1752 = vadd.f32 %v1619, %v1751
          %v1753 = vpop.f32.mrb[0].mxu0
          %1754 = vmatprep.mubr.f32.mxu0 0.0
          %1755 = vmatmul.mubr.f32.gmra.mrb[0].mxu0 %v1635
          %v1756 = vpop.f32.mrb[0].mxu0
          %v1757 = vadd.f32 %v1619, %v1756
          %v1758 = vpop.f32.mrb[0].mxu0
          %1759 = vmatprep.mubr.f32.mxu0 0.0
          %1760 = vmatmul.mubr.f32.gmra.mrb[0].mxu0 %v1638
          %v1761 = vpop.f32.mrb[0].mxu0
          %v1762 = vadd.f32 %v1619, %v1761
          %v1763 = vpop.f32.mrb[0].mxu0
          %1764 = vmatprep.mubr.f32.mxu0 0.0
          %1765 = vmatmul.mubr.f32.gmra.mrb[0].mxu0 %v1641
          %v1766 = vpop.f32.mrb[0].mxu0
          %v1767 = vadd.f32 %v1619, %v1766
          %v1768 = vpop.f32.mrb[0].mxu0
          %1769 = vmatprep.mubr.f32.mxu0 0.0
          %1770 = vmatmul.mubr.f32.gmra.mrb[0].mxu0 %v1644
          %v1771 = vpop.f32.mrb[0].mxu0
          %v1772 = vadd.f32 %v1619, %v1771
          %v1773 = vpop.f32.mrb[0].mxu0
          %1774 = vmatprep.mubr.f32.mxu0 0.0
          %1775 = vmatmul.mubr.f32.gmra.mrb[0].mxu0 %v1647
          %v1776 = vpop.f32.mrb[0].mxu0
          %v1777 = vadd.f32 %v1619, %v1776
          %v1778 = vpop.f32.mrb[0].mxu0
          %1779 = vmatprep.mubr.f32.mxu0 0.0
          %1780 = vmatmul.mubr.f32.gmra.mrb[0].mxu0 %v1650
          %v1781 = vpop.f32.mrb[0].mxu0
          %v1782 = vadd.f32 %v1619, %v1781
          %v1783 = vpop.f32.mrb[0].mxu0
          %1784 = vmatprep.mubr.f32.mxu0 0.0
          %1785 = vmatmul.mubr.f32.gmra.mrb[0].mxu0 %v1653
          %v1786 = vpop.f32.mrb[0].mxu0
          %v1787 = vadd.f32 %v1619, %v1786
          %v1788 = vpop.f32.mrb[0].mxu0
          %1789 = vmatprep.mubr.f32.mxu0 0.0
          %1790 = vmatmul.mubr.f32.gmra.mrb[0].mxu0 %v1656
          %v1791 = vpop.f32.mrb[0].mxu0
          %v1792 = vadd.f32 %v1619, %v1791
          %v1793 = vpop.f32.mrb[0].mxu0
          %1794 = vmatprep.mubr.f32.mxu0 0.0
          %1795 = vmatmul.mubr.f32.gmra.mrb[0].mxu0 %v1659
          %v1796 = vpop.f32.mrb[0].mxu0
          %v1797 = vadd.f32 %v1619, %v1796
          %v1798 = vpop.f32.mrb[0].mxu0
          %1799 = vmatprep.mubr.f32.mxu0 0.0
          %1800 = vmatmul.mubr.f32.gmra.mrb[0].mxu0 %v1662
          %v1801 = vpop.f32.mrb[0].mxu0
          %v1802 = vadd.f32 %v1619, %v1801
          %v1803 = vpop.f32.mrb[0].mxu0
          %1804 = vmatprep.mubr.f32.mxu0 0.0
          %1805 = vmatmul.mubr.f32.gmra.mrb[0].mxu0 %v1665
          %v1806 = vpop.f32.mrb[0].mxu0
          %v1807 = vadd.f32 %v1619, %v1806
          %v1808 = vpop.f32.mrb[0].mxu0
          %1809 = vmatprep.mubr.f32.mxu0 0.0
          %1810 = vmatmul.mubr.f32.gmra.mrb[0].mxu0 %v1668
          %v1811 = vpop.f32.mrb[0].mxu0
          %v1812 = vadd.f32 %v1619, %v1811
          %v1813 = vpop.f32.mrb[0].mxu0
          %1814 = vdwg.mxu0
          %vm1815 = vcmask 64512
          %v1816 = vsel %vm1815, %v1737, -inf
          %1817 = vmax.xlane.f32.xlu0 %v1816
          %v1818 = vpop.xlane.xlu0 %1817
          %v1819 = vsel %vm1815, %v1742, -inf
          %1820 = vmax.xlane.f32.xlu0 %v1819
          %v1821 = vpop.xlane.xlu0 %1820
          %v1822 = vsel %vm1815, %v1747, -inf
          %1823 = vmax.xlane.f32.xlu0 %v1822
          %v1824 = vpop.xlane.xlu0 %1823
          %v1825 = vsel %vm1815, %v1752, -inf
          %1826 = vmax.xlane.f32.xlu0 %v1825
          %v1827 = vpop.xlane.xlu0 %1826
          %v1828 = vsel %vm1815, %v1757, -inf
          %1829 = vmax.xlane.f32.xlu0 %v1828
          %v1830 = vpop.xlane.xlu0 %1829
          %v1831 = vsel %vm1815, %v1762, -inf
          %1832 = vmax.xlane.f32.xlu0 %v1831
          %v1833 = vpop.xlane.xlu0 %1832
          %v1834 = vsel %vm1815, %v1767, -inf
          %1835 = vmax.xlane.f32.xlu0 %v1834
          %v1836 = vpop.xlane.xlu0 %1835
          %v1837 = vsel %vm1815, %v1772, -inf
          %1838 = vmax.xlane.f32.xlu0 %v1837
          %v1839 = vpop.xlane.xlu0 %1838
          %v1840 = vsel %vm1815, %v1777, -inf
          %1841 = vmax.xlane.f32.xlu0 %v1840
          %v1842 = vpop.xlane.xlu0 %1841
          %v1843 = vsel %vm1815, %v1782, -inf
          %1844 = vmax.xlane.f32.xlu0 %v1843
          %v1845 = vpop.xlane.xlu0 %1844
          %v1846 = vsel %vm1815, %v1787, -inf
          %1847 = vmax.xlane.f32.xlu0 %v1846
          %v1848 = vpop.xlane.xlu0 %1847
          %v1849 = vsel %vm1815, %v1792, -inf
          %1850 = vmax.xlane.f32.xlu0 %v1849
          %v1851 = vpop.xlane.xlu0 %1850
          %v1852 = vsel %vm1815, %v1797, -inf
          %1853 = vmax.xlane.f32.xlu0 %v1852
          %v1854 = vpop.xlane.xlu0 %1853
          %v1855 = vsel %vm1815, %v1802, -inf
          %1856 = vmax.xlane.f32.xlu0 %v1855
          %v1857 = vpop.xlane.xlu0 %1856
          %v1858 = vsel %vm1815, %v1807, -inf
          %1859 = vmax.xlane.f32.xlu0 %v1858
          %v1860 = vpop.xlane.xlu0 %1859
          %v1861 = vsel %vm1815, %v1812, -inf
          %1862 = vmax.xlane.f32.xlu0 %v1861
          %v1863 = vpop.xlane.xlu0 %1862
          %v1864 = vsub.f32 %v1737, %v1818
          %v1865 = vsub.f32 %v1742, %v1821
          %v1866 = vsub.f32 %v1747, %v1824
          %v1867 = vsub.f32 %v1752, %v1827
          %v1868 = vsub.f32 %v1757, %v1830
          %v1869 = vsub.f32 %v1762, %v1833
          %v1870 = vsub.f32 %v1767, %v1836
          %v1871 = vsub.f32 %v1772, %v1839
          %v1872 = vsub.f32 %v1777, %v1842
          %v1873 = vsub.f32 %v1782, %v1845
          %v1874 = vsub.f32 %v1787, %v1848
          %v1875 = vsub.f32 %v1792, %v1851
          %v1876 = vsub.f32 %v1797, %v1854
          %v1877 = vsub.f32 %v1802, %v1857
          %v1878 = vsub.f32 %v1807, %v1860
          %v1879 = vsub.f32 %v1812, %v1863
          %v1880 = vmul.f32 %v1864, 1.442695
          %v1881 = vpow.pop %v1880
          %v1882 = vmul.f32 %v1865, 1.442695
          %v1883 = vpow.pop %v1882
          %v1884 = vmul.f32 %v1866, 1.442695
          %v1885 = vpow.pop %v1884
          %v1886 = vmul.f32 %v1867, 1.442695
          %v1887 = vpow.pop %v1886
          %v1888 = vmul.f32 %v1868, 1.442695
          %v1889 = vpow.pop %v1888
          %v1890 = vmul.f32 %v1869, 1.442695
          %v1891 = vpow.pop %v1890
          %v1892 = vmul.f32 %v1870, 1.442695
          %v1893 = vpow.pop %v1892
          %v1894 = vmul.f32 %v1871, 1.442695
          %v1895 = vpow.pop %v1894
          %v1896 = vmul.f32 %v1872, 1.442695
          %v1897 = vpow.pop %v1896
          %v1898 = vmul.f32 %v1873, 1.442695
          %v1899 = vpow.pop %v1898
          %v1900 = vmul.f32 %v1874, 1.442695
          %v1901 = vpow.pop %v1900
          %v1902 = vmul.f32 %v1875, 1.442695
          %v1903 = vpow.pop %v1902
          %v1904 = vmul.f32 %v1876, 1.442695
          %v1905 = vpow.pop %v1904
          %v1906 = vmul.f32 %v1877, 1.442695
          %v1907 = vpow.pop %v1906
          %v1908 = vmul.f32 %v1878, 1.442695
          %v1909 = vpow.pop %v1908
          %v1910 = vmul.f32 %v1879, 1.442695
          %v1911 = vpow.pop %v1910
          %v1912 = vsel %vm1815, %v1881, 0.0
          %1913 = vadd.xlane.f32.xlu0 %v1912
          %v1914 = vpop.xlane.xlu0 %1913
          %v1915 = vsel %vm1815, %v1883, 0.0
          %1916 = vadd.xlane.f32.xlu0 %v1915
          %v1917 = vpop.xlane.xlu0 %1916
          %v1918 = vsel %vm1815, %v1885, 0.0
          %1919 = vadd.xlane.f32.xlu0 %v1918
          %v1920 = vpop.xlane.xlu0 %1919
          %v1921 = vsel %vm1815, %v1887, 0.0
          %1922 = vadd.xlane.f32.xlu0 %v1921
          %v1923 = vpop.xlane.xlu0 %1922
          %v1924 = vsel %vm1815, %v1889, 0.0
          %1925 = vadd.xlane.f32.xlu0 %v1924
          %v1926 = vpop.xlane.xlu0 %1925
          %v1927 = vsel %vm1815, %v1891, 0.0
          %1928 = vadd.xlane.f32.xlu0 %v1927
          %v1929 = vpop.xlane.xlu0 %1928
          %v1930 = vsel %vm1815, %v1893, 0.0
          %1931 = vadd.xlane.f32.xlu0 %v1930
          %v1932 = vpop.xlane.xlu0 %1931
          %v1933 = vsel %vm1815, %v1895, 0.0
          %1934 = vadd.xlane.f32.xlu0 %v1933
          %v1935 = vpop.xlane.xlu0 %1934
          %v1936 = vsel %vm1815, %v1897, 0.0
          %1937 = vadd.xlane.f32.xlu0 %v1936
          %v1938 = vpop.xlane.xlu0 %1937
          %v1939 = vsel %vm1815, %v1899, 0.0
          %1940 = vadd.xlane.f32.xlu0 %v1939
          %v1941 = vpop.xlane.xlu0 %1940
          %v1942 = vsel %vm1815, %v1901, 0.0
          %1943 = vadd.xlane.f32.xlu0 %v1942
          %v1944 = vpop.xlane.xlu0 %1943
          %v1945 = vsel %vm1815, %v1903, 0.0
          %1946 = vadd.xlane.f32.xlu0 %v1945
          %v1947 = vpop.xlane.xlu0 %1946
          %v1948 = vsel %vm1815, %v1905, 0.0
          %1949 = vadd.xlane.f32.xlu0 %v1948
          %v1950 = vpop.xlane.xlu0 %1949
          %v1951 = vsel %vm1815, %v1907, 0.0
          %1952 = vadd.xlane.f32.xlu0 %v1951
          %v1953 = vpop.xlane.xlu0 %1952
          %v1954 = vsel %vm1815, %v1909, 0.0
          %1955 = vadd.xlane.f32.xlu0 %v1954
          %v1956 = vpop.xlane.xlu0 %1955
          %v1957 = vsel %vm1815, %v1911, 0.0
          %1958 = vadd.xlane.f32.xlu0 %v1957
          %v1959 = vpop.xlane.xlu0 %1958
          %v1960 = vrcp.pop %v1914
          %v1961 = vrcp.pop %v1917
          %v1962 = vrcp.pop %v1920
          %v1963 = vrcp.pop %v1923
          %v1964 = vrcp.pop %v1926
          %v1965 = vrcp.pop %v1929
          %v1966 = vrcp.pop %v1932
          %v1967 = vrcp.pop %v1935
          %v1968 = vrcp.pop %v1938
          %v1969 = vrcp.pop %v1941
          %v1970 = vrcp.pop %v1944
          %v1971 = vrcp.pop %v1947
          %v1972 = vrcp.pop %v1950
          %v1973 = vrcp.pop %v1953
          %v1974 = vrcp.pop %v1956
          %v1975 = vrcp.pop %v1959
          %v1976 = vmul.f32 %v1881, %v1960
          %v1977 = vmul.f32 %v1883, %v1961
          %v1978 = vmul.f32 %v1885, %v1962
          %v1979 = vmul.f32 %v1887, %v1963
          %v1980 = vmul.f32 %v1889, %v1964
          %v1981 = vmul.f32 %v1891, %v1965
          %v1982 = vmul.f32 %v1893, %v1966
          %v1983 = vmul.f32 %v1895, %v1967
          %v1984 = vmul.f32 %v1897, %v1968
          %v1985 = vmul.f32 %v1899, %v1969
          %v1986 = vmul.f32 %v1901, %v1970
          %v1987 = vmul.f32 %v1903, %v1971
          %v1988 = vmul.f32 %v1905, %v1972
          %v1989 = vmul.f32 %v1907, %v1973
          %v1990 = vmul.f32 %v1909, %v1974
          %v1991 = vmul.f32 %v1911, %v1975
          %s1992 = scalar_lea.vmem [#allocation3], %s389
          %1993 = vst.msk [vmem:[%s1992] sm:$0xff] %vm1815, %v1976
          %1994 = vst.msk [vmem:[%s1992 + $0x8] sm:$0xff] %vm1815, %v1977
          %1995 = vst.msk [vmem:[%s1992 + $0x10] sm:$0xff] %vm1815, %v1978
          %1996 = vst.msk [vmem:[%s1992 + $0x18] sm:$0xff] %vm1815, %v1979
          %1997 = vst.msk [vmem:[%s1992 + $0x20] sm:$0xff] %vm1815, %v1980
          %1998 = vst.msk [vmem:[%s1992 + $0x28] sm:$0xff] %vm1815, %v1981
          %1999 = vst.msk [vmem:[%s1992 + $0x30] sm:$0xff] %vm1815, %v1982
          %2000 = vst.msk [vmem:[%s1992 + $0x38] sm:$0xff] %vm1815, %v1983
          %2001 = vst.msk [vmem:[%s1992 + $0x40] sm:$0xff] %vm1815, %v1984
          %2002 = vst.msk [vmem:[%s1992 + $0x48] sm:$0xff] %vm1815, %v1985
          %2003 = vst.msk [vmem:[%s1992 + $0x50] sm:$0xff] %vm1815, %v1986
          %2004 = vst.msk [vmem:[%s1992 + $0x58] sm:$0xff] %vm1815, %v1987
          %2005 = vst.msk [vmem:[%s1992 + $0x60] sm:$0xff] %vm1815, %v1988
          %2006 = vst.msk [vmem:[%s1992 + $0x68] sm:$0xff] %vm1815, %v1989
          %2007 = vst.msk [vmem:[%s1992 + $0x70] sm:$0xff] %vm1815, %v1990
          %2008 = vst.msk [vmem:[%s1992 + $0x78] sm:$0xff] %vm1815, %v1991
          %s2009 = scalar_lea.vmem %s2, %s389
          %v2010 = vld [vmem:[%s2009] sm:$0xff]
          %v2011 = vld [vmem:[%s2009 + $0x8] sm:$0xff]
          %v2012 = vld [vmem:[%s2009 + $0x10] sm:$0xff]
          %v2013 = vld [vmem:[%s2009 + $0x18] sm:$0xff]
          %v2014 = vld [vmem:[%s2009 + $0x20] sm:$0xff]
          %v2015 = vld [vmem:[%s2009 + $0x28] sm:$0xff]
          %v2016 = vld [vmem:[%s2009 + $0x30] sm:$0xff]
          %v2017 = vld [vmem:[%s2009 + $0x38] sm:$0xff]
          %v2018 = vld [vmem:[%s2009 + $0x40] sm:$0xff]
          %v2019 = vld [vmem:[%s2009 + $0x48] sm:$0xff]
          %v2020 = vld [vmem:[%s2009 + $0x50] sm:$0xff]
          %v2021 = vld [vmem:[%s2009 + $0x58] sm:$0xff]
          %v2022 = vld [vmem:[%s2009 + $0x60] sm:$0xff]
          %v2023 = vld [vmem:[%s2009 + $0x68] sm:$0xff]
          %v2024 = vld [vmem:[%s2009 + $0x70] sm:$0xff]
          %v2025 = vld [vmem:[%s2009 + $0x78] sm:$0xff]
          %2027 = vset.pattern.permute.xlu0 0
          %2028 = vperm.xlu0 %2027, %v2010
          %v2029 = vpop.permute.xlu0 %2028
          %2032 = vset.pattern.permute.xlu0 0
          %2033 = vperm.xlu0 %2032, %v2011
          %v2034 = vpop.permute.xlu0 %2033
          %2037 = vset.pattern.permute.xlu0 0
          %2038 = vperm.xlu0 %2037, %v2012
          %v2039 = vpop.permute.xlu0 %2038
          %2042 = vset.pattern.permute.xlu0 0
          %2043 = vperm.xlu0 %2042, %v2013
          %v2044 = vpop.permute.xlu0 %2043
          %2047 = vset.pattern.permute.xlu0 0
          %2048 = vperm.xlu0 %2047, %v2014
          %v2049 = vpop.permute.xlu0 %2048
          %2052 = vset.pattern.permute.xlu0 0
          %2053 = vperm.xlu0 %2052, %v2015
          %v2054 = vpop.permute.xlu0 %2053
          %2057 = vset.pattern.permute.xlu0 0
          %2058 = vperm.xlu0 %2057, %v2016
          %v2059 = vpop.permute.xlu0 %2058
          %2062 = vset.pattern.permute.xlu0 0
          %2063 = vperm.xlu0 %2062, %v2017
          %v2064 = vpop.permute.xlu0 %2063
          %2067 = vset.pattern.permute.xlu0 0
          %2068 = vperm.xlu0 %2067, %v2018
          %v2069 = vpop.permute.xlu0 %2068
          %2072 = vset.pattern.permute.xlu0 0
          %2073 = vperm.xlu0 %2072, %v2019
          %v2074 = vpop.permute.xlu0 %2073
          %2077 = vset.pattern.permute.xlu0 0
          %2078 = vperm.xlu0 %2077, %v2020
          %v2079 = vpop.permute.xlu0 %2078
          %2082 = vset.pattern.permute.xlu0 0
          %2083 = vperm.xlu0 %2082, %v2021
          %v2084 = vpop.permute.xlu0 %2083
          %2087 = vset.pattern.permute.xlu0 0
          %2088 = vperm.xlu0 %2087, %v2022
          %v2089 = vpop.permute.xlu0 %2088
          %2092 = vset.pattern.permute.xlu0 0
          %2093 = vperm.xlu0 %2092, %v2023
          %v2094 = vpop.permute.xlu0 %2093
          %2097 = vset.pattern.permute.xlu0 0
          %2098 = vperm.xlu0 %2097, %v2024
          %v2099 = vpop.permute.xlu0 %2098
          %2102 = vset.pattern.permute.xlu0 0
          %2103 = vperm.xlu0 %2102, %v2025
          %v2104 = vpop.permute.xlu0 %2103
          %v2106 = vmul.f32 %v2029, %v1976
          %v2107 = vmul.f32 %v2034, %v1977
          %v2108 = vmul.f32 %v2039, %v1978
          %v2109 = vmul.f32 %v2044, %v1979
          %v2110 = vmul.f32 %v2049, %v1980
          %v2111 = vmul.f32 %v2054, %v1981
          %v2112 = vmul.f32 %v2059, %v1982
          %v2113 = vmul.f32 %v2064, %v1983
          %v2114 = vmul.f32 %v2069, %v1984
          %v2115 = vmul.f32 %v2074, %v1985
          %v2116 = vmul.f32 %v2079, %v1986
          %v2117 = vmul.f32 %v2084, %v1987
          %v2118 = vmul.f32 %v2089, %v1988
          %v2119 = vmul.f32 %v2094, %v1989
          %v2120 = vmul.f32 %v2099, %v1990
          %v2121 = vmul.f32 %v2104, %v1991
          %s2122 = scalar_lea.vmem [#allocation4], %s389
          %2123 = vst.msk [vmem:[%s2122] sm:$0xff] %vm1815, %v2106
          %2124 = vst.msk [vmem:[%s2122 + $0x8] sm:$0xff] %vm1815, %v2107
          %2125 = vst.msk [vmem:[%s2122 + $0x10] sm:$0xff] %vm1815, %v2108
          %2126 = vst.msk [vmem:[%s2122 + $0x18] sm:$0xff] %vm1815, %v2109
          %2127 = vst.msk [vmem:[%s2122 + $0x20] sm:$0xff] %vm1815, %v2110
          %2128 = vst.msk [vmem:[%s2122 + $0x28] sm:$0xff] %vm1815, %v2111
          %2129 = vst.msk [vmem:[%s2122 + $0x30] sm:$0xff] %vm1815, %v2112
          %2130 = vst.msk [vmem:[%s2122 + $0x38] sm:$0xff] %vm1815, %v2113
          %2131 = vst.msk [vmem:[%s2122 + $0x40] sm:$0xff] %vm1815, %v2114
          %2132 = vst.msk [vmem:[%s2122 + $0x48] sm:$0xff] %vm1815, %v2115
          %2133 = vst.msk [vmem:[%s2122 + $0x50] sm:$0xff] %vm1815, %v2116
          %2134 = vst.msk [vmem:[%s2122 + $0x58] sm:$0xff] %vm1815, %v2117
          %2135 = vst.msk [vmem:[%s2122 + $0x60] sm:$0xff] %vm1815, %v2118
          %2136 = vst.msk [vmem:[%s2122 + $0x68] sm:$0xff] %vm1815, %v2119
          %2137 = vst.msk [vmem:[%s2122 + $0x70] sm:$0xff] %vm1815, %v2120
          %2138 = vst.msk [vmem:[%s2122 + $0x78] sm:$0xff] %vm1815, %v2121
          %v2139 = vld [vmem:[#allocation6] sm:$0xff]
          %2140 = vxpose.xlu0.b32.start [1/16] %v1976, 128
          %2141 = vxpose.xlu0.b32.cont [2/16] %v1977, 128
          %2142 = vxpose.xlu0.b32.cont [3/16] %v1978, 128
          %2143 = vxpose.xlu0.b32.cont [4/16] %v1979, 128
          %2144 = vxpose.xlu0.b32.cont [5/16] %v1980, 128
          %2145 = vxpose.xlu0.b32.cont [6/16] %v1981, 128
          %2146 = vxpose.xlu0.b32.cont [7/16] %v1982, 128
          %2147 = vxpose.xlu0.b32.cont [8/16] %v1983, 128
          %2148 = vxpose.xlu0.b32.cont [9/16] %v1984, 128
          %2149 = vxpose.xlu0.b32.cont [10/16] %v1985, 128
          %2150 = vxpose.xlu0.b32.cont [11/16] %v1986, 128
          %2151 = vxpose.xlu0.b32.cont [12/16] %v1987, 128
          %2152 = vxpose.xlu0.b32.cont [13/16] %v1988, 128
          %2153 = vxpose.xlu0.b32.cont [14/16] %v1989, 128
          %2154 = vxpose.xlu0.b32.cont [15/16] %v1990, 128
          %2155 = vxpose.xlu0.b32.end [16/16] %v1991, 128
          %v2156 = vpop.trf.xlu0
          %v2157 = vpop.trf.xlu0
          %v2158 = vpop.trf.xlu0
          %v2159 = vpop.trf.xlu0
          %v2160 = vpop.trf.xlu0
          %v2161 = vpop.trf.xlu0
          %v2162 = vpop.trf.xlu0
          %v2163 = vpop.trf.xlu0
          %v2164 = vpop.trf.xlu0
          %v2165 = vpop.trf.xlu0
          %v2166 = vpop.trf.xlu0
          %v2167 = vpop.trf.xlu0
          %v2168 = vpop.trf.xlu0
          %v2169 = vpop.trf.xlu0
          %v2170 = vpop.trf.xlu0
          %v2171 = vpop.trf.xlu0
          %2172 = vmatprep.subr.mxu0 0.0
          %2173 = vmatpush1.msra.mxu0 %v1375
          %2174 = vmatprep.subr.mxu0 0.0
          %2175 = vmatpush1.msra.mxu0 %v1376
          %2176 = vmatprep.subr.mxu0 0.0
          %2177 = vmatpush1.msra.mxu0 %v1377
          %2178 = vmatprep.subr.mxu0 0.0
          %2179 = vmatpush1.msra.mxu0 %v1378
          %2180 = vmatprep.subr.mxu0 0.0
          %2181 = vmatpush1.msra.mxu0 %v1379
          %2182 = vmatprep.subr.mxu0 0.0
          %2183 = vmatpush1.msra.mxu0 %v1380
          %2184 = vmatprep.subr.mxu0 0.0
          %2185 = vmatpush1.msra.mxu0 %v1381
          %2186 = vmatprep.subr.mxu0 0.0
          %2187 = vmatpush1.msra.mxu0 %v1382
          %2188 = vmatprep.subr.mxu0 0.0
          %2189 = vmatpush1.msra.mxu0 %v1383
          %2190 = vmatprep.subr.mxu0 0.0
          %2191 = vmatpush1.msra.mxu0 %v1384
          %2192 = vmatprep.subr.mxu0 0.0
          %2193 = vmatpush1.msra.mxu0 %v1385
          %2194 = vmatprep.subr.mxu0 0.0
          %2195 = vmatpush1.msra.mxu0 %v1386
          %2196 = vmatprep.subr.mxu0 0.0
          %2197 = vmatpush1.msra.mxu0 %v1387
          %2198 = vmatprep.subr.mxu0 0.0
          %2199 = vmatpush1.msra.mxu0 %v1388
          %2200 = vmatprep.subr.mxu0 0.0
          %2201 = vmatpush1.msra.mxu0 %v1389
          %2202 = vmatprep.subr.mxu0 0.0
          %2203 = vmatpush1.msra.mxu0 %v1390
          %2204 = vmatprep.subr.mxu0 0.0
          %2205 = vmatpush1.msra.mxu0 0.0
          %2206 = vmatprep.subr.mxu0 0.0
          %2207 = vmatpush1.msra.mxu0 0.0
          %2208 = vmatprep.subr.mxu0 0.0
          %2209 = vmatpush1.msra.mxu0 0.0
          %2210 = vmatprep.subr.mxu0 0.0
          %2211 = vmatpush1.msra.mxu0 0.0
          %2212 = vmatprep.subr.mxu0 0.0
          %2213 = vmatpush1.msra.mxu0 0.0
          %2214 = vmatprep.subr.mxu0 0.0
          %2215 = vmatpush1.msra.mxu0 0.0
          %2216 = vmatprep.subr.mxu0 0.0
          %2217 = vmatpush1.msra.mxu0 0.0
          %2218 = vmatprep.subr.mxu0 0.0
          %2219 = vmatpush1.msra.mxu0 0.0
          %2220 = vmatprep.subr.mxu0 0.0
          %2221 = vmatpush1.msra.mxu0 0.0
          %2222 = vmatprep.subr.mxu0 0.0
          %2223 = vmatpush1.msra.mxu0 0.0
          %2224 = vmatprep.subr.mxu0 0.0
          %2225 = vmatpush1.msra.mxu0 0.0
          %2226 = vmatprep.subr.mxu0 0.0
          %2227 = vmatpush1.msra.mxu0 0.0
          %2228 = vmatprep.subr.mxu0 0.0
          %2229 = vmatpush1.msra.mxu0 0.0
          %2230 = vmatprep.subr.mxu0 0.0
          %2231 = vmatpush1.msra.mxu0 0.0
          %2232 = vmatprep.subr.mxu0 0.0
          %2233 = vmatpush1.msra.mxu0 0.0
          %2234 = vmatprep.subr.mxu0 0.0
          %2235 = vmatpush1.msra.mxu0 0.0
          %2236 = vmatprep.mubr.f32.mxu0 0.0
          %2237 = vmatmul.mubr.f32.gmra.mrb[0].mxu0 %v2156
          %v2238 = vpop.f32.mrb[0].mxu0
          %v2239 = vadd.f32 0.0, %v2238
          %v2240 = vpop.f32.mrb[0].mxu0
          %2241 = vdwg.mxu0
          %v2242 = vadd.f32 %v2139, %v2239
          %2243 = vst.msk [vmem:[#allocation6] sm:$0xff] %vm1402, %v2242
        $region68: #{tpu_custom_call.1} parent=59 // pred_fallthru
          _
        %p2244 = scmp.eq.s32.totalorder %s29, 1
        // Predicated region
        $region69: #{tpu_custom_call.1} parent=59 // pred_check
          %p2245 = pneg %p2244
        $region70: #{tpu_custom_call.1} parent=59 // pred_check_branch
          %2247 = sbr.rel (%p2245) target = $region72
        $region71: #{tpu_custom_call.1} parent=59 // pred_region
          %s2248 = scalar_lea.vmem [#allocation3], %s389
          %v2249 = vld [vmem:[%s2248] sm:$0xff]
          %v2250 = vld [vmem:[%s2248 + $0x8] sm:$0xff]
          %v2251 = vld [vmem:[%s2248 + $0x10] sm:$0xff]
          %v2252 = vld [vmem:[%s2248 + $0x18] sm:$0xff]
          %v2253 = vld [vmem:[%s2248 + $0x20] sm:$0xff]
          %v2254 = vld [vmem:[%s2248 + $0x28] sm:$0xff]
          %v2255 = vld [vmem:[%s2248 + $0x30] sm:$0xff]
          %v2256 = vld [vmem:[%s2248 + $0x38] sm:$0xff]
          %v2257 = vld [vmem:[%s2248 + $0x40] sm:$0xff]
          %v2258 = vld [vmem:[%s2248 + $0x48] sm:$0xff]
          %v2259 = vld [vmem:[%s2248 + $0x50] sm:$0xff]
          %v2260 = vld [vmem:[%s2248 + $0x58] sm:$0xff]
          %v2261 = vld [vmem:[%s2248 + $0x60] sm:$0xff]
          %v2262 = vld [vmem:[%s2248 + $0x68] sm:$0xff]
          %v2263 = vld [vmem:[%s2248 + $0x70] sm:$0xff]
          %v2264 = vld [vmem:[%s2248 + $0x78] sm:$0xff]
          %s2265 = scalar_lea.vmem %s2, %s389
          %v2266 = vld [vmem:[%s2265] sm:$0xff]
          %v2267 = vld [vmem:[%s2265 + $0x8] sm:$0xff]
          %v2268 = vld [vmem:[%s2265 + $0x10] sm:$0xff]
          %v2269 = vld [vmem:[%s2265 + $0x18] sm:$0xff]
          %v2270 = vld [vmem:[%s2265 + $0x20] sm:$0xff]
          %v2271 = vld [vmem:[%s2265 + $0x28] sm:$0xff]
          %v2272 = vld [vmem:[%s2265 + $0x30] sm:$0xff]
          %v2273 = vld [vmem:[%s2265 + $0x38] sm:$0xff]
          %v2274 = vld [vmem:[%s2265 + $0x40] sm:$0xff]
          %v2275 = vld [vmem:[%s2265 + $0x48] sm:$0xff]
          %v2276 = vld [vmem:[%s2265 + $0x50] sm:$0xff]
          %v2277 = vld [vmem:[%s2265 + $0x58] sm:$0xff]
          %v2278 = vld [vmem:[%s2265 + $0x60] sm:$0xff]
          %v2279 = vld [vmem:[%s2265 + $0x68] sm:$0xff]
          %v2280 = vld [vmem:[%s2265 + $0x70] sm:$0xff]
          %v2281 = vld [vmem:[%s2265 + $0x78] sm:$0xff]
          %v2282 = vld [vmem:[#allocation4] sm:$0xff]
          %v2283 = vld [vmem:[#allocation4 + $0x8] sm:$0xff]
          %v2284 = vld [vmem:[#allocation4 + $0x10] sm:$0xff]
          %v2285 = vld [vmem:[#allocation4 + $0x18] sm:$0xff]
          %v2286 = vld [vmem:[#allocation4 + $0x20] sm:$0xff]
          %v2287 = vld [vmem:[#allocation4 + $0x28] sm:$0xff]
          %v2288 = vld [vmem:[#allocation4 + $0x30] sm:$0xff]
          %v2289 = vld [vmem:[#allocation4 + $0x38] sm:$0xff]
          %v2290 = vld [vmem:[#allocation4 + $0x40] sm:$0xff]
          %v2291 = vld [vmem:[#allocation4 + $0x48] sm:$0xff]
          %v2292 = vld [vmem:[#allocation4 + $0x50] sm:$0xff]
          %v2293 = vld [vmem:[#allocation4 + $0x58] sm:$0xff]
          %v2294 = vld [vmem:[#allocation4 + $0x60] sm:$0xff]
          %v2295 = vld [vmem:[#allocation4 + $0x68] sm:$0xff]
          %v2296 = vld [vmem:[#allocation4 + $0x70] sm:$0xff]
          %v2297 = vld [vmem:[#allocation4 + $0x78] sm:$0xff]
          %v2298 = vld [vmem:[#allocation4 + $0x80] sm:$0xff]
          %v2299 = vld [vmem:[#allocation4 + $0x88] sm:$0xff]
          %v2300 = vld [vmem:[#allocation4 + $0x90] sm:$0xff]
          %v2301 = vld [vmem:[#allocation4 + $0x98] sm:$0xff]
          %v2302 = vld [vmem:[#allocation4 + $0xa0] sm:$0xff]
          %v2303 = vld [vmem:[#allocation4 + $0xa8] sm:$0xff]
          %v2304 = vld [vmem:[#allocation4 + $0xb0] sm:$0xff]
          %v2305 = vld [vmem:[#allocation4 + $0xb8] sm:$0xff]
          %v2306 = vld [vmem:[#allocation4 + $0xc0] sm:$0xff]
          %v2307 = vld [vmem:[#allocation4 + $0xc8] sm:$0xff]
          %v2308 = vld [vmem:[#allocation4 + $0xd0] sm:$0xff]
          %v2309 = vld [vmem:[#allocation4 + $0xd8] sm:$0xff]
          %v2310 = vld [vmem:[#allocation4 + $0xe0] sm:$0xff]
          %v2311 = vld [vmem:[#allocation4 + $0xe8] sm:$0xff]
          %v2312 = vld [vmem:[#allocation4 + $0xf0] sm:$0xff]
          %v2313 = vld [vmem:[#allocation4 + $0xf8] sm:$0xff]
          %2314 = vmatprep.subr.mxu0 0.0
          %2315 = vmatpush1.msra.mxu0 %v2282
          %2316 = vmatprep.subr.mxu0 0.0
          %2317 = vmatpush1.msra.mxu0 %v2283
          %2318 = vmatprep.subr.mxu0 0.0
          %2319 = vmatpush1.msra.mxu0 %v2284
          %2320 = vmatprep.subr.mxu0 0.0
          %2321 = vmatpush1.msra.mxu0 %v2285
          %2322 = vmatprep.subr.mxu0 0.0
          %2323 = vmatpush1.msra.mxu0 %v2286
          %2324 = vmatprep.subr.mxu0 0.0
          %2325 = vmatpush1.msra.mxu0 %v2287
          %2326 = vmatprep.subr.mxu0 0.0
          %2327 = vmatpush1.msra.mxu0 %v2288
          %2328 = vmatprep.subr.mxu0 0.0
          %2329 = vmatpush1.msra.mxu0 %v2289
          %2330 = vmatprep.subr.mxu0 0.0
          %2331 = vmatpush1.msra.mxu0 %v2290
          %2332 = vmatprep.subr.mxu0 0.0
          %2333 = vmatpush1.msra.mxu0 %v2291
          %2334 = vmatprep.subr.mxu0 0.0
          %2335 = vmatpush1.msra.mxu0 %v2292
          %2336 = vmatprep.subr.mxu0 0.0
          %2337 = vmatpush1.msra.mxu0 %v2293
          %2338 = vmatprep.subr.mxu0 0.0
          %2339 = vmatpush1.msra.mxu0 %v2294
          %2340 = vmatprep.subr.mxu0 0.0
          %2341 = vmatpush1.msra.mxu0 %v2295
          %2342 = vmatprep.subr.mxu0 0.0
          %2343 = vmatpush1.msra.mxu0 %v2296
          %2344 = vmatprep.subr.mxu0 0.0
          %2345 = vmatpush1.msra.mxu0 %v2297
          %2346 = vmatprep.subr.mxu0 0.0
          %2347 = vmatpush1.msra.mxu0 %v2298
          %2348 = vmatprep.subr.mxu0 0.0
          %2349 = vmatpush1.msra.mxu0 %v2299
          %2350 = vmatprep.subr.mxu0 0.0
          %2351 = vmatpush1.msra.mxu0 %v2300
          %2352 = vmatprep.subr.mxu0 0.0
          %2353 = vmatpush1.msra.mxu0 %v2301
          %2354 = vmatprep.subr.mxu0 0.0
          %2355 = vmatpush1.msra.mxu0 %v2302
          %2356 = vmatprep.subr.mxu0 0.0
          %2357 = vmatpush1.msra.mxu0 %v2303
          %2358 = vmatprep.subr.mxu0 0.0
          %2359 = vmatpush1.msra.mxu0 %v2304
          %2360 = vmatprep.subr.mxu0 0.0
          %2361 = vmatpush1.msra.mxu0 %v2305
          %2362 = vmatprep.subr.mxu0 0.0
          %2363 = vmatpush1.msra.mxu0 %v2306
          %2364 = vmatprep.subr.mxu0 0.0
          %2365 = vmatpush1.msra.mxu0 %v2307
          %2366 = vmatprep.subr.mxu0 0.0
          %2367 = vmatpush1.msra.mxu0 %v2308
          %2368 = vmatprep.subr.mxu0 0.0
          %2369 = vmatpush1.msra.mxu0 %v2309
          %2370 = vmatprep.subr.mxu0 0.0
          %2371 = vmatpush1.msra.mxu0 %v2310
          %2372 = vmatprep.subr.mxu0 0.0
          %2373 = vmatpush1.msra.mxu0 %v2311
          %2374 = vmatprep.subr.mxu0 0.0
          %2375 = vmatpush1.msra.mxu0 %v2312
          %2376 = vmatprep.subr.mxu0 0.0
          %2377 = vmatpush1.msra.mxu0 %v2313
          %2378 = vmatprep.mubr.f32.mxu0 %v407
          %2379 = vmatmul.mubr.f32.gmra.mrb[0].mxu0 %v406
          %v2380 = vpop.f32.mrb[0].mxu0
          %v2381 = vadd.f32 0.0, %v2380
          %v2382 = vpop.f32.mrb[0].mxu0
          %2383 = vmatprep.mubr.f32.mxu0 %v409
          %2384 = vmatmul.mubr.f32.gmra.mrb[0].mxu0 %v408
          %v2385 = vpop.f32.mrb[0].mxu0
          %v2386 = vadd.f32 0.0, %v2385
          %v2387 = vpop.f32.mrb[0].mxu0
          %2388 = vmatprep.mubr.f32.mxu0 %v411
          %2389 = vmatmul.mubr.f32.gmra.mrb[0].mxu0 %v410
          %v2390 = vpop.f32.mrb[0].mxu0
          %v2391 = vadd.f32 0.0, %v2390
          %v2392 = vpop.f32.mrb[0].mxu0
          %2393 = vmatprep.mubr.f32.mxu0 %v413
          %2394 = vmatmul.mubr.f32.gmra.mrb[0].mxu0 %v412
          %v2395 = vpop.f32.mrb[0].mxu0
          %v2396 = vadd.f32 0.0, %v2395
          %v2397 = vpop.f32.mrb[0].mxu0
          %2398 = vmatprep.mubr.f32.mxu0 %v415
          %2399 = vmatmul.mubr.f32.gmra.mrb[0].mxu0 %v414
          %v2400 = vpop.f32.mrb[0].mxu0
          %v2401 = vadd.f32 0.0, %v2400
          %v2402 = vpop.f32.mrb[0].mxu0
          %2403 = vmatprep.mubr.f32.mxu0 %v417
          %2404 = vmatmul.mubr.f32.gmra.mrb[0].mxu0 %v416
          %v2405 = vpop.f32.mrb[0].mxu0
          %v2406 = vadd.f32 0.0, %v2405
          %v2407 = vpop.f32.mrb[0].mxu0
          %2408 = vmatprep.mubr.f32.mxu0 %v419
          %2409 = vmatmul.mubr.f32.gmra.mrb[0].mxu0 %v418
          %v2410 = vpop.f32.mrb[0].mxu0
          %v2411 = vadd.f32 0.0, %v2410
          %v2412 = vpop.f32.mrb[0].mxu0
          %2413 = vmatprep.mubr.f32.mxu0 %v421
          %2414 = vmatmul.mubr.f32.gmra.mrb[0].mxu0 %v420
          %v2415 = vpop.f32.mrb[0].mxu0
          %v2416 = vadd.f32 0.0, %v2415
          %v2417 = vpop.f32.mrb[0].mxu0
          %2418 = vmatprep.mubr.f32.mxu0 %v423
          %2419 = vmatmul.mubr.f32.gmra.mrb[0].mxu0 %v422
          %v2420 = vpop.f32.mrb[0].mxu0
          %v2421 = vadd.f32 0.0, %v2420
          %v2422 = vpop.f32.mrb[0].mxu0
          %2423 = vmatprep.mubr.f32.mxu0 %v425
          %2424 = vmatmul.mubr.f32.gmra.mrb[0].mxu0 %v424
          %v2425 = vpop.f32.mrb[0].mxu0
          %v2426 = vadd.f32 0.0, %v2425
          %v2427 = vpop.f32.mrb[0].mxu0
          %2428 = vmatprep.mubr.f32.mxu0 %v427
          %2429 = vmatmul.mubr.f32.gmra.mrb[0].mxu0 %v426
          %v2430 = vpop.f32.mrb[0].mxu0
          %v2431 = vadd.f32 0.0, %v2430
          %v2432 = vpop.f32.mrb[0].mxu0
          %2433 = vmatprep.mubr.f32.mxu0 %v429
          %2434 = vmatmul.mubr.f32.gmra.mrb[0].mxu0 %v428
          %v2435 = vpop.f32.mrb[0].mxu0
          %v2436 = vadd.f32 0.0, %v2435
          %v2437 = vpop.f32.mrb[0].mxu0
          %2438 = vmatprep.mubr.f32.mxu0 %v431
          %2439 = vmatmul.mubr.f32.gmra.mrb[0].mxu0 %v430
          %v2440 = vpop.f32.mrb[0].mxu0
          %v2441 = vadd.f32 0.0, %v2440
          %v2442 = vpop.f32.mrb[0].mxu0
          %2443 = vmatprep.mubr.f32.mxu0 %v433
          %2444 = vmatmul.mubr.f32.gmra.mrb[0].mxu0 %v432
          %v2445 = vpop.f32.mrb[0].mxu0
          %v2446 = vadd.f32 0.0, %v2445
          %v2447 = vpop.f32.mrb[0].mxu0
          %2448 = vmatprep.mubr.f32.mxu0 %v435
          %2449 = vmatmul.mubr.f32.gmra.mrb[0].mxu0 %v434
          %v2450 = vpop.f32.mrb[0].mxu0
          %v2451 = vadd.f32 0.0, %v2450
          %v2452 = vpop.f32.mrb[0].mxu0
          %2453 = vmatprep.mubr.f32.mxu0 %v437
          %2454 = vmatmul.mubr.f32.gmra.mrb[0].mxu0 %v436
          %v2455 = vpop.f32.mrb[0].mxu0
          %v2456 = vadd.f32 0.0, %v2455
          %v2457 = vpop.f32.mrb[0].mxu0
          %2458 = vdwg.mxu0
          %2460 = vset.pattern.permute.xlu0 0
          %2461 = vperm.xlu0 %2460, %v2266
          %v2462 = vpop.permute.xlu0 %2461
          %2465 = vset.pattern.permute.xlu0 0
          %2466 = vperm.xlu0 %2465, %v2267
          %v2467 = vpop.permute.xlu0 %2466
          %2470 = vset.pattern.permute.xlu0 0
          %2471 = vperm.xlu0 %2470, %v2268
          %v2472 = vpop.permute.xlu0 %2471
          %2475 = vset.pattern.permute.xlu0 0
          %2476 = vperm.xlu0 %2475, %v2269
          %v2477 = vpop.permute.xlu0 %2476
          %2480 = vset.pattern.permute.xlu0 0
          %2481 = vperm.xlu0 %2480, %v2270
          %v2482 = vpop.permute.xlu0 %2481
          %2485 = vset.pattern.permute.xlu0 0
          %2486 = vperm.xlu0 %2485, %v2271
          %v2487 = vpop.permute.xlu0 %2486
          %2490 = vset.pattern.permute.xlu0 0
          %2491 = vperm.xlu0 %2490, %v2272
          %v2492 = vpop.permute.xlu0 %2491
          %2495 = vset.pattern.permute.xlu0 0
          %2496 = vperm.xlu0 %2495, %v2273
          %v2497 = vpop.permute.xlu0 %2496
          %2500 = vset.pattern.permute.xlu0 0
          %2501 = vperm.xlu0 %2500, %v2274
          %v2502 = vpop.permute.xlu0 %2501
          %2505 = vset.pattern.permute.xlu0 0
          %2506 = vperm.xlu0 %2505, %v2275
          %v2507 = vpop.permute.xlu0 %2506
          %2510 = vset.pattern.permute.xlu0 0
          %2511 = vperm.xlu0 %2510, %v2276
          %v2512 = vpop.permute.xlu0 %2511
          %2515 = vset.pattern.permute.xlu0 0
          %2516 = vperm.xlu0 %2515, %v2277
          %v2517 = vpop.permute.xlu0 %2516
          %2520 = vset.pattern.permute.xlu0 0
          %2521 = vperm.xlu0 %2520, %v2278
          %v2522 = vpop.permute.xlu0 %2521
          %2525 = vset.pattern.permute.xlu0 0
          %2526 = vperm.xlu0 %2525, %v2279
          %v2527 = vpop.permute.xlu0 %2526
          %2530 = vset.pattern.permute.xlu0 0
          %2531 = vperm.xlu0 %2530, %v2280
          %v2532 = vpop.permute.xlu0 %2531
          %2535 = vset.pattern.permute.xlu0 0
          %2536 = vperm.xlu0 %2535, %v2281
          %v2537 = vpop.permute.xlu0 %2536
          %v2539 = vmul.f32 %v2462, %v2381
          %v2540 = vmul.f32 %v2467, %v2386
          %v2541 = vmul.f32 %v2472, %v2391
          %v2542 = vmul.f32 %v2477, %v2396
          %v2543 = vmul.f32 %v2482, %v2401
          %v2544 = vmul.f32 %v2487, %v2406
          %v2545 = vmul.f32 %v2492, %v2411
          %v2546 = vmul.f32 %v2497, %v2416
          %v2547 = vmul.f32 %v2502, %v2421
          %v2548 = vmul.f32 %v2507, %v2426
          %v2549 = vmul.f32 %v2512, %v2431
          %v2550 = vmul.f32 %v2517, %v2436
          %v2551 = vmul.f32 %v2522, %v2441
          %v2552 = vmul.f32 %v2527, %v2446
          %v2553 = vmul.f32 %v2532, %v2451
          %v2554 = vmul.f32 %v2537, %v2456
          %v2555 = vsub.f32 %v2249, %v2539
          %v2556 = vsub.f32 %v2250, %v2540
          %v2557 = vsub.f32 %v2251, %v2541
          %v2558 = vsub.f32 %v2252, %v2542
          %v2559 = vsub.f32 %v2253, %v2543
          %v2560 = vsub.f32 %v2254, %v2544
          %v2561 = vsub.f32 %v2255, %v2545
          %v2562 = vsub.f32 %v2256, %v2546
          %v2563 = vsub.f32 %v2257, %v2547
          %v2564 = vsub.f32 %v2258, %v2548
          %v2565 = vsub.f32 %v2259, %v2549
          %v2566 = vsub.f32 %v2260, %v2550
          %v2567 = vsub.f32 %v2261, %v2551
          %v2568 = vsub.f32 %v2262, %v2552
          %v2569 = vsub.f32 %v2263, %v2553
          %v2570 = vsub.f32 %v2264, %v2554
          %v2571 = vld [vmem:[#allocation5] sm:$0xff]
          %2572 = vxpose.xlu0.b32.start [1/16] %v2249, 128
          %2573 = vxpose.xlu0.b32.cont [2/16] %v2250, 128
          %2574 = vxpose.xlu0.b32.cont [3/16] %v2251, 128
          %2575 = vxpose.xlu0.b32.cont [4/16] %v2252, 128
          %2576 = vxpose.xlu0.b32.cont [5/16] %v2253, 128
          %2577 = vxpose.xlu0.b32.cont [6/16] %v2254, 128
          %2578 = vxpose.xlu0.b32.cont [7/16] %v2255, 128
          %2579 = vxpose.xlu0.b32.cont [8/16] %v2256, 128
          %2580 = vxpose.xlu0.b32.cont [9/16] %v2257, 128
          %2581 = vxpose.xlu0.b32.cont [10/16] %v2258, 128
          %2582 = vxpose.xlu0.b32.cont [11/16] %v2259, 128
          %2583 = vxpose.xlu0.b32.cont [12/16] %v2260, 128
          %2584 = vxpose.xlu0.b32.cont [13/16] %v2261, 128
          %2585 = vxpose.xlu0.b32.cont [14/16] %v2262, 128
          %2586 = vxpose.xlu0.b32.cont [15/16] %v2263, 128
          %2587 = vxpose.xlu0.b32.end [16/16] %v2264, 128
          %v2588 = vpop.trf.xlu0
          %v2589 = vpop.trf.xlu0
          %v2590 = vpop.trf.xlu0
          %v2591 = vpop.trf.xlu0
          %v2592 = vpop.trf.xlu0
          %v2593 = vpop.trf.xlu0
          %v2594 = vpop.trf.xlu0
          %v2595 = vpop.trf.xlu0
          %v2596 = vpop.trf.xlu0
          %v2597 = vpop.trf.xlu0
          %v2598 = vpop.trf.xlu0
          %v2599 = vpop.trf.xlu0
          %v2600 = vpop.trf.xlu0
          %v2601 = vpop.trf.xlu0
          %v2602 = vpop.trf.xlu0
          %v2603 = vpop.trf.xlu0
          %2604 = vmatprep.subr.mxu0 0.0
          %2605 = vmatpush1.msra.mxu0 %v2555
          %2606 = vmatprep.subr.mxu0 0.0
          %2607 = vmatpush1.msra.mxu0 %v2556
          %2608 = vmatprep.subr.mxu0 0.0
          %2609 = vmatpush1.msra.mxu0 %v2557
          %2610 = vmatprep.subr.mxu0 0.0
          %2611 = vmatpush1.msra.mxu0 %v2558
          %2612 = vmatprep.subr.mxu0 0.0
          %2613 = vmatpush1.msra.mxu0 %v2559
          %2614 = vmatprep.subr.mxu0 0.0
          %2615 = vmatpush1.msra.mxu0 %v2560
          %2616 = vmatprep.subr.mxu0 0.0
          %2617 = vmatpush1.msra.mxu0 %v2561
          %2618 = vmatprep.subr.mxu0 0.0
          %2619 = vmatpush1.msra.mxu0 %v2562
          %2620 = vmatprep.subr.mxu0 0.0
          %2621 = vmatpush1.msra.mxu0 %v2563
          %2622 = vmatprep.subr.mxu0 0.0
          %2623 = vmatpush1.msra.mxu0 %v2564
          %2624 = vmatprep.subr.mxu0 0.0
          %2625 = vmatpush1.msra.mxu0 %v2565
          %2626 = vmatprep.subr.mxu0 0.0
          %2627 = vmatpush1.msra.mxu0 %v2566
          %2628 = vmatprep.subr.mxu0 0.0
          %2629 = vmatpush1.msra.mxu0 %v2567
          %2630 = vmatprep.subr.mxu0 0.0
          %2631 = vmatpush1.msra.mxu0 %v2568
          %2632 = vmatprep.subr.mxu0 0.0
          %2633 = vmatpush1.msra.mxu0 %v2569
          %2634 = vmatprep.subr.mxu0 0.0
          %2635 = vmatpush1.msra.mxu0 %v2570
          %2636 = vmatprep.subr.mxu0 0.0
          %2637 = vmatpush1.msra.mxu0 0.0
          %2638 = vmatprep.subr.mxu0 0.0
          %2639 = vmatpush1.msra.mxu0 0.0
          %2640 = vmatprep.subr.mxu0 0.0
          %2641 = vmatpush1.msra.mxu0 0.0
          %2642 = vmatprep.subr.mxu0 0.0
          %2643 = vmatpush1.msra.mxu0 0.0
          %2644 = vmatprep.subr.mxu0 0.0
          %2645 = vmatpush1.msra.mxu0 0.0
          %2646 = vmatprep.subr.mxu0 0.0
          %2647 = vmatpush1.msra.mxu0 0.0
          %2648 = vmatprep.subr.mxu0 0.0
          %2649 = vmatpush1.msra.mxu0 0.0
          %2650 = vmatprep.subr.mxu0 0.0
          %2651 = vmatpush1.msra.mxu0 0.0
          %2652 = vmatprep.subr.mxu0 0.0
          %2653 = vmatpush1.msra.mxu0 0.0
          %2654 = vmatprep.subr.mxu0 0.0
          %2655 = vmatpush1.msra.mxu0 0.0
          %2656 = vmatprep.subr.mxu0 0.0
          %2657 = vmatpush1.msra.mxu0 0.0
          %2658 = vmatprep.subr.mxu0 0.0
          %2659 = vmatpush1.msra.mxu0 0.0
          %2660 = vmatprep.subr.mxu0 0.0
          %2661 = vmatpush1.msra.mxu0 0.0
          %2662 = vmatprep.subr.mxu0 0.0
          %2663 = vmatpush1.msra.mxu0 0.0
          %2664 = vmatprep.subr.mxu0 0.0
          %2665 = vmatpush1.msra.mxu0 0.0
          %2666 = vmatprep.subr.mxu0 0.0
          %2667 = vmatpush1.msra.mxu0 0.0
          %2668 = vmatprep.mubr.f32.mxu0 0.0
          %2669 = vmatmul.mubr.f32.gmra.mrb[0].mxu0 %v2588
          %v2670 = vpop.f32.mrb[0].mxu0
          %v2671 = vadd.f32 0.0, %v2670
          %v2672 = vpop.f32.mrb[0].mxu0
          %2673 = vdwg.mxu0
          %v2674 = vadd.f32 %v2571, %v2671
          %vm2675 = vcmask 64512
          %2676 = vst.msk [vmem:[#allocation5] sm:$0xff] %vm2675, %v2674
        $region72: #{tpu_custom_call.1} parent=59 // pred_fallthru
          _
        %p2677 = scmp.eq.s32.totalorder %s30, 1
        %p2678 = pnand %p2244, %p2677
        %p2679 = pneg %p2678
        // Predicated region
        $region73: #{tpu_custom_call.1} parent=59 // pred_check
          _
        $region74: #{tpu_custom_call.1} parent=59 // pred_check_branch
          %2681 = sbr.rel (%p2678) target = $region76
        $region75: #{tpu_custom_call.1} parent=59 // pred_region
          %v2682 = vld [vmem:[#allocation5] sm:$0xff]
          %v2683 = vand.u32 2147483647, %v2682
          %vm2684 = vcmask 64512
          %v2685 = vsel %vm2684, %v2683, 0.0
          %2686 = vadd.xlane.f32.xlu0 %v2685
          %v2687 = vpop.xlane.xlu0 %2686
          %v2688 = vmax.f32 %v2687, 1e-12
          %v2689 = vrcp.pop %v2688
          %v2690 = vmul.f32 %v2682, %v2689
          %v2691 = vlaneseq
          %v2692 = vshrl.u32 %v2691, 7
          %v2693 = vlaneseq
          %v2694 = vand.u32 %v2693, 127
          %vm2695 = vcmp.eq.s32.totalorder %v2692, %v2694
          %v2696 = vsel %vm2695, 1, 0
          %v2697 = vcvt.s32.f32 %v2696
          %v2698 = vmul.f32 %v2690, %v2697
          %v2699 = vsel %vm2684, %v2698, 0.0
          %2700 = vadd.xlane.f32.xlu0 %v2699
          %v2701 = vpop.xlane.xlu0 %2700
          %v2703 = vlaneseq
          %v2704 = vshrl.u32 %v2703, 7
          %v2705 = vsub.s32 0, %v2704
          %v2706 = vrot.slane %v2697, %v2705
          %2708 = vbcast.lane.b32.xlu0 %v2706, 256
          %v2709 = vpop.permute.xlu0 %2708
          %v2710 = vlaneseq
          %v2711 = vshrl.u32 %v2710, 7
          %v2712 = vsub.s32 1, %v2711
          %v2713 = vrot.slane %v2697, %v2712
          %2715 = vbcast.lane.b32.xlu0 %v2713, 256
          %v2716 = vpop.permute.xlu0 %2715
          %v2717 = vlaneseq
          %v2718 = vshrl.u32 %v2717, 7
          %v2719 = vsub.s32 2, %v2718
          %v2720 = vrot.slane %v2697, %v2719
          %2722 = vbcast.lane.b32.xlu0 %v2720, 256
          %v2723 = vpop.permute.xlu0 %2722
          %v2724 = vlaneseq
          %v2725 = vshrl.u32 %v2724, 7
          %v2726 = vsub.s32 3, %v2725
          %v2727 = vrot.slane %v2697, %v2726
          %2729 = vbcast.lane.b32.xlu0 %v2727, 256
          %v2730 = vpop.permute.xlu0 %2729
          %v2731 = vlaneseq
          %v2732 = vshrl.u32 %v2731, 7
          %v2733 = vsub.s32 4, %v2732
          %v2734 = vrot.slane %v2697, %v2733
          %2736 = vbcast.lane.b32.xlu0 %v2734, 256
          %v2737 = vpop.permute.xlu0 %2736
          %v2738 = vlaneseq
          %v2739 = vshrl.u32 %v2738, 7
          %v2740 = vsub.s32 5, %v2739
          %v2741 = vrot.slane %v2697, %v2740
          %2743 = vbcast.lane.b32.xlu0 %v2741, 256
          %v2744 = vpop.permute.xlu0 %2743
          %v2745 = vlaneseq
          %v2746 = vshrl.u32 %v2745, 7
          %v2747 = vsub.s32 6, %v2746
          %v2748 = vrot.slane %v2697, %v2747
          %2750 = vbcast.lane.b32.xlu0 %v2748, 256
          %v2751 = vpop.permute.xlu0 %2750
          %v2752 = vlaneseq
          %v2753 = vshrl.u32 %v2752, 7
          %v2754 = vsub.s32 7, %v2753
          %v2755 = vrot.slane %v2697, %v2754
          %2757 = vbcast.lane.b32.xlu0 %v2755, 256
          %v2758 = vpop.permute.xlu0 %2757
          %v2767 = vsub.f32 %v2701, %v2709
          %v2768 = vsub.f32 %v2701, %v2716
          %v2769 = vsub.f32 %v2701, %v2723
          %v2770 = vsub.f32 %v2701, %v2730
          %v2771 = vsub.f32 %v2701, %v2737
          %v2772 = vsub.f32 %v2701, %v2744
          %v2773 = vsub.f32 %v2701, %v2751
          %v2774 = vsub.f32 %v2701, %v2758
          %v2775 = vmul.f32 %v2767, %v2767
          %v2776 = vmul.f32 %v2768, %v2768
          %v2777 = vmul.f32 %v2769, %v2769
          %v2778 = vmul.f32 %v2770, %v2770
          %v2779 = vmul.f32 %v2771, %v2771
          %v2780 = vmul.f32 %v2772, %v2772
          %v2781 = vmul.f32 %v2773, %v2773
          %v2782 = vmul.f32 %v2774, %v2774
          %2791 = vset.pattern.permute.xlu0 0
          %2792 = vperm.xlu0 %2791, %v2775
          %v2793 = vpop.permute.xlu0 %2792
          %2794 = vset.pattern.permute.xlu0 0
          %2795 = vperm.xlu0 %2794, %v2776
          %v2796 = vpop.permute.xlu0 %2795
          %2797 = vset.pattern.permute.xlu0 0
          %2798 = vperm.xlu0 %2797, %v2777
          %v2799 = vpop.permute.xlu0 %2798
          %2800 = vset.pattern.permute.xlu0 0
          %2801 = vperm.xlu0 %2800, %v2778
          %v2802 = vpop.permute.xlu0 %2801
          %2803 = vset.pattern.permute.xlu0 0
          %2804 = vperm.xlu0 %2803, %v2779
          %v2805 = vpop.permute.xlu0 %2804
          %2806 = vset.pattern.permute.xlu0 0
          %2807 = vperm.xlu0 %2806, %v2780
          %v2808 = vpop.permute.xlu0 %2807
          %2809 = vset.pattern.permute.xlu0 0
          %2810 = vperm.xlu0 %2809, %v2781
          %v2811 = vpop.permute.xlu0 %2810
          %2812 = vset.pattern.permute.xlu0 0
          %2813 = vperm.xlu0 %2812, %v2782
          %v2814 = vpop.permute.xlu0 %2813
          %v2815 = vlaneseq
          %v2816 = vshrl.u32 %v2815, 7
          %v2817 = vsub.s32 %v2694, %v2816
          %v2818 = vrot.slane %v2793, %v2817
          %v2819 = vlaneseq
          %v2820 = vshrl.u32 %v2819, 7
          %v2821 = vsub.s32 %v2694, %v2820
          %v2822 = vrot.slane %v2796, %v2821
          %v2823 = vlaneseq
          %v2824 = vshrl.u32 %v2823, 7
          %v2825 = vsub.s32 %v2694, %v2824
          %v2826 = vrot.slane %v2799, %v2825
          %v2827 = vlaneseq
          %v2828 = vshrl.u32 %v2827, 7
          %v2829 = vsub.s32 %v2694, %v2828
          %v2830 = vrot.slane %v2802, %v2829
          %v2831 = vlaneseq
          %v2832 = vshrl.u32 %v2831, 7
          %v2833 = vsub.s32 %v2694, %v2832
          %v2834 = vrot.slane %v2805, %v2833
          %v2835 = vlaneseq
          %v2836 = vshrl.u32 %v2835, 7
          %v2837 = vsub.s32 %v2694, %v2836
          %v2838 = vrot.slane %v2808, %v2837
          %v2839 = vlaneseq
          %v2840 = vshrl.u32 %v2839, 7
          %v2841 = vsub.s32 %v2694, %v2840
          %v2842 = vrot.slane %v2811, %v2841
          %v2843 = vlaneseq
          %v2844 = vshrl.u32 %v2843, 7
          %v2845 = vsub.s32 %v2694, %v2844
          %v2846 = vrot.slane %v2814, %v2845
          %vm2847 = vcmask 1041409
          %v2848 = vsel %vm2847, %v2822, %v2818
          %vm2849 = vcmask 1042434
          %v2850 = vsel %vm2849, %v2826, %v2848
          %vm2851 = vcmask 1043459
          %v2852 = vsel %vm2851, %v2830, %v2850
          %vm2853 = vcmask 1044484
          %v2854 = vsel %vm2853, %v2834, %v2852
          %vm2855 = vcmask 1045509
          %v2856 = vsel %vm2855, %v2838, %v2854
          %vm2857 = vcmask 1046534
          %v2858 = vsel %vm2857, %v2842, %v2856
          %vm2859 = vcmask 1047559
          %v2860 = vsel %vm2859, %v2846, %v2858
          %v2862 = vsel %vm2684, %v2860, 0.0
          %2863 = vadd.xlane.f32.xlu0 %v2862
          %v2864 = vpop.xlane.xlu0 %2863
          %v2865 = vrot.slane %v2864, 4
          %v2866 = vadd.f32 %v2864, %v2865
          %v2867 = vrot.slane %v2866, 2
          %v2868 = vadd.f32 %v2866, %v2867
          %v2869 = vrot.slane %v2868, 1
          %v2870 = vadd.f32 %v2868, %v2869
          %s2871 = vtos %v2870
          %v2872 = vrcp.pop 64.0
          %s2873 = vtos %v2872
          %s2874 = smul.f32 %s2871, %s2873
          %v2875 = vstv %s2874
          %vm2876 = vcmask 0
          %2877 = vst.msk [vmem:[#allocation9] sm:$0x1] %vm2876, %v2875
          %v2878 = vld [vmem:[#allocation6] sm:$0xff]
          %vm2879 = vcmask 261120
          %v2880 = vsel %vm2879, %v2878, 0.0
          %v2881 = vrot.slane %v2880, 4
          %v2882 = vadd.f32 %v2880, %v2881
          %v2883 = vrot.slane %v2882, 2
          %v2884 = vadd.f32 %v2882, %v2883
          %v2885 = vrot.slane %v2884, 1
          %v2886 = vadd.f32 %v2884, %v2885
          %v2887 = vrcp.pop 8.0
          %v2888 = vmul.f32 %v2886, %v2887
          %vm2889 = vcmask 253952
          %2890 = vst.msk [vmem:[#allocation7] sm:$0x1] %vm2889, %v2888
        $region76: #{tpu_custom_call.1} parent=59 // pred_fallthru
          _
        // Predicated region
        $region77: #{tpu_custom_call.1} parent=59 // pred_check
          %p2891 = pneg %p265
        $region78: #{tpu_custom_call.1} parent=59 // pred_check_branch
          %2893 = sbr.rel (%p2891) target = $region80
        $region79: #{tpu_custom_call.1} parent=59 // pred_region
          %s2895 = ssub.s32 16, 16
          %2896 = vsyncadd [#allocation8], %s2895
          %s2898 = sshll.u32 [#allocation7], 4
          %s2899 = int_to_ptr.vmem [resolvable:$true] %s2898
          %2901 = dma.vmem_to_hbm [thread:$0]  %s2899, 16, %s10, [#allocation8]
        $region80: #{tpu_custom_call.1} parent=59 // pred_fallthru
          _
        // Predicated region
        $region81: #{tpu_custom_call.1} parent=59 // pred_check
          %p2902 = pneg %p286
        $region82: #{tpu_custom_call.1} parent=59 // pred_check_branch
          %2904 = sbr.rel (%p2902) target = $region84
        $region83: #{tpu_custom_call.1} parent=59 // pred_region
          %s2906 = ssub.s32 16, 16
          %2907 = vsyncadd [#allocation10], %s2906
          %s2909 = sshll.u32 [#allocation9], 4
          %s2910 = int_to_ptr.vmem [resolvable:$true] %s2909
          %2912 = dma.vmem_to_hbm [thread:$0]  %s2910, 16, %s11, [#allocation10]
        $region84: #{tpu_custom_call.1} parent=59 // pred_fallthru
          _
        // Predicated region
        $region85: #{tpu_custom_call.1} parent=59 // pred_check
          %p2913 = pneg %p265
        $region86: #{tpu_custom_call.1} parent=59 // pred_check_branch
          %2915 = sbr.rel (%p2913) target = $region88
        $region87: #{tpu_custom_call.1} parent=59 // pred_region
          %2916 = dma.done [#allocation8], 16
        $region88: #{tpu_custom_call.1} parent=59 // pred_fallthru
          _
        // Predicated region
        $region89: #{tpu_custom_call.1} parent=59 // pred_check
          %p2917 = pneg %p286
        $region90: #{tpu_custom_call.1} parent=59 // pred_check_branch
          %2919 = sbr.rel (%p2917) target = $region92
        $region91: #{tpu_custom_call.1} parent=59 // pred_region
          %2920 = dma.done [#allocation10], 16
        $region92: #{tpu_custom_call.1} parent=59 // pred_fallthru
          _
      $region60: #{tpu_custom_call.1} parent=5 // pred_fallthru
        _
      %p2921 = scmp.le.s32.totalorder 2, %s20
      // Predicated region
      $region93: #{tpu_custom_call.1} parent=5 // pred_check
        %p2922 = pneg %p2921
      $region94: #{tpu_custom_call.1} parent=5 // pred_check_branch
        %2924 = sbr.rel (%p2922) target = $region96
      $region95: #{tpu_custom_call.1} parent=5 // pred_region
        %s2925 = ssub.s32 %s20, 2
      $region96: #{tpu_custom_call.1} parent=5 // pred_fallthru
        _
    $region6: #{tpu_custom_call.1} parent=1 // loop_footer
      %s24 = sadd.s32 1, %s20
    $region7: #{tpu_custom_call.1} parent=1 // loop_footer_branch
      %19 = sbr.rel target = $region3
    $region8: #{tpu_custom_call.1} parent=1 // loop_exit
      _
    %2926 = vsyncpa [#allocation8], 1
    %s2927 = scalar_lea.sflag [#allocation8], 1
    %2928 = vsyncpa %s2927, 1
    %2929 = vsyncpa [#allocation10], 1

</llo_original>
